<compile_context>
chip_gen: v7x
topology: tpu7x:2x2x1
jax: 0.10.0
libtpu: 0.0.40
codegen_flags: <defaults>
</compile_context>

<pallas_src>
import functools

import jax
import jax.numpy as jnp
from jax.experimental import pallas as pl
from jax.experimental.pallas import tpu as pltpu


def _rnn_recurrence_kernel(xproj_ref, w_hh_t_ref, w_fused_ref, b_fused_ref,
                           rand_ref, out_ref, hid_ref, *, skip_softmax_max):
    """Strictly-serial recurrence over all (batch*seq) steps, fully unrolled.

    xproj_ref : VMEM f32[total, V]    hoisted input projection (incl. RNN bias)
    w_hh_t_ref: VMEM f32[V, V]        W_hh^T
    w_fused_ref: VMEM f32[V, 2V]      [ W_o^T | W_o^T @ W_h^T ]  (R2o | R2h∘R2o)
    b_fused_ref: VMEM f32[1, 2V]      [ b_o   | b_o @ W_h^T + b_h ]
    rand_ref  : VMEM f32[total, V]    uniform multipliers (one row per step)
    out_ref   : VMEM f32[seq_len, V]  outputs of the LAST batch item only
    hid_ref   : VMEM f32[1, V]        final `hidden`
    """
    total = xproj_ref.shape[0]
    seq_out = out_ref.shape[0]
    first_stored = total - seq_out        # == (batches - 1) * seq_len
    vocab = hid_ref.shape[1]

    # Hoist weight/bias loads out of the unrolled loop (register resident).
    w_hh_t = w_hh_t_ref[...]
    w_fused = w_fused_ref[...]
    b_fused = b_fused_ref[...]

    h = jnp.zeros((1, vocab), jnp.float32)     # carried state, never reset
    hid = jnp.zeros((1, vocab), jnp.float32)

    # `total` is small and static -> full unroll with static indices gives the
    # scheduler visibility to overlap adjacent steps' independent work.
    for step in range(total):
        pre = xproj_ref[pl.ds(step, 1), :] + jnp.dot(
            h, w_hh_t, preferred_element_type=jnp.float32)
        r = jnp.tanh(pre)                                      # RNNCell(tanh)

        # One fused (1,V)x(V,2V) MXU op per step instead of two (1,V)x(V,V).
        oh = jnp.dot(r, w_fused, preferred_element_type=jnp.float32) + b_fused
        o = oh[:, :vocab]          # lanes [0, V)   -- zero-offset slice
        hid = oh[:, vocab:]        # lanes [V, 2V)  -- lowers to XLU lane rotate

        # softmax over the vocab (lane) dim.  The max-subtract is elided when
        # a static bound on |o| (tanh-bounded r, small weights) makes f32 exp
        # overflow impossible -- removes a cross-lane reduce from the chain.
        if skip_softmax_max:
            e = jnp.exp(o)
        else:
            e = jnp.exp(o - jnp.max(o, axis=1, keepdims=True))
        s = jnp.sum(e, axis=1, keepdims=True)
        inv0 = pl.reciprocal(s, approx=True)      # EUP (idle slot)
        inv = inv0 * (2.0 - s * inv0)             # one Newton step -> ~f32 exact
        p = e * inv

        out_step = p * rand_ref[pl.ds(step, 1), :]

        # Only the last batch item's outputs are returned by the module.
        if step >= first_stored:
            out_ref[pl.ds(step - first_stored, 1), :] = out_step

        h = out_step + hid                     # carried state for next step

    hid_ref[...] = hid


def feature_rnn_forward(batch_idx, features, w_ih, w_hh, b_ih, b_hh,
                        w_o, b_o, w_h, b_h, rand_vals,
                        skip_softmax_max=False):
    batches, seq_len = batch_idx.shape
    vocab = w_ih.shape[0]
    total = batches * seq_len
    f32 = jnp.float32

    idx_flat = batch_idx.reshape(total)

    # --- Parallel pre-work hoisted off the serial recurrence (plain XLA) ---
    # x_proj[t] = features[batch[t]] @ W_ih^T + (b_ih + b_hh)
    x_proj = (features.astype(f32)[idx_flat] @ w_ih.astype(f32).T
              + (b_ih + b_hh).astype(f32))                        # (total, V)
    w_hh_t = w_hh.astype(f32).T                                   # (V, V)
    w_o_t = w_o.astype(f32).T                                     # (V, V)
    w_h_t = w_h.astype(f32).T                                     # (V, V)
    w_oh_t = w_o_t @ w_h_t                                        # fused R2h∘R2o
    b_o_row = b_o.astype(f32).reshape(1, vocab)
    b_oh = (b_o.astype(f32) @ w_h_t + b_h.astype(f32)).reshape(1, vocab)
    # Fused post-tanh weight/bias: one (V, 2V) matmul per step instead of two.
    w_fused = jnp.concatenate([w_o_t, w_oh_t], axis=1)            # (V, 2V)
    b_fused = jnp.concatenate([b_o_row, b_oh], axis=1)            # (1, 2V)
    rand_flat = rand_vals.reshape(total, vocab).astype(f32)

    vmem = pltpu.MemorySpace.VMEM
    kernel = functools.partial(_rnn_recurrence_kernel,
                               skip_softmax_max=skip_softmax_max)

    # Advisory cost estimate so XLA can schedule surrounding work around the
    # (latency-bound, serial) custom call.
    flops = total * (2 * vocab * vocab + 2 * vocab * (2 * vocab) + 10 * vocab)
    transcendentals = total * 2 * vocab                  # tanh + exp per step
    bytes_accessed = 4 * (2 * total * vocab              # x_proj + rand
                          + vocab * vocab                # W_hh^T
                          + vocab * 2 * vocab + 2 * vocab  # fused W / b
                          + seq_len * vocab + vocab)     # outputs

    out_seq, hidden = pl.pallas_call(
        kernel,
        out_shape=(jax.ShapeDtypeStruct((seq_len, vocab), f32),
                   jax.ShapeDtypeStruct((1, vocab), f32)),
        in_specs=[pl.BlockSpec(memory_space=vmem) for _ in range(5)],
        out_specs=(pl.BlockSpec(memory_space=vmem),
                   pl.BlockSpec(memory_space=vmem)),
        cost_estimate=pl.CostEstimate(flops=flops,
                                      transcendentals=transcendentals,
                                      bytes_accessed=bytes_accessed),
    )(x_proj, w_hh_t, w_fused, b_fused, rand_flat)

    # torch code resets `outputs = []` per batch item, so only the last batch
    # item's outputs are returned, stacked along dim=1 -> (1, seq_len, vocab).
    return out_seq[None], hidden


# One fused executable: hoisted pre-work + fused-weight precompute + kernel.
feature_rnn_forward_jit = jax.jit(feature_rnn_forward,
                                  static_argnames=("skip_softmax_max",))


def reference_forward(batch_idx, features, w_ih, w_hh, b_ih, b_hh,
                      w_o, b_o, w_h, b_h, rand_vals):
    """Pure-JAX replica of the PyTorch forward (same random multipliers)."""
    batches, seq_len = batch_idx.shape
    vocab = w_ih.shape[0]
    h = jnp.zeros((1, vocab), jnp.float32)
    hidden = jnp.zeros((1, vocab), jnp.float32)
    outs = []
    for i in range(batches):
        outs = []
        for j in range(seq_len):
            x = features[batch_idx[i, j]][None, :]
            r = jnp.tanh(x @ w_ih.T + b_ih + h @ w_hh.T + b_hh)
            o = r @ w_o.T + b_o
            hidden = o @ w_h.T + b_h
            p = jax.nn.softmax(o, axis=1)
            out = p * rand_vals[i, j][None, :]
            outs.append(out)
            h = out + hidden
    outputs = jnp.stack(outs, axis=1)[0][None]  # (1, seq_len, vocab)
    return outputs, hidden


if __name__ == "__main__":
    # Small shapes implied by the module: inventory/vocab size, feature dim,
    # a (batches, seq_len) index batch.
    vocab_size = 32       # params['inv_size']
    d_feats = 8           # params['d_feats']
    batches, seq_len = 2, 8

    key = jax.random.PRNGKey(0)
    keys = jax.random.split(key, 12)
    k = 1.0 / jnp.sqrt(jnp.float32(vocab_size))

    features = jax.random.normal(keys[0], (vocab_size, d_feats), jnp.float32)
    batch = jax.random.randint(keys[1], (batches, seq_len), 0, vocab_size,
                               dtype=jnp.int32)

    # RNNCell(d_feats, vocab): W_ih (V, F), W_hh (V, V), b_ih (V,), b_hh (V,)
    w_ih = jax.random.uniform(keys[2], (vocab_size, d_feats), jnp.float32, -k, k)
    w_hh = jax.random.uniform(keys[3], (vocab_size, vocab_size), jnp.float32, -k, k)
    b_ih = jax.random.uniform(keys[4], (vocab_size,), jnp.float32, -k, k)
    b_hh = jax.random.uniform(keys[5], (vocab_size,), jnp.float32, -k, k)
    # R2o, R2h: Linear(vocab, vocab)
    w_o = jax.random.uniform(keys[6], (vocab_size, vocab_size), jnp.float32, -k, k)
    b_o = jax.random.uniform(keys[7], (vocab_size,), jnp.float32, -k, k)
    w_h = jax.random.uniform(keys[8], (vocab_size, vocab_size), jnp.float32, -k, k)
    b_h = jax.random.uniform(keys[9], (vocab_size,), jnp.float32, -k, k)

    # torch.rand(...) per step -- generated once here so kernel and reference
    # use identical random multipliers (the op itself is inherently random).
    rand_vals = jax.random.uniform(keys[10], (batches, seq_len, vocab_size),
                                   jnp.float32)

    # Static safety check for dropping the softmax max-subtract:
    # r = tanh(.) ∈ [-1, 1]  =>  |o_j| <= sum_k |W_o[j,k]| + |b_o[j]|.
    # exp is safe in f32 while that bound is well below ~88.
    o_bound = float(jnp.max(jnp.sum(jnp.abs(w_o), axis=1) + jnp.abs(b_o)))
    skip_softmax_max = o_bound < 80.0

    outputs, hidden = feature_rnn_forward_jit(
        batch, features, w_ih, w_hh, b_ih, b_hh, w_o, b_o, w_h, b_h, rand_vals,
        skip_softmax_max=skip_softmax_max)
    outputs = jax.block_until_ready(outputs)
    hidden = jax.block_until_ready(hidden)

    ref_outputs, ref_hidden = reference_forward(batch, features, w_ih, w_hh,
                                                b_ih, b_hh, w_o, b_o, w_h, b_h,
                                                rand_vals)

    assert outputs.shape == (1, seq_len, vocab_size)
    assert hidden.shape == (1, vocab_size)
    # Newton-refined reciprocal keeps the softmax ~f32-exact; remaining error
    # is the re-associated fused R2o->R2h weight compounding through 16 steps.
    assert jnp.allclose(outputs, ref_outputs, atol=1e-4, rtol=1e-4)
    assert jnp.allclose(hidden, ref_hidden, atol=1e-4, rtol=1e-4)
    print("KERNEL_OK")
</pallas_src>

<mosaic_0001>
module attributes {stable_mosaic.version = 11 : i64} {
  func.func @_rnn_recurrence_kernel(%arg0: memref<16x32xf32, #tpu.memory_space<vmem>>, %arg1: memref<32x32xf32, #tpu.memory_space<vmem>>, %arg2: memref<32x64xf32, #tpu.memory_space<vmem>>, %arg3: memref<1x64xf32, #tpu.memory_space<vmem>>, %arg4: memref<16x32xf32, #tpu.memory_space<vmem>>, %arg5: memref<8x32xf32, #tpu.memory_space<vmem>>, %arg6: memref<1x32xf32, #tpu.memory_space<vmem>>) attributes {dimension_semantics = [], scalar_prefetch = 0 : i64, scratch_operands = 0 : i64, tpu.core_type = #tpu.core_type<tc>} {
    %c0 = arith.constant 0 : index
    %c0_0 = arith.constant 0 : index
    %0 = vector.load %arg1[%c0, %c0_0] : memref<32x32xf32, #tpu.memory_space<vmem>>, vector<32x32xf32>
    %c0_1 = arith.constant 0 : index
    %c0_2 = arith.constant 0 : index
    %1 = vector.load %arg2[%c0_1, %c0_2] : memref<32x64xf32, #tpu.memory_space<vmem>>, vector<32x64xf32>
    %c0_3 = arith.constant 0 : index
    %c0_4 = arith.constant 0 : index
    %2 = vector.load %arg3[%c0_3, %c0_4] : memref<1x64xf32, #tpu.memory_space<vmem>>, vector<1x64xf32>
    %cst = arith.constant 0.000000e+00 : f32
    %3 = vector.broadcast %cst : f32 to vector<1x32xf32>
    %c0_5 = arith.constant 0 : index
    %c0_6 = arith.constant 0 : index
    %4 = vector.load %arg0[%c0_5, %c0_6] : memref<16x32xf32, #tpu.memory_space<vmem>>, vector<1x32xf32>
    %cst_7 = arith.constant dense<0.000000e+00> : vector<1x32xf32>
    %5 = tpu.matmul %3, %0, %cst_7 {dimension_numbers = #tpu.dot_dimension_numbers<[1], [0], [0], [1], [0, 0, 1, 1], [], []>} : vector<1x32xf32>, vector<32x32xf32>, vector<1x32xf32> -> vector<1x32xf32>
    %6 = arith.addf %4, %5 : vector<1x32xf32>
    %7 = math.tanh %6 : vector<1x32xf32>
    %cst_8 = arith.constant dense<0.000000e+00> : vector<1x64xf32>
    %8 = tpu.matmul %7, %1, %cst_8 {dimension_numbers = #tpu.dot_dimension_numbers<[1], [0], [0], [1], [0, 0, 1, 1], [], []>} : vector<1x32xf32>, vector<32x64xf32>, vector<1x64xf32> -> vector<1x64xf32>
    %9 = arith.addf %8, %2 : vector<1x64xf32>
    %10 = vector.extract_strided_slice %9 {offsets = [0, 0], sizes = [1, 32], strides = [1, 1]} : vector<1x64xf32> to vector<1x32xf32>
    %11 = vector.extract_strided_slice %9 {offsets = [0, 32], sizes = [1, 32], strides = [1, 1]} : vector<1x64xf32> to vector<1x32xf32>
    %12 = math.exp %10 : vector<1x32xf32>
    %cst_9 = arith.constant dense<0.000000e+00> : vector<1xf32>
    %13 = vector.multi_reduction <add>, %12, %cst_9 [1] : vector<1x32xf32> to vector<1xf32>
    %14 = vector.shape_cast %13 : vector<1xf32> to vector<1x1xf32>
    %15 = tpu.reciprocal %14 {approx = true} : vector<1x1xf32> -> vector<1x1xf32>
    %16 = arith.mulf %14, %15 : vector<1x1xf32>
    %cst_10 = arith.constant 2.000000e+00 : f32
    %17 = vector.broadcast %cst_10 : f32 to vector<1x1xf32>
    %18 = arith.subf %17, %16 : vector<1x1xf32>
    %19 = arith.mulf %15, %18 : vector<1x1xf32>
    %20 = vector.broadcast %19 : vector<1x1xf32> to vector<1x32xf32>
    %21 = arith.mulf %12, %20 : vector<1x32xf32>
    %c0_11 = arith.constant 0 : index
    %c0_12 = arith.constant 0 : index
    %22 = vector.load %arg4[%c0_11, %c0_12] : memref<16x32xf32, #tpu.memory_space<vmem>>, vector<1x32xf32>
    %23 = arith.mulf %21, %22 : vector<1x32xf32>
    %24 = arith.addf %23, %11 : vector<1x32xf32>
    %c1 = arith.constant 1 : index
    %c0_13 = arith.constant 0 : index
    %25 = vector.load %arg0[%c1, %c0_13] : memref<16x32xf32, #tpu.memory_space<vmem>>, vector<1x32xf32>
    %cst_14 = arith.constant dense<0.000000e+00> : vector<1x32xf32>
    %26 = tpu.matmul %24, %0, %cst_14 {dimension_numbers = #tpu.dot_dimension_numbers<[1], [0], [0], [1], [0, 0, 1, 1], [], []>} : vector<1x32xf32>, vector<32x32xf32>, vector<1x32xf32> -> vector<1x32xf32>
    %27 = arith.addf %25, %26 : vector<1x32xf32>
    %28 = math.tanh %27 : vector<1x32xf32>
    %cst_15 = arith.constant dense<0.000000e+00> : vector<1x64xf32>
    %29 = tpu.matmul %28, %1, %cst_15 {dimension_numbers = #tpu.dot_dimension_numbers<[1], [0], [0], [1], [0, 0, 1, 1], [], []>} : vector<1x32xf32>, vector<32x64xf32>, vector<1x64xf32> -> vector<1x64xf32>
    %30 = arith.addf %29, %2 : vector<1x64xf32>
    %31 = vector.extract_strided_slice %30 {offsets = [0, 0], sizes = [1, 32], strides = [1, 1]} : vector<1x64xf32> to vector<1x32xf32>
    %32 = vector.extract_strided_slice %30 {offsets = [0, 32], sizes = [1, 32], strides = [1, 1]} : vector<1x64xf32> to vector<1x32xf32>
    %33 = math.exp %31 : vector<1x32xf32>
    %cst_16 = arith.constant dense<0.000000e+00> : vector<1xf32>
    %34 = vector.multi_reduction <add>, %33, %cst_16 [1] : vector<1x32xf32> to vector<1xf32>
    %35 = vector.shape_cast %34 : vector<1xf32> to vector<1x1xf32>
    %36 = tpu.reciprocal %35 {approx = true} : vector<1x1xf32> -> vector<1x1xf32>
    %37 = arith.mulf %35, %36 : vector<1x1xf32>
    %cst_17 = arith.constant 2.000000e+00 : f32
    %38 = vector.broadcast %cst_17 : f32 to vector<1x1xf32>
    %39 = arith.subf %38, %37 : vector<1x1xf32>
    %40 = arith.mulf %36, %39 : vector<1x1xf32>
    %41 = vector.broadcast %40 : vector<1x1xf32> to vector<1x32xf32>
    %42 = arith.mulf %33, %41 : vector<1x32xf32>
    %c1_18 = arith.constant 1 : index
    %c0_19 = arith.constant 0 : index
    %43 = vector.load %arg4[%c1_18, %c0_19] : memref<16x32xf32, #tpu.memory_space<vmem>>, vector<1x32xf32>
    %44 = arith.mulf %42, %43 : vector<1x32xf32>
    %45 = arith.addf %44, %32 : vector<1x32xf32>
    %c2 = arith.constant 2 : index
    %c0_20 = arith.constant 0 : index
    %46 = vector.load %arg0[%c2, %c0_20] : memref<16x32xf32, #tpu.memory_space<vmem>>, vector<1x32xf32>
    %cst_21 = arith.constant dense<0.000000e+00> : vector<1x32xf32>
    %47 = tpu.matmul %45, %0, %cst_21 {dimension_numbers = #tpu.dot_dimension_numbers<[1], [0], [0], [1], [0, 0, 1, 1], [], []>} : vector<1x32xf32>, vector<32x32xf32>, vector<1x32xf32> -> vector<1x32xf32>
    %48 = arith.addf %46, %47 : vector<1x32xf32>
    %49 = math.tanh %48 : vector<1x32xf32>
    %cst_22 = arith.constant dense<0.000000e+00> : vector<1x64xf32>
    %50 = tpu.matmul %49, %1, %cst_22 {dimension_numbers = #tpu.dot_dimension_numbers<[1], [0], [0], [1], [0, 0, 1, 1], [], []>} : vector<1x32xf32>, vector<32x64xf32>, vector<1x64xf32> -> vector<1x64xf32>
    %51 = arith.addf %50, %2 : vector<1x64xf32>
    %52 = vector.extract_strided_slice %51 {offsets = [0, 0], sizes = [1, 32], strides = [1, 1]} : vector<1x64xf32> to vector<1x32xf32>
    %53 = vector.extract_strided_slice %51 {offsets = [0, 32], sizes = [1, 32], strides = [1, 1]} : vector<1x64xf32> to vector<1x32xf32>
    %54 = math.exp %52 : vector<1x32xf32>
    %cst_23 = arith.constant dense<0.000000e+00> : vector<1xf32>
    %55 = vector.multi_reduction <add>, %54, %cst_23 [1] : vector<1x32xf32> to vector<1xf32>
    %56 = vector.shape_cast %55 : vector<1xf32> to vector<1x1xf32>
    %57 = tpu.reciprocal %56 {approx = true} : vector<1x1xf32> -> vector<1x1xf32>
    %58 = arith.mulf %56, %57 : vector<1x1xf32>
    %cst_24 = arith.constant 2.000000e+00 : f32
    %59 = vector.broadcast %cst_24 : f32 to vector<1x1xf32>
    %60 = arith.subf %59, %58 : vector<1x1xf32>
    %61 = arith.mulf %57, %60 : vector<1x1xf32>
    %62 = vector.broadcast %61 : vector<1x1xf32> to vector<1x32xf32>
    %63 = arith.mulf %54, %62 : vector<1x32xf32>
    %c2_25 = arith.constant 2 : index
    %c0_26 = arith.constant 0 : index
    %64 = vector.load %arg4[%c2_25, %c0_26] : memref<16x32xf32, #tpu.memory_space<vmem>>, vector<1x32xf32>
    %65 = arith.mulf %63, %64 : vector<1x32xf32>
    %66 = arith.addf %65, %53 : vector<1x32xf32>
    %c3 = arith.constant 3 : index
    %c0_27 = arith.constant 0 : index
    %67 = vector.load %arg0[%c3, %c0_27] : memref<16x32xf32, #tpu.memory_space<vmem>>, vector<1x32xf32>
    %cst_28 = arith.constant dense<0.000000e+00> : vector<1x32xf32>
    %68 = tpu.matmul %66, %0, %cst_28 {dimension_numbers = #tpu.dot_dimension_numbers<[1], [0], [0], [1], [0, 0, 1, 1], [], []>} : vector<1x32xf32>, vector<32x32xf32>, vector<1x32xf32> -> vector<1x32xf32>
    %69 = arith.addf %67, %68 : vector<1x32xf32>
    %70 = math.tanh %69 : vector<1x32xf32>
    %cst_29 = arith.constant dense<0.000000e+00> : vector<1x64xf32>
    %71 = tpu.matmul %70, %1, %cst_29 {dimension_numbers = #tpu.dot_dimension_numbers<[1], [0], [0], [1], [0, 0, 1, 1], [], []>} : vector<1x32xf32>, vector<32x64xf32>, vector<1x64xf32> -> vector<1x64xf32>
    %72 = arith.addf %71, %2 : vector<1x64xf32>
    %73 = vector.extract_strided_slice %72 {offsets = [0, 0], sizes = [1, 32], strides = [1, 1]} : vector<1x64xf32> to vector<1x32xf32>
    %74 = vector.extract_strided_slice %72 {offsets = [0, 32], sizes = [1, 32], strides = [1, 1]} : vector<1x64xf32> to vector<1x32xf32>
    %75 = math.exp %73 : vector<1x32xf32>
    %cst_30 = arith.constant dense<0.000000e+00> : vector<1xf32>
    %76 = vector.multi_reduction <add>, %75, %cst_30 [1] : vector<1x32xf32> to vector<1xf32>
    %77 = vector.shape_cast %76 : vector<1xf32> to vector<1x1xf32>
    %78 = tpu.reciprocal %77 {approx = true} : vector<1x1xf32> -> vector<1x1xf32>
    %79 = arith.mulf %77, %78 : vector<1x1xf32>
    %cst_31 = arith.constant 2.000000e+00 : f32
    %80 = vector.broadcast %cst_31 : f32 to vector<1x1xf32>
    %81 = arith.subf %80, %79 : vector<1x1xf32>
    %82 = arith.mulf %78, %81 : vector<1x1xf32>
    %83 = vector.broadcast %82 : vector<1x1xf32> to vector<1x32xf32>
    %84 = arith.mulf %75, %83 : vector<1x32xf32>
    %c3_32 = arith.constant 3 : index
    %c0_33 = arith.constant 0 : index
    %85 = vector.load %arg4[%c3_32, %c0_33] : memref<16x32xf32, #tpu.memory_space<vmem>>, vector<1x32xf32>
    %86 = arith.mulf %84, %85 : vector<1x32xf32>
    %87 = arith.addf %86, %74 : vector<1x32xf32>
    %c4 = arith.constant 4 : index
    %c0_34 = arith.constant 0 : index
    %88 = vector.load %arg0[%c4, %c0_34] : memref<16x32xf32, #tpu.memory_space<vmem>>, vector<1x32xf32>
    %cst_35 = arith.constant dense<0.000000e+00> : vector<1x32xf32>
    %89 = tpu.matmul %87, %0, %cst_35 {dimension_numbers = #tpu.dot_dimension_numbers<[1], [0], [0], [1], [0, 0, 1, 1], [], []>} : vector<1x32xf32>, vector<32x32xf32>, vector<1x32xf32> -> vector<1x32xf32>
    %90 = arith.addf %88, %89 : vector<1x32xf32>
    %91 = math.tanh %90 : vector<1x32xf32>
    %cst_36 = arith.constant dense<0.000000e+00> : vector<1x64xf32>
    %92 = tpu.matmul %91, %1, %cst_36 {dimension_numbers = #tpu.dot_dimension_numbers<[1], [0], [0], [1], [0, 0, 1, 1], [], []>} : vector<1x32xf32>, vector<32x64xf32>, vector<1x64xf32> -> vector<1x64xf32>
    %93 = arith.addf %92, %2 : vector<1x64xf32>
    %94 = vector.extract_strided_slice %93 {offsets = [0, 0], sizes = [1, 32], strides = [1, 1]} : vector<1x64xf32> to vector<1x32xf32>
    %95 = vector.extract_strided_slice %93 {offsets = [0, 32], sizes = [1, 32], strides = [1, 1]} : vector<1x64xf32> to vector<1x32xf32>
    %96 = math.exp %94 : vector<1x32xf32>
    %cst_37 = arith.constant dense<0.000000e+00> : vector<1xf32>
    %97 = vector.multi_reduction <add>, %96, %cst_37 [1] : vector<1x32xf32> to vector<1xf32>
    %98 = vector.shape_cast %97 : vector<1xf32> to vector<1x1xf32>
    %99 = tpu.reciprocal %98 {approx = true} : vector<1x1xf32> -> vector<1x1xf32>
    %100 = arith.mulf %98, %99 : vector<1x1xf32>
    %cst_38 = arith.constant 2.000000e+00 : f32
    %101 = vector.broadcast %cst_38 : f32 to vector<1x1xf32>
    %102 = arith.subf %101, %100 : vector<1x1xf32>
    %103 = arith.mulf %99, %102 : vector<1x1xf32>
    %104 = vector.broadcast %103 : vector<1x1xf32> to vector<1x32xf32>
    %105 = arith.mulf %96, %104 : vector<1x32xf32>
    %c4_39 = arith.constant 4 : index
    %c0_40 = arith.constant 0 : index
    %106 = vector.load %arg4[%c4_39, %c0_40] : memref<16x32xf32, #tpu.memory_space<vmem>>, vector<1x32xf32>
    %107 = arith.mulf %105, %106 : vector<1x32xf32>
    %108 = arith.addf %107, %95 : vector<1x32xf32>
    %c5 = arith.constant 5 : index
    %c0_41 = arith.constant 0 : index
    %109 = vector.load %arg0[%c5, %c0_41] : memref<16x32xf32, #tpu.memory_space<vmem>>, vector<1x32xf32>
    %cst_42 = arith.constant dense<0.000000e+00> : vector<1x32xf32>
    %110 = tpu.matmul %108, %0, %cst_42 {dimension_numbers = #tpu.dot_dimension_numbers<[1], [0], [0], [1], [0, 0, 1, 1], [], []>} : vector<1x32xf32>, vector<32x32xf32>, vector<1x32xf32> -> vector<1x32xf32>
    %111 = arith.addf %109, %110 : vector<1x32xf32>
    %112 = math.tanh %111 : vector<1x32xf32>
    %cst_43 = arith.constant dense<0.000000e+00> : vector<1x64xf32>
    %113 = tpu.matmul %112, %1, %cst_43 {dimension_numbers = #tpu.dot_dimension_numbers<[1], [0], [0], [1], [0, 0, 1, 1], [], []>} : vector<1x32xf32>, vector<32x64xf32>, vector<1x64xf32> -> vector<1x64xf32>
    %114 = arith.addf %113, %2 : vector<1x64xf32>
    %115 = vector.extract_strided_slice %114 {offsets = [0, 0], sizes = [1, 32], strides = [1, 1]} : vector<1x64xf32> to vector<1x32xf32>
    %116 = vector.extract_strided_slice %114 {offsets = [0, 32], sizes = [1, 32], strides = [1, 1]} : vector<1x64xf32> to vector<1x32xf32>
    %117 = math.exp %115 : vector<1x32xf32>
    %cst_44 = arith.constant dense<0.000000e+00> : vector<1xf32>
    %118 = vector.multi_reduction <add>, %117, %cst_44 [1] : vector<1x32xf32> to vector<1xf32>
    %119 = vector.shape_cast %118 : vector<1xf32> to vector<1x1xf32>
    %120 = tpu.reciprocal %119 {approx = true} : vector<1x1xf32> -> vector<1x1xf32>
    %121 = arith.mulf %119, %120 : vector<1x1xf32>
    %cst_45 = arith.constant 2.000000e+00 : f32
    %122 = vector.broadcast %cst_45 : f32 to vector<1x1xf32>
    %123 = arith.subf %122, %121 : vector<1x1xf32>
    %124 = arith.mulf %120, %123 : vector<1x1xf32>
    %125 = vector.broadcast %124 : vector<1x1xf32> to vector<1x32xf32>
    %126 = arith.mulf %117, %125 : vector<1x32xf32>
    %c5_46 = arith.constant 5 : index
    %c0_47 = arith.constant 0 : index
    %127 = vector.load %arg4[%c5_46, %c0_47] : memref<16x32xf32, #tpu.memory_space<vmem>>, vector<1x32xf32>
    %128 = arith.mulf %126, %127 : vector<1x32xf32>
    %129 = arith.addf %128, %116 : vector<1x32xf32>
    %c6 = arith.constant 6 : index
    %c0_48 = arith.constant 0 : index
    %130 = vector.load %arg0[%c6, %c0_48] : memref<16x32xf32, #tpu.memory_space<vmem>>, vector<1x32xf32>
    %cst_49 = arith.constant dense<0.000000e+00> : vector<1x32xf32>
    %131 = tpu.matmul %129, %0, %cst_49 {dimension_numbers = #tpu.dot_dimension_numbers<[1], [0], [0], [1], [0, 0, 1, 1], [], []>} : vector<1x32xf32>, vector<32x32xf32>, vector<1x32xf32> -> vector<1x32xf32>
    %132 = arith.addf %130, %131 : vector<1x32xf32>
    %133 = math.tanh %132 : vector<1x32xf32>
    %cst_50 = arith.constant dense<0.000000e+00> : vector<1x64xf32>
    %134 = tpu.matmul %133, %1, %cst_50 {dimension_numbers = #tpu.dot_dimension_numbers<[1], [0], [0], [1], [0, 0, 1, 1], [], []>} : vector<1x32xf32>, vector<32x64xf32>, vector<1x64xf32> -> vector<1x64xf32>
    %135 = arith.addf %134, %2 : vector<1x64xf32>
    %136 = vector.extract_strided_slice %135 {offsets = [0, 0], sizes = [1, 32], strides = [1, 1]} : vector<1x64xf32> to vector<1x32xf32>
    %137 = vector.extract_strided_slice %135 {offsets = [0, 32], sizes = [1, 32], strides = [1, 1]} : vector<1x64xf32> to vector<1x32xf32>
    %138 = math.exp %136 : vector<1x32xf32>
    %cst_51 = arith.constant dense<0.000000e+00> : vector<1xf32>
    %139 = vector.multi_reduction <add>, %138, %cst_51 [1] : vector<1x32xf32> to vector<1xf32>
    %140 = vector.shape_cast %139 : vector<1xf32> to vector<1x1xf32>
    %141 = tpu.reciprocal %140 {approx = true} : vector<1x1xf32> -> vector<1x1xf32>
    %142 = arith.mulf %140, %141 : vector<1x1xf32>
    %cst_52 = arith.constant 2.000000e+00 : f32
    %143 = vector.broadcast %cst_52 : f32 to vector<1x1xf32>
    %144 = arith.subf %143, %142 : vector<1x1xf32>
    %145 = arith.mulf %141, %144 : vector<1x1xf32>
    %146 = vector.broadcast %145 : vector<1x1xf32> to vector<1x32xf32>
    %147 = arith.mulf %138, %146 : vector<1x32xf32>
    %c6_53 = arith.constant 6 : index
    %c0_54 = arith.constant 0 : index
    %148 = vector.load %arg4[%c6_53, %c0_54] : memref<16x32xf32, #tpu.memory_space<vmem>>, vector<1x32xf32>
    %149 = arith.mulf %147, %148 : vector<1x32xf32>
    %150 = arith.addf %149, %137 : vector<1x32xf32>
    %c7 = arith.constant 7 : index
    %c0_55 = arith.constant 0 : index
    %151 = vector.load %arg0[%c7, %c0_55] : memref<16x32xf32, #tpu.memory_space<vmem>>, vector<1x32xf32>
    %cst_56 = arith.constant dense<0.000000e+00> : vector<1x32xf32>
    %152 = tpu.matmul %150, %0, %cst_56 {dimension_numbers = #tpu.dot_dimension_numbers<[1], [0], [0], [1], [0, 0, 1, 1], [], []>} : vector<1x32xf32>, vector<32x32xf32>, vector<1x32xf32> -> vector<1x32xf32>
    %153 = arith.addf %151, %152 : vector<1x32xf32>
    %154 = math.tanh %153 : vector<1x32xf32>
    %cst_57 = arith.constant dense<0.000000e+00> : vector<1x64xf32>
    %155 = tpu.matmul %154, %1, %cst_57 {dimension_numbers = #tpu.dot_dimension_numbers<[1], [0], [0], [1], [0, 0, 1, 1], [], []>} : vector<1x32xf32>, vector<32x64xf32>, vector<1x64xf32> -> vector<1x64xf32>
    %156 = arith.addf %155, %2 : vector<1x64xf32>
    %157 = vector.extract_strided_slice %156 {offsets = [0, 0], sizes = [1, 32], strides = [1, 1]} : vector<1x64xf32> to vector<1x32xf32>
    %158 = vector.extract_strided_slice %156 {offsets = [0, 32], sizes = [1, 32], strides = [1, 1]} : vector<1x64xf32> to vector<1x32xf32>
    %159 = math.exp %157 : vector<1x32xf32>
    %cst_58 = arith.constant dense<0.000000e+00> : vector<1xf32>
    %160 = vector.multi_reduction <add>, %159, %cst_58 [1] : vector<1x32xf32> to vector<1xf32>
    %161 = vector.shape_cast %160 : vector<1xf32> to vector<1x1xf32>
    %162 = tpu.reciprocal %161 {approx = true} : vector<1x1xf32> -> vector<1x1xf32>
    %163 = arith.mulf %161, %162 : vector<1x1xf32>
    %cst_59 = arith.constant 2.000000e+00 : f32
    %164 = vector.broadcast %cst_59 : f32 to vector<1x1xf32>
    %165 = arith.subf %164, %163 : vector<1x1xf32>
    %166 = arith.mulf %162, %165 : vector<1x1xf32>
    %167 = vector.broadcast %166 : vector<1x1xf32> to vector<1x32xf32>
    %168 = arith.mulf %159, %167 : vector<1x32xf32>
    %c7_60 = arith.constant 7 : index
    %c0_61 = arith.constant 0 : index
    %169 = vector.load %arg4[%c7_60, %c0_61] : memref<16x32xf32, #tpu.memory_space<vmem>>, vector<1x32xf32>
    %170 = arith.mulf %168, %169 : vector<1x32xf32>
    %171 = arith.addf %170, %158 : vector<1x32xf32>
    %c8 = arith.constant 8 : index
    %c0_62 = arith.constant 0 : index
    %172 = vector.load %arg0[%c8, %c0_62] : memref<16x32xf32, #tpu.memory_space<vmem>>, vector<1x32xf32>
    %cst_63 = arith.constant dense<0.000000e+00> : vector<1x32xf32>
    %173 = tpu.matmul %171, %0, %cst_63 {dimension_numbers = #tpu.dot_dimension_numbers<[1], [0], [0], [1], [0, 0, 1, 1], [], []>} : vector<1x32xf32>, vector<32x32xf32>, vector<1x32xf32> -> vector<1x32xf32>
    %174 = arith.addf %172, %173 : vector<1x32xf32>
    %175 = math.tanh %174 : vector<1x32xf32>
    %cst_64 = arith.constant dense<0.000000e+00> : vector<1x64xf32>
    %176 = tpu.matmul %175, %1, %cst_64 {dimension_numbers = #tpu.dot_dimension_numbers<[1], [0], [0], [1], [0, 0, 1, 1], [], []>} : vector<1x32xf32>, vector<32x64xf32>, vector<1x64xf32> -> vector<1x64xf32>
    %177 = arith.addf %176, %2 : vector<1x64xf32>
    %178 = vector.extract_strided_slice %177 {offsets = [0, 0], sizes = [1, 32], strides = [1, 1]} : vector<1x64xf32> to vector<1x32xf32>
    %179 = vector.extract_strided_slice %177 {offsets = [0, 32], sizes = [1, 32], strides = [1, 1]} : vector<1x64xf32> to vector<1x32xf32>
    %180 = math.exp %178 : vector<1x32xf32>
    %cst_65 = arith.constant dense<0.000000e+00> : vector<1xf32>
    %181 = vector.multi_reduction <add>, %180, %cst_65 [1] : vector<1x32xf32> to vector<1xf32>
    %182 = vector.shape_cast %181 : vector<1xf32> to vector<1x1xf32>
    %183 = tpu.reciprocal %182 {approx = true} : vector<1x1xf32> -> vector<1x1xf32>
    %184 = arith.mulf %182, %183 : vector<1x1xf32>
    %cst_66 = arith.constant 2.000000e+00 : f32
    %185 = vector.broadcast %cst_66 : f32 to vector<1x1xf32>
    %186 = arith.subf %185, %184 : vector<1x1xf32>
    %187 = arith.mulf %183, %186 : vector<1x1xf32>
    %188 = vector.broadcast %187 : vector<1x1xf32> to vector<1x32xf32>
    %189 = arith.mulf %180, %188 : vector<1x32xf32>
    %c8_67 = arith.constant 8 : index
    %c0_68 = arith.constant 0 : index
    %190 = vector.load %arg4[%c8_67, %c0_68] : memref<16x32xf32, #tpu.memory_space<vmem>>, vector<1x32xf32>
    %191 = arith.mulf %189, %190 : vector<1x32xf32>
    %c0_69 = arith.constant 0 : index
    %c0_70 = arith.constant 0 : index
    %192 = vector.load %arg5[%c0_69, %c0_70] : memref<8x32xf32, #tpu.memory_space<vmem>>, vector<1x32xf32>
    tpu.vector_store %arg5[%c0_69, %c0_70], %191 {strides = array<i32>} : memref<8x32xf32, #tpu.memory_space<vmem>>, vector<1x32xf32>,
    %193 = arith.addf %191, %179 : vector<1x32xf32>
    %c9 = arith.constant 9 : index
    %c0_71 = arith.constant 0 : index
    %194 = vector.load %arg0[%c9, %c0_71] : memref<16x32xf32, #tpu.memory_space<vmem>>, vector<1x32xf32>
    %cst_72 = arith.constant dense<0.000000e+00> : vector<1x32xf32>
    %195 = tpu.matmul %193, %0, %cst_72 {dimension_numbers = #tpu.dot_dimension_numbers<[1], [0], [0], [1], [0, 0, 1, 1], [], []>} : vector<1x32xf32>, vector<32x32xf32>, vector<1x32xf32> -> vector<1x32xf32>
    %196 = arith.addf %194, %195 : vector<1x32xf32>
    %197 = math.tanh %196 : vector<1x32xf32>
    %cst_73 = arith.constant dense<0.000000e+00> : vector<1x64xf32>
    %198 = tpu.matmul %197, %1, %cst_73 {dimension_numbers = #tpu.dot_dimension_numbers<[1], [0], [0], [1], [0, 0, 1, 1], [], []>} : vector<1x32xf32>, vector<32x64xf32>, vector<1x64xf32> -> vector<1x64xf32>
    %199 = arith.addf %198, %2 : vector<1x64xf32>
    %200 = vector.extract_strided_slice %199 {offsets = [0, 0], sizes = [1, 32], strides = [1, 1]} : vector<1x64xf32> to vector<1x32xf32>
    %201 = vector.extract_strided_slice %199 {offsets = [0, 32], sizes = [1, 32], strides = [1, 1]} : vector<1x64xf32> to vector<1x32xf32>
    %202 = math.exp %200 : vector<1x32xf32>
    %cst_74 = arith.constant dense<0.000000e+00> : vector<1xf32>
    %203 = vector.multi_reduction <add>, %202, %cst_74 [1] : vector<1x32xf32> to vector<1xf32>
    %204 = vector.shape_cast %203 : vector<1xf32> to vector<1x1xf32>
    %205 = tpu.reciprocal %204 {approx = true} : vector<1x1xf32> -> vector<1x1xf32>
    %206 = arith.mulf %204, %205 : vector<1x1xf32>
    %cst_75 = arith.constant 2.000000e+00 : f32
    %207 = vector.broadcast %cst_75 : f32 to vector<1x1xf32>
    %208 = arith.subf %207, %206 : vector<1x1xf32>
    %209 = arith.mulf %205, %208 : vector<1x1xf32>
    %210 = vector.broadcast %209 : vector<1x1xf32> to vector<1x32xf32>
    %211 = arith.mulf %202, %210 : vector<1x32xf32>
    %c9_76 = arith.constant 9 : index
    %c0_77 = arith.constant 0 : index
    %212 = vector.load %arg4[%c9_76, %c0_77] : memref<16x32xf32, #tpu.memory_space<vmem>>, vector<1x32xf32>
    %213 = arith.mulf %211, %212 : vector<1x32xf32>
    %c1_78 = arith.constant 1 : index
    %c0_79 = arith.constant 0 : index
    %214 = vector.load %arg5[%c1_78, %c0_79] : memref<8x32xf32, #tpu.memory_space<vmem>>, vector<1x32xf32>
    tpu.vector_store %arg5[%c1_78, %c0_79], %213 {strides = array<i32>} : memref<8x32xf32, #tpu.memory_space<vmem>>, vector<1x32xf32>,
    %215 = arith.addf %213, %201 : vector<1x32xf32>
    %c10 = arith.constant 10 : index
    %c0_80 = arith.constant 0 : index
    %216 = vector.load %arg0[%c10, %c0_80] : memref<16x32xf32, #tpu.memory_space<vmem>>, vector<1x32xf32>
    %cst_81 = arith.constant dense<0.000000e+00> : vector<1x32xf32>
    %217 = tpu.matmul %215, %0, %cst_81 {dimension_numbers = #tpu.dot_dimension_numbers<[1], [0], [0], [1], [0, 0, 1, 1], [], []>} : vector<1x32xf32>, vector<32x32xf32>, vector<1x32xf32> -> vector<1x32xf32>
    %218 = arith.addf %216, %217 : vector<1x32xf32>
    %219 = math.tanh %218 : vector<1x32xf32>
    %cst_82 = arith.constant dense<0.000000e+00> : vector<1x64xf32>
    %220 = tpu.matmul %219, %1, %cst_82 {dimension_numbers = #tpu.dot_dimension_numbers<[1], [0], [0], [1], [0, 0, 1, 1], [], []>} : vector<1x32xf32>, vector<32x64xf32>, vector<1x64xf32> -> vector<1x64xf32>
    %221 = arith.addf %220, %2 : vector<1x64xf32>
    %222 = vector.extract_strided_slice %221 {offsets = [0, 0], sizes = [1, 32], strides = [1, 1]} : vector<1x64xf32> to vector<1x32xf32>
    %223 = vector.extract_strided_slice %221 {offsets = [0, 32], sizes = [1, 32], strides = [1, 1]} : vector<1x64xf32> to vector<1x32xf32>
    %224 = math.exp %222 : vector<1x32xf32>
    %cst_83 = arith.constant dense<0.000000e+00> : vector<1xf32>
    %225 = vector.multi_reduction <add>, %224, %cst_83 [1] : vector<1x32xf32> to vector<1xf32>
    %226 = vector.shape_cast %225 : vector<1xf32> to vector<1x1xf32>
    %227 = tpu.reciprocal %226 {approx = true} : vector<1x1xf32> -> vector<1x1xf32>
    %228 = arith.mulf %226, %227 : vector<1x1xf32>
    %cst_84 = arith.constant 2.000000e+00 : f32
    %229 = vector.broadcast %cst_84 : f32 to vector<1x1xf32>
    %230 = arith.subf %229, %228 : vector<1x1xf32>
    %231 = arith.mulf %227, %230 : vector<1x1xf32>
    %232 = vector.broadcast %231 : vector<1x1xf32> to vector<1x32xf32>
    %233 = arith.mulf %224, %232 : vector<1x32xf32>
    %c10_85 = arith.constant 10 : index
    %c0_86 = arith.constant 0 : index
    %234 = vector.load %arg4[%c10_85, %c0_86] : memref<16x32xf32, #tpu.memory_space<vmem>>, vector<1x32xf32>
    %235 = arith.mulf %233, %234 : vector<1x32xf32>
    %c2_87 = arith.constant 2 : index
    %c0_88 = arith.constant 0 : index
    %236 = vector.load %arg5[%c2_87, %c0_88] : memref<8x32xf32, #tpu.memory_space<vmem>>, vector<1x32xf32>
    tpu.vector_store %arg5[%c2_87, %c0_88], %235 {strides = array<i32>} : memref<8x32xf32, #tpu.memory_space<vmem>>, vector<1x32xf32>,
    %237 = arith.addf %235, %223 : vector<1x32xf32>
    %c11 = arith.constant 11 : index
    %c0_89 = arith.constant 0 : index
    %238 = vector.load %arg0[%c11, %c0_89] : memref<16x32xf32, #tpu.memory_space<vmem>>, vector<1x32xf32>
    %cst_90 = arith.constant dense<0.000000e+00> : vector<1x32xf32>
    %239 = tpu.matmul %237, %0, %cst_90 {dimension_numbers = #tpu.dot_dimension_numbers<[1], [0], [0], [1], [0, 0, 1, 1], [], []>} : vector<1x32xf32>, vector<32x32xf32>, vector<1x32xf32> -> vector<1x32xf32>
    %240 = arith.addf %238, %239 : vector<1x32xf32>
    %241 = math.tanh %240 : vector<1x32xf32>
    %cst_91 = arith.constant dense<0.000000e+00> : vector<1x64xf32>
    %242 = tpu.matmul %241, %1, %cst_91 {dimension_numbers = #tpu.dot_dimension_numbers<[1], [0], [0], [1], [0, 0, 1, 1], [], []>} : vector<1x32xf32>, vector<32x64xf32>, vector<1x64xf32> -> vector<1x64xf32>
    %243 = arith.addf %242, %2 : vector<1x64xf32>
    %244 = vector.extract_strided_slice %243 {offsets = [0, 0], sizes = [1, 32], strides = [1, 1]} : vector<1x64xf32> to vector<1x32xf32>
    %245 = vector.extract_strided_slice %243 {offsets = [0, 32], sizes = [1, 32], strides = [1, 1]} : vector<1x64xf32> to vector<1x32xf32>
    %246 = math.exp %244 : vector<1x32xf32>
    %cst_92 = arith.constant dense<0.000000e+00> : vector<1xf32>
    %247 = vector.multi_reduction <add>, %246, %cst_92 [1] : vector<1x32xf32> to vector<1xf32>
    %248 = vector.shape_cast %247 : vector<1xf32> to vector<1x1xf32>
    %249 = tpu.reciprocal %248 {approx = true} : vector<1x1xf32> -> vector<1x1xf32>
    %250 = arith.mulf %248, %249 : vector<1x1xf32>
    %cst_93 = arith.constant 2.000000e+00 : f32
    %251 = vector.broadcast %cst_93 : f32 to vector<1x1xf32>
    %252 = arith.subf %251, %250 : vector<1x1xf32>
    %253 = arith.mulf %249, %252 : vector<1x1xf32>
    %254 = vector.broadcast %253 : vector<1x1xf32> to vector<1x32xf32>
    %255 = arith.mulf %246, %254 : vector<1x32xf32>
    %c11_94 = arith.constant 11 : index
    %c0_95 = arith.constant 0 : index
    %256 = vector.load %arg4[%c11_94, %c0_95] : memref<16x32xf32, #tpu.memory_space<vmem>>, vector<1x32xf32>
    %257 = arith.mulf %255, %256 : vector<1x32xf32>
    %c3_96 = arith.constant 3 : index
    %c0_97 = arith.constant 0 : index
    %258 = vector.load %arg5[%c3_96, %c0_97] : memref<8x32xf32, #tpu.memory_space<vmem>>, vector<1x32xf32>
    tpu.vector_store %arg5[%c3_96, %c0_97], %257 {strides = array<i32>} : memref<8x32xf32, #tpu.memory_space<vmem>>, vector<1x32xf32>,
    %259 = arith.addf %257, %245 : vector<1x32xf32>
    %c12 = arith.constant 12 : index
    %c0_98 = arith.constant 0 : index
    %260 = vector.load %arg0[%c12, %c0_98] : memref<16x32xf32, #tpu.memory_space<vmem>>, vector<1x32xf32>
    %cst_99 = arith.constant dense<0.000000e+00> : vector<1x32xf32>
    %261 = tpu.matmul %259, %0, %cst_99 {dimension_numbers = #tpu.dot_dimension_numbers<[1], [0], [0], [1], [0, 0, 1, 1], [], []>} : vector<1x32xf32>, vector<32x32xf32>, vector<1x32xf32> -> vector<1x32xf32>
    %262 = arith.addf %260, %261 : vector<1x32xf32>
    %263 = math.tanh %262 : vector<1x32xf32>
    %cst_100 = arith.constant dense<0.000000e+00> : vector<1x64xf32>
    %264 = tpu.matmul %263, %1, %cst_100 {dimension_numbers = #tpu.dot_dimension_numbers<[1], [0], [0], [1], [0, 0, 1, 1], [], []>} : vector<1x32xf32>, vector<32x64xf32>, vector<1x64xf32> -> vector<1x64xf32>
    %265 = arith.addf %264, %2 : vector<1x64xf32>
    %266 = vector.extract_strided_slice %265 {offsets = [0, 0], sizes = [1, 32], strides = [1, 1]} : vector<1x64xf32> to vector<1x32xf32>
    %267 = vector.extract_strided_slice %265 {offsets = [0, 32], sizes = [1, 32], strides = [1, 1]} : vector<1x64xf32> to vector<1x32xf32>
    %268 = math.exp %266 : vector<1x32xf32>
    %cst_101 = arith.constant dense<0.000000e+00> : vector<1xf32>
    %269 = vector.multi_reduction <add>, %268, %cst_101 [1] : vector<1x32xf32> to vector<1xf32>
    %270 = vector.shape_cast %269 : vector<1xf32> to vector<1x1xf32>
    %271 = tpu.reciprocal %270 {approx = true} : vector<1x1xf32> -> vector<1x1xf32>
    %272 = arith.mulf %270, %271 : vector<1x1xf32>
    %cst_102 = arith.constant 2.000000e+00 : f32
    %273 = vector.broadcast %cst_102 : f32 to vector<1x1xf32>
    %274 = arith.subf %273, %272 : vector<1x1xf32>
    %275 = arith.mulf %271, %274 : vector<1x1xf32>
    %276 = vector.broadcast %275 : vector<1x1xf32> to vector<1x32xf32>
    %277 = arith.mulf %268, %276 : vector<1x32xf32>
    %c12_103 = arith.constant 12 : index
    %c0_104 = arith.constant 0 : index
    %278 = vector.load %arg4[%c12_103, %c0_104] : memref<16x32xf32, #tpu.memory_space<vmem>>, vector<1x32xf32>
    %279 = arith.mulf %277, %278 : vector<1x32xf32>
    %c4_105 = arith.constant 4 : index
    %c0_106 = arith.constant 0 : index
    %280 = vector.load %arg5[%c4_105, %c0_106] : memref<8x32xf32, #tpu.memory_space<vmem>>, vector<1x32xf32>
    tpu.vector_store %arg5[%c4_105, %c0_106], %279 {strides = array<i32>} : memref<8x32xf32, #tpu.memory_space<vmem>>, vector<1x32xf32>,
    %281 = arith.addf %279, %267 : vector<1x32xf32>
    %c13 = arith.constant 13 : index
    %c0_107 = arith.constant 0 : index
    %282 = vector.load %arg0[%c13, %c0_107] : memref<16x32xf32, #tpu.memory_space<vmem>>, vector<1x32xf32>
    %cst_108 = arith.constant dense<0.000000e+00> : vector<1x32xf32>
    %283 = tpu.matmul %281, %0, %cst_108 {dimension_numbers = #tpu.dot_dimension_numbers<[1], [0], [0], [1], [0, 0, 1, 1], [], []>} : vector<1x32xf32>, vector<32x32xf32>, vector<1x32xf32> -> vector<1x32xf32>
    %284 = arith.addf %282, %283 : vector<1x32xf32>
    %285 = math.tanh %284 : vector<1x32xf32>
    %cst_109 = arith.constant dense<0.000000e+00> : vector<1x64xf32>
    %286 = tpu.matmul %285, %1, %cst_109 {dimension_numbers = #tpu.dot_dimension_numbers<[1], [0], [0], [1], [0, 0, 1, 1], [], []>} : vector<1x32xf32>, vector<32x64xf32>, vector<1x64xf32> -> vector<1x64xf32>
    %287 = arith.addf %286, %2 : vector<1x64xf32>
    %288 = vector.extract_strided_slice %287 {offsets = [0, 0], sizes = [1, 32], strides = [1, 1]} : vector<1x64xf32> to vector<1x32xf32>
    %289 = vector.extract_strided_slice %287 {offsets = [0, 32], sizes = [1, 32], strides = [1, 1]} : vector<1x64xf32> to vector<1x32xf32>
    %290 = math.exp %288 : vector<1x32xf32>
    %cst_110 = arith.constant dense<0.000000e+00> : vector<1xf32>
    %291 = vector.multi_reduction <add>, %290, %cst_110 [1] : vector<1x32xf32> to vector<1xf32>
    %292 = vector.shape_cast %291 : vector<1xf32> to vector<1x1xf32>
    %293 = tpu.reciprocal %292 {approx = true} : vector<1x1xf32> -> vector<1x1xf32>
    %294 = arith.mulf %292, %293 : vector<1x1xf32>
    %cst_111 = arith.constant 2.000000e+00 : f32
    %295 = vector.broadcast %cst_111 : f32 to vector<1x1xf32>
    %296 = arith.subf %295, %294 : vector<1x1xf32>
    %297 = arith.mulf %293, %296 : vector<1x1xf32>
    %298 = vector.broadcast %297 : vector<1x1xf32> to vector<1x32xf32>
    %299 = arith.mulf %290, %298 : vector<1x32xf32>
    %c13_112 = arith.constant 13 : index
    %c0_113 = arith.constant 0 : index
    %300 = vector.load %arg4[%c13_112, %c0_113] : memref<16x32xf32, #tpu.memory_space<vmem>>, vector<1x32xf32>
    %301 = arith.mulf %299, %300 : vector<1x32xf32>
    %c5_114 = arith.constant 5 : index
    %c0_115 = arith.constant 0 : index
    %302 = vector.load %arg5[%c5_114, %c0_115] : memref<8x32xf32, #tpu.memory_space<vmem>>, vector<1x32xf32>
    tpu.vector_store %arg5[%c5_114, %c0_115], %301 {strides = array<i32>} : memref<8x32xf32, #tpu.memory_space<vmem>>, vector<1x32xf32>,
    %303 = arith.addf %301, %289 : vector<1x32xf32>
    %c14 = arith.constant 14 : index
    %c0_116 = arith.constant 0 : index
    %304 = vector.load %arg0[%c14, %c0_116] : memref<16x32xf32, #tpu.memory_space<vmem>>, vector<1x32xf32>
    %cst_117 = arith.constant dense<0.000000e+00> : vector<1x32xf32>
    %305 = tpu.matmul %303, %0, %cst_117 {dimension_numbers = #tpu.dot_dimension_numbers<[1], [0], [0], [1], [0, 0, 1, 1], [], []>} : vector<1x32xf32>, vector<32x32xf32>, vector<1x32xf32> -> vector<1x32xf32>
    %306 = arith.addf %304, %305 : vector<1x32xf32>
    %307 = math.tanh %306 : vector<1x32xf32>
    %cst_118 = arith.constant dense<0.000000e+00> : vector<1x64xf32>
    %308 = tpu.matmul %307, %1, %cst_118 {dimension_numbers = #tpu.dot_dimension_numbers<[1], [0], [0], [1], [0, 0, 1, 1], [], []>} : vector<1x32xf32>, vector<32x64xf32>, vector<1x64xf32> -> vector<1x64xf32>
    %309 = arith.addf %308, %2 : vector<1x64xf32>
    %310 = vector.extract_strided_slice %309 {offsets = [0, 0], sizes = [1, 32], strides = [1, 1]} : vector<1x64xf32> to vector<1x32xf32>
    %311 = vector.extract_strided_slice %309 {offsets = [0, 32], sizes = [1, 32], strides = [1, 1]} : vector<1x64xf32> to vector<1x32xf32>
    %312 = math.exp %310 : vector<1x32xf32>
    %cst_119 = arith.constant dense<0.000000e+00> : vector<1xf32>
    %313 = vector.multi_reduction <add>, %312, %cst_119 [1] : vector<1x32xf32> to vector<1xf32>
    %314 = vector.shape_cast %313 : vector<1xf32> to vector<1x1xf32>
    %315 = tpu.reciprocal %314 {approx = true} : vector<1x1xf32> -> vector<1x1xf32>
    %316 = arith.mulf %314, %315 : vector<1x1xf32>
    %cst_120 = arith.constant 2.000000e+00 : f32
    %317 = vector.broadcast %cst_120 : f32 to vector<1x1xf32>
    %318 = arith.subf %317, %316 : vector<1x1xf32>
    %319 = arith.mulf %315, %318 : vector<1x1xf32>
    %320 = vector.broadcast %319 : vector<1x1xf32> to vector<1x32xf32>
    %321 = arith.mulf %312, %320 : vector<1x32xf32>
    %c14_121 = arith.constant 14 : index
    %c0_122 = arith.constant 0 : index
    %322 = vector.load %arg4[%c14_121, %c0_122] : memref<16x32xf32, #tpu.memory_space<vmem>>, vector<1x32xf32>
    %323 = arith.mulf %321, %322 : vector<1x32xf32>
    %c6_123 = arith.constant 6 : index
    %c0_124 = arith.constant 0 : index
    %324 = vector.load %arg5[%c6_123, %c0_124] : memref<8x32xf32, #tpu.memory_space<vmem>>, vector<1x32xf32>
    tpu.vector_store %arg5[%c6_123, %c0_124], %323 {strides = array<i32>} : memref<8x32xf32, #tpu.memory_space<vmem>>, vector<1x32xf32>,
    %325 = arith.addf %323, %311 : vector<1x32xf32>
    %c15 = arith.constant 15 : index
    %c0_125 = arith.constant 0 : index
    %326 = vector.load %arg0[%c15, %c0_125] : memref<16x32xf32, #tpu.memory_space<vmem>>, vector<1x32xf32>
    %cst_126 = arith.constant dense<0.000000e+00> : vector<1x32xf32>
    %327 = tpu.matmul %325, %0, %cst_126 {dimension_numbers = #tpu.dot_dimension_numbers<[1], [0], [0], [1], [0, 0, 1, 1], [], []>} : vector<1x32xf32>, vector<32x32xf32>, vector<1x32xf32> -> vector<1x32xf32>
    %328 = arith.addf %326, %327 : vector<1x32xf32>
    %329 = math.tanh %328 : vector<1x32xf32>
    %cst_127 = arith.constant dense<0.000000e+00> : vector<1x64xf32>
    %330 = tpu.matmul %329, %1, %cst_127 {dimension_numbers = #tpu.dot_dimension_numbers<[1], [0], [0], [1], [0, 0, 1, 1], [], []>} : vector<1x32xf32>, vector<32x64xf32>, vector<1x64xf32> -> vector<1x64xf32>
    %331 = arith.addf %330, %2 : vector<1x64xf32>
    %332 = vector.extract_strided_slice %331 {offsets = [0, 0], sizes = [1, 32], strides = [1, 1]} : vector<1x64xf32> to vector<1x32xf32>
    %333 = vector.extract_strided_slice %331 {offsets = [0, 32], sizes = [1, 32], strides = [1, 1]} : vector<1x64xf32> to vector<1x32xf32>
    %334 = math.exp %332 : vector<1x32xf32>
    %cst_128 = arith.constant dense<0.000000e+00> : vector<1xf32>
    %335 = vector.multi_reduction <add>, %334, %cst_128 [1] : vector<1x32xf32> to vector<1xf32>
    %336 = vector.shape_cast %335 : vector<1xf32> to vector<1x1xf32>
    %337 = tpu.reciprocal %336 {approx = true} : vector<1x1xf32> -> vector<1x1xf32>
    %338 = arith.mulf %336, %337 : vector<1x1xf32>
    %cst_129 = arith.constant 2.000000e+00 : f32
    %339 = vector.broadcast %cst_129 : f32 to vector<1x1xf32>
    %340 = arith.subf %339, %338 : vector<1x1xf32>
    %341 = arith.mulf %337, %340 : vector<1x1xf32>
    %342 = vector.broadcast %341 : vector<1x1xf32> to vector<1x32xf32>
    %343 = arith.mulf %334, %342 : vector<1x32xf32>
    %c15_130 = arith.constant 15 : index
    %c0_131 = arith.constant 0 : index
    %344 = vector.load %arg4[%c15_130, %c0_131] : memref<16x32xf32, #tpu.memory_space<vmem>>, vector<1x32xf32>
    %345 = arith.mulf %343, %344 : vector<1x32xf32>
    %c7_132 = arith.constant 7 : index
    %c0_133 = arith.constant 0 : index
    %346 = vector.load %arg5[%c7_132, %c0_133] : memref<8x32xf32, #tpu.memory_space<vmem>>, vector<1x32xf32>
    tpu.vector_store %arg5[%c7_132, %c0_133], %345 {strides = array<i32>} : memref<8x32xf32, #tpu.memory_space<vmem>>, vector<1x32xf32>,
    %c0_134 = arith.constant 0 : index
    %c0_135 = arith.constant 0 : index
    %347 = vector.load %arg6[%c0_134, %c0_135] : memref<1x32xf32, #tpu.memory_space<vmem>>, vector<1x32xf32>
    tpu.vector_store %arg6[%c0_134, %c0_135], %333 {strides = array<i32>} : memref<1x32xf32, #tpu.memory_space<vmem>>, vector<1x32xf32>,
    return
  }
}

</mosaic_0001>

<llo_original>
// kernel: feature_rnn_forward.1
$region0: #{feature_rnn_forward.1}
  #allocation0 [shape = 'u32[]', space=smem, size = 0x4, offset = 0x4, fixed_abs, tag = 'smem constant byte address 0x4 - core index']
  #allocation1 [shape = 'u32[144,128]{1,0:T(1,128)}', space=vmem, size = 0x12000, scoped, tag = 'internal scratch']
  %s0 = inlined_call_operand.vmem [shape: f32[16,32], index: 0, kind: input, shape index: {}]
  %s1 = inlined_call_operand.vmem [shape: f32[32,32], index: 1, kind: input, shape index: {}]
  %s2 = inlined_call_operand.vmem [shape: f32[32,64], index: 2, kind: input, shape index: {}]
  %s3 = inlined_call_operand.vmem [shape: f32[1,64], index: 3, kind: input, shape index: {}]
  %s4 = inlined_call_operand.vmem [shape: f32[16,32], index: 4, kind: input, shape index: {}]
  %s5 = inlined_call_operand.hbm [shape: f32[8,32], index: 5, kind: output, shape index: {0}]
  %s6 = inlined_call_operand.hbm [shape: f32[1,32], index: 6, kind: output, shape index: {1}]
  %7 = xla_tuple %s5, %s6
  %s8 = sld [smem:[#allocation0]]
  $region38: #{feature_rnn_forward.1} parent=0
    _
  %s10 = ssub.s32 1, %s8
  %s11 = scalar_select 0, %s10, %s8
  $region1: #{feature_rnn_forward.1} parent=0
    #allocation2 [shape = 'u8[4096]{0}', space=vmem, size = 0x1000, scoped, tag = 'output window, operand 0, single buffered']
    #allocation3 [shape = 's32[1]{0}', space=sflag, size = 0x4, scoped, tag = 'scoped memory for feature_rnn_forward.1']
    #allocation4 [shape = 'u8[512]{0}', space=vmem, size = 0x400, scoped, tag = 'output window, operand 1, single buffered']
    #allocation5 [shape = 's32[1]{0}', space=sflag, size = 0x4, scoped, tag = 'scoped memory for feature_rnn_forward.1']
    %12 = vsyncpa [#allocation3], 0
    %13 = vsyncpa [#allocation5], 0
    // Predicated region
    $region2: #{feature_rnn_forward.1} parent=1 // pred_check
      _
    $region3: #{feature_rnn_forward.1} parent=1 // pred_check_branch
      %15 = sbr.rel (0) target = $region5
    $region4: #{feature_rnn_forward.1} parent=1 // pred_region
      _
    $region5: #{feature_rnn_forward.1} parent=1 // pred_fallthru
      _
    // Predicated region
    $region6: #{feature_rnn_forward.1} parent=1 // pred_check
      _
    $region7: #{feature_rnn_forward.1} parent=1 // pred_check_branch
      %17 = sbr.rel (0) target = $region9
    $region8: #{feature_rnn_forward.1} parent=1 // pred_region
      _
    $region9: #{feature_rnn_forward.1} parent=1 // pred_fallthru
      _
    // Predicated region
    $region10: #{feature_rnn_forward.1} parent=1 // pred_check
      _
    $region11: #{feature_rnn_forward.1} parent=1 // pred_check_branch
      %19 = sbr.rel (0) target = $region13
    $region12: #{feature_rnn_forward.1} parent=1 // pred_region
      _
    $region13: #{feature_rnn_forward.1} parent=1 // pred_fallthru
      _
    // Predicated region
    $region14: #{feature_rnn_forward.1} parent=1 // pred_check
      _
    $region15: #{feature_rnn_forward.1} parent=1 // pred_check_branch
      %21 = sbr.rel (0) target = $region17
    $region16: #{feature_rnn_forward.1} parent=1 // pred_region
      _
    $region17: #{feature_rnn_forward.1} parent=1 // pred_fallthru
      _
    // Predicated region
    $region18: #{feature_rnn_forward.1} parent=1 // pred_check
      _
    $region19: #{feature_rnn_forward.1} parent=1 // pred_check_branch
      %23 = sbr.rel (0) target = $region21
    $region20: #{feature_rnn_forward.1} parent=1 // pred_region
      _
    $region21: #{feature_rnn_forward.1} parent=1 // pred_fallthru
      _
    %v24 = vld [vmem:[%s1] sm:$0xff]
    %v25 = vld [vmem:[%s1 + $0x8] sm:$0xff]
    %v26 = vld [vmem:[%s1 + $0x10] sm:$0xff]
    %v27 = vld [vmem:[%s1 + $0x18] sm:$0xff]
    %v28 = vld [vmem:[%s2] sm:$0xff]
    %v29 = vld [vmem:[%s2 + $0x8] sm:$0xff]
    %v30 = vld [vmem:[%s2 + $0x10] sm:$0xff]
    %v31 = vld [vmem:[%s2 + $0x18] sm:$0xff]
    %v32 = vld [vmem:[%s3] sm:$0x1]
    %v33 = vld [vmem:[%s0] sm:$0x1]
    %vm34 = vcmask 261120
    %v36 = vsel %vm34, 0.0, 0
    %38 = vmatprep.subr.mxu0 0.0
    %39 = vmatpush1.msra.mxu0 %v24
    %40 = vmatprep.subr.mxu0 0.0
    %41 = vmatpush1.msra.mxu0 %v25
    %42 = vmatprep.subr.mxu0 0.0
    %43 = vmatpush1.msra.mxu0 %v26
    %44 = vmatprep.subr.mxu0 0.0
    %45 = vmatpush1.msra.mxu0 %v27
    %46 = vmatprep.subr.mxu0 0.0
    %47 = vmatpush1.msra.mxu0 0.0
    %48 = vmatprep.subr.mxu0 0.0
    %49 = vmatpush1.msra.mxu0 0.0
    %50 = vmatprep.subr.mxu0 0.0
    %51 = vmatpush1.msra.mxu0 0.0
    %52 = vmatprep.subr.mxu0 0.0
    %53 = vmatpush1.msra.mxu0 0.0
    %54 = vmatprep.subr.mxu0 0.0
    %55 = vmatpush1.msra.mxu0 0.0
    %56 = vmatprep.subr.mxu0 0.0
    %57 = vmatpush1.msra.mxu0 0.0
    %58 = vmatprep.subr.mxu0 0.0
    %59 = vmatpush1.msra.mxu0 0.0
    %60 = vmatprep.subr.mxu0 0.0
    %61 = vmatpush1.msra.mxu0 0.0
    %62 = vmatprep.subr.mxu0 0.0
    %63 = vmatpush1.msra.mxu0 0.0
    %64 = vmatprep.subr.mxu0 0.0
    %65 = vmatpush1.msra.mxu0 0.0
    %66 = vmatprep.subr.mxu0 0.0
    %67 = vmatpush1.msra.mxu0 0.0
    %68 = vmatprep.subr.mxu0 0.0
    %69 = vmatpush1.msra.mxu0 0.0
    %70 = vmatprep.subr.mxu0 0.0
    %71 = vmatpush1.msra.mxu0 0.0
    %72 = vmatprep.subr.mxu0 0.0
    %73 = vmatpush1.msra.mxu0 0.0
    %74 = vmatprep.subr.mxu0 0.0
    %75 = vmatpush1.msra.mxu0 0.0
    %76 = vmatprep.subr.mxu0 0.0
    %77 = vmatpush1.msra.mxu0 0.0
    %78 = vmatprep.subr.mxu0 0.0
    %79 = vmatpush1.msra.mxu0 0.0
    %80 = vmatprep.subr.mxu0 0.0
    %81 = vmatpush1.msra.mxu0 0.0
    %82 = vmatprep.subr.mxu0 0.0
    %83 = vmatpush1.msra.mxu0 0.0
    %84 = vmatprep.subr.mxu0 0.0
    %85 = vmatpush1.msra.mxu0 0.0
    %86 = vmatprep.subr.mxu0 0.0
    %87 = vmatpush1.msra.mxu0 0.0
    %88 = vmatprep.subr.mxu0 0.0
    %89 = vmatpush1.msra.mxu0 0.0
    %90 = vmatprep.subr.mxu0 0.0
    %91 = vmatpush1.msra.mxu0 0.0
    %92 = vmatprep.subr.mxu0 0.0
    %93 = vmatpush1.msra.mxu0 0.0
    %94 = vmatprep.subr.mxu0 0.0
    %95 = vmatpush1.msra.mxu0 0.0
    %96 = vmatprep.subr.mxu0 0.0
    %97 = vmatpush1.msra.mxu0 0.0
    %98 = vmatprep.subr.mxu0 0.0
    %99 = vmatpush1.msra.mxu0 0.0
    %100 = vmatprep.subr.mxu0 0.0
    %101 = vmatpush1.msra.mxu0 0.0
    %102 = vmatprep.mubr.f32.mxu0 0.0
    %103 = vmatmul.mubr.f32.gmra.mrb[0].mxu0 %v36
    %v104 = vpop.f32.mrb[0].mxu0
    %v105 = vadd.f32 0.0, %v104
    %v106 = vpop.f32.mrb[0].mxu0
    %107 = vdwg.mxu0
    %v108 = vadd.f32 %v33, %v105
    %v109 = vtanh.pop %v108
    %v111 = vsel %vm34, %v109, 0
    %113 = vmatprep.subr.mxu0 0.0
    %114 = vmatpush1.msra.mxu0 %v28
    %115 = vmatprep.subr.mxu0 0.0
    %116 = vmatpush1.msra.mxu0 %v29
    %117 = vmatprep.subr.mxu0 0.0
    %118 = vmatpush1.msra.mxu0 %v30
    %119 = vmatprep.subr.mxu0 0.0
    %120 = vmatpush1.msra.mxu0 %v31
    %121 = vmatprep.subr.mxu0 0.0
    %122 = vmatpush1.msra.mxu0 0.0
    %123 = vmatprep.subr.mxu0 0.0
    %124 = vmatpush1.msra.mxu0 0.0
    %125 = vmatprep.subr.mxu0 0.0
    %126 = vmatpush1.msra.mxu0 0.0
    %127 = vmatprep.subr.mxu0 0.0
    %128 = vmatpush1.msra.mxu0 0.0
    %129 = vmatprep.subr.mxu0 0.0
    %130 = vmatpush1.msra.mxu0 0.0
    %131 = vmatprep.subr.mxu0 0.0
    %132 = vmatpush1.msra.mxu0 0.0
    %133 = vmatprep.subr.mxu0 0.0
    %134 = vmatpush1.msra.mxu0 0.0
    %135 = vmatprep.subr.mxu0 0.0
    %136 = vmatpush1.msra.mxu0 0.0
    %137 = vmatprep.subr.mxu0 0.0
    %138 = vmatpush1.msra.mxu0 0.0
    %139 = vmatprep.subr.mxu0 0.0
    %140 = vmatpush1.msra.mxu0 0.0
    %141 = vmatprep.subr.mxu0 0.0
    %142 = vmatpush1.msra.mxu0 0.0
    %143 = vmatprep.subr.mxu0 0.0
    %144 = vmatpush1.msra.mxu0 0.0
    %145 = vmatprep.subr.mxu0 0.0
    %146 = vmatpush1.msra.mxu0 0.0
    %147 = vmatprep.subr.mxu0 0.0
    %148 = vmatpush1.msra.mxu0 0.0
    %149 = vmatprep.subr.mxu0 0.0
    %150 = vmatpush1.msra.mxu0 0.0
    %151 = vmatprep.subr.mxu0 0.0
    %152 = vmatpush1.msra.mxu0 0.0
    %153 = vmatprep.subr.mxu0 0.0
    %154 = vmatpush1.msra.mxu0 0.0
    %155 = vmatprep.subr.mxu0 0.0
    %156 = vmatpush1.msra.mxu0 0.0
    %157 = vmatprep.subr.mxu0 0.0
    %158 = vmatpush1.msra.mxu0 0.0
    %159 = vmatprep.subr.mxu0 0.0
    %160 = vmatpush1.msra.mxu0 0.0
    %161 = vmatprep.subr.mxu0 0.0
    %162 = vmatpush1.msra.mxu0 0.0
    %163 = vmatprep.subr.mxu0 0.0
    %164 = vmatpush1.msra.mxu0 0.0
    %165 = vmatprep.subr.mxu0 0.0
    %166 = vmatpush1.msra.mxu0 0.0
    %167 = vmatprep.subr.mxu0 0.0
    %168 = vmatpush1.msra.mxu0 0.0
    %169 = vmatprep.subr.mxu0 0.0
    %170 = vmatpush1.msra.mxu0 0.0
    %171 = vmatprep.subr.mxu0 0.0
    %172 = vmatpush1.msra.mxu0 0.0
    %173 = vmatprep.subr.mxu0 0.0
    %174 = vmatpush1.msra.mxu0 0.0
    %175 = vmatprep.subr.mxu0 0.0
    %176 = vmatpush1.msra.mxu0 0.0
    %177 = vmatprep.mubr.f32.mxu0 0.0
    %178 = vmatmul.mubr.f32.gmra.mrb[0].mxu0 %v111
    %v179 = vpop.f32.mrb[0].mxu0
    %v180 = vadd.f32 %v32, %v179
    %v181 = vpop.f32.mrb[0].mxu0
    %182 = vdwg.mxu0
    %v183 = vmul.f32 %v180, 1.442695
    %v184 = vpow.pop %v183
    %vm185 = vcmask 253952
    %v186 = vsel %vm185, %v184, 0.0
    %187 = vadd.xlane.f32.xlu0 %v186
    %v188 = vpop.xlane.xlu0 %187
    %v189 = vrcp.pop %v188
    %v190 = vmul.f32 %v188, %v189
    %v191 = vsub.f32 2.0, %v190
    %v192 = vmul.f32 %v189, %v191
    %v193 = vmul.f32 %v184, %v192
    %v194 = vld [vmem:[%s4] sm:$0x1]
    %v195 = vmul.f32 %v193, %v194
    %197 = vrot.lane.b32.xlu0 %v180, 96
    %v198 = vpop.permute.xlu0 %197
    %v200 = vadd.f32 %v195, %v198
    %v201 = vld [vmem:[%s0 + $0x1] sm:$0x1]
    %v203 = vsel %vm34, %v200, 0
    %205 = vmatprep.subr.mxu0 0.0
    %206 = vmatpush1.msra.mxu0 %v24
    %207 = vmatprep.subr.mxu0 0.0
    %208 = vmatpush1.msra.mxu0 %v25
    %209 = vmatprep.subr.mxu0 0.0
    %210 = vmatpush1.msra.mxu0 %v26
    %211 = vmatprep.subr.mxu0 0.0
    %212 = vmatpush1.msra.mxu0 %v27
    %213 = vmatprep.subr.mxu0 0.0
    %214 = vmatpush1.msra.mxu0 0.0
    %215 = vmatprep.subr.mxu0 0.0
    %216 = vmatpush1.msra.mxu0 0.0
    %217 = vmatprep.subr.mxu0 0.0
    %218 = vmatpush1.msra.mxu0 0.0
    %219 = vmatprep.subr.mxu0 0.0
    %220 = vmatpush1.msra.mxu0 0.0
    %221 = vmatprep.subr.mxu0 0.0
    %222 = vmatpush1.msra.mxu0 0.0
    %223 = vmatprep.subr.mxu0 0.0
    %224 = vmatpush1.msra.mxu0 0.0
    %225 = vmatprep.subr.mxu0 0.0
    %226 = vmatpush1.msra.mxu0 0.0
    %227 = vmatprep.subr.mxu0 0.0
    %228 = vmatpush1.msra.mxu0 0.0
    %229 = vmatprep.subr.mxu0 0.0
    %230 = vmatpush1.msra.mxu0 0.0
    %231 = vmatprep.subr.mxu0 0.0
    %232 = vmatpush1.msra.mxu0 0.0
    %233 = vmatprep.subr.mxu0 0.0
    %234 = vmatpush1.msra.mxu0 0.0
    %235 = vmatprep.subr.mxu0 0.0
    %236 = vmatpush1.msra.mxu0 0.0
    %237 = vmatprep.subr.mxu0 0.0
    %238 = vmatpush1.msra.mxu0 0.0
    %239 = vmatprep.subr.mxu0 0.0
    %240 = vmatpush1.msra.mxu0 0.0
    %241 = vmatprep.subr.mxu0 0.0
    %242 = vmatpush1.msra.mxu0 0.0
    %243 = vmatprep.subr.mxu0 0.0
    %244 = vmatpush1.msra.mxu0 0.0
    %245 = vmatprep.subr.mxu0 0.0
    %246 = vmatpush1.msra.mxu0 0.0
    %247 = vmatprep.subr.mxu0 0.0
    %248 = vmatpush1.msra.mxu0 0.0
    %249 = vmatprep.subr.mxu0 0.0
    %250 = vmatpush1.msra.mxu0 0.0
    %251 = vmatprep.subr.mxu0 0.0
    %252 = vmatpush1.msra.mxu0 0.0
    %253 = vmatprep.subr.mxu0 0.0
    %254 = vmatpush1.msra.mxu0 0.0
    %255 = vmatprep.subr.mxu0 0.0
    %256 = vmatpush1.msra.mxu0 0.0
    %257 = vmatprep.subr.mxu0 0.0
    %258 = vmatpush1.msra.mxu0 0.0
    %259 = vmatprep.subr.mxu0 0.0
    %260 = vmatpush1.msra.mxu0 0.0
    %261 = vmatprep.subr.mxu0 0.0
    %262 = vmatpush1.msra.mxu0 0.0
    %263 = vmatprep.subr.mxu0 0.0
    %264 = vmatpush1.msra.mxu0 0.0
    %265 = vmatprep.subr.mxu0 0.0
    %266 = vmatpush1.msra.mxu0 0.0
    %267 = vmatprep.subr.mxu0 0.0
    %268 = vmatpush1.msra.mxu0 0.0
    %269 = vmatprep.mubr.f32.mxu0 0.0
    %270 = vmatmul.mubr.f32.gmra.mrb[0].mxu0 %v203
    %v271 = vpop.f32.mrb[0].mxu0
    %v272 = vadd.f32 0.0, %v271
    %v273 = vpop.f32.mrb[0].mxu0
    %274 = vdwg.mxu0
    %v275 = vadd.f32 %v201, %v272
    %v276 = vtanh.pop %v275
    %v278 = vsel %vm34, %v276, 0
    %280 = vmatprep.subr.mxu0 0.0
    %281 = vmatpush1.msra.mxu0 %v28
    %282 = vmatprep.subr.mxu0 0.0
    %283 = vmatpush1.msra.mxu0 %v29
    %284 = vmatprep.subr.mxu0 0.0
    %285 = vmatpush1.msra.mxu0 %v30
    %286 = vmatprep.subr.mxu0 0.0
    %287 = vmatpush1.msra.mxu0 %v31
    %288 = vmatprep.subr.mxu0 0.0
    %289 = vmatpush1.msra.mxu0 0.0
    %290 = vmatprep.subr.mxu0 0.0
    %291 = vmatpush1.msra.mxu0 0.0
    %292 = vmatprep.subr.mxu0 0.0
    %293 = vmatpush1.msra.mxu0 0.0
    %294 = vmatprep.subr.mxu0 0.0
    %295 = vmatpush1.msra.mxu0 0.0
    %296 = vmatprep.subr.mxu0 0.0
    %297 = vmatpush1.msra.mxu0 0.0
    %298 = vmatprep.subr.mxu0 0.0
    %299 = vmatpush1.msra.mxu0 0.0
    %300 = vmatprep.subr.mxu0 0.0
    %301 = vmatpush1.msra.mxu0 0.0
    %302 = vmatprep.subr.mxu0 0.0
    %303 = vmatpush1.msra.mxu0 0.0
    %304 = vmatprep.subr.mxu0 0.0
    %305 = vmatpush1.msra.mxu0 0.0
    %306 = vmatprep.subr.mxu0 0.0
    %307 = vmatpush1.msra.mxu0 0.0
    %308 = vmatprep.subr.mxu0 0.0
    %309 = vmatpush1.msra.mxu0 0.0
    %310 = vmatprep.subr.mxu0 0.0
    %311 = vmatpush1.msra.mxu0 0.0
    %312 = vmatprep.subr.mxu0 0.0
    %313 = vmatpush1.msra.mxu0 0.0
    %314 = vmatprep.subr.mxu0 0.0
    %315 = vmatpush1.msra.mxu0 0.0
    %316 = vmatprep.subr.mxu0 0.0
    %317 = vmatpush1.msra.mxu0 0.0
    %318 = vmatprep.subr.mxu0 0.0
    %319 = vmatpush1.msra.mxu0 0.0
    %320 = vmatprep.subr.mxu0 0.0
    %321 = vmatpush1.msra.mxu0 0.0
    %322 = vmatprep.subr.mxu0 0.0
    %323 = vmatpush1.msra.mxu0 0.0
    %324 = vmatprep.subr.mxu0 0.0
    %325 = vmatpush1.msra.mxu0 0.0
    %326 = vmatprep.subr.mxu0 0.0
    %327 = vmatpush1.msra.mxu0 0.0
    %328 = vmatprep.subr.mxu0 0.0
    %329 = vmatpush1.msra.mxu0 0.0
    %330 = vmatprep.subr.mxu0 0.0
    %331 = vmatpush1.msra.mxu0 0.0
    %332 = vmatprep.subr.mxu0 0.0
    %333 = vmatpush1.msra.mxu0 0.0
    %334 = vmatprep.subr.mxu0 0.0
    %335 = vmatpush1.msra.mxu0 0.0
    %336 = vmatprep.subr.mxu0 0.0
    %337 = vmatpush1.msra.mxu0 0.0
    %338 = vmatprep.subr.mxu0 0.0
    %339 = vmatpush1.msra.mxu0 0.0
    %340 = vmatprep.subr.mxu0 0.0
    %341 = vmatpush1.msra.mxu0 0.0
    %342 = vmatprep.subr.mxu0 0.0
    %343 = vmatpush1.msra.mxu0 0.0
    %344 = vmatprep.mubr.f32.mxu0 0.0
    %345 = vmatmul.mubr.f32.gmra.mrb[0].mxu0 %v278
    %v346 = vpop.f32.mrb[0].mxu0
    %v347 = vadd.f32 %v32, %v346
    %v348 = vpop.f32.mrb[0].mxu0
    %349 = vdwg.mxu0
    %v350 = vmul.f32 %v347, 1.442695
    %v351 = vpow.pop %v350
    %v352 = vsel %vm185, %v351, 0.0
    %353 = vadd.xlane.f32.xlu0 %v352
    %v354 = vpop.xlane.xlu0 %353
    %v355 = vrcp.pop %v354
    %v356 = vmul.f32 %v354, %v355
    %v357 = vsub.f32 2.0, %v356
    %v358 = vmul.f32 %v355, %v357
    %v359 = vmul.f32 %v351, %v358
    %v360 = vld [vmem:[%s4 + $0x1] sm:$0x1]
    %v361 = vmul.f32 %v359, %v360
    %363 = vrot.lane.b32.xlu0 %v347, 96
    %v364 = vpop.permute.xlu0 %363
    %v366 = vadd.f32 %v361, %v364
    %v367 = vld [vmem:[%s0 + $0x2] sm:$0x1]
    %v369 = vsel %vm34, %v366, 0
    %371 = vmatprep.subr.mxu0 0.0
    %372 = vmatpush1.msra.mxu0 %v24
    %373 = vmatprep.subr.mxu0 0.0
    %374 = vmatpush1.msra.mxu0 %v25
    %375 = vmatprep.subr.mxu0 0.0
    %376 = vmatpush1.msra.mxu0 %v26
    %377 = vmatprep.subr.mxu0 0.0
    %378 = vmatpush1.msra.mxu0 %v27
    %379 = vmatprep.subr.mxu0 0.0
    %380 = vmatpush1.msra.mxu0 0.0
    %381 = vmatprep.subr.mxu0 0.0
    %382 = vmatpush1.msra.mxu0 0.0
    %383 = vmatprep.subr.mxu0 0.0
    %384 = vmatpush1.msra.mxu0 0.0
    %385 = vmatprep.subr.mxu0 0.0
    %386 = vmatpush1.msra.mxu0 0.0
    %387 = vmatprep.subr.mxu0 0.0
    %388 = vmatpush1.msra.mxu0 0.0
    %389 = vmatprep.subr.mxu0 0.0
    %390 = vmatpush1.msra.mxu0 0.0
    %391 = vmatprep.subr.mxu0 0.0
    %392 = vmatpush1.msra.mxu0 0.0
    %393 = vmatprep.subr.mxu0 0.0
    %394 = vmatpush1.msra.mxu0 0.0
    %395 = vmatprep.subr.mxu0 0.0
    %396 = vmatpush1.msra.mxu0 0.0
    %397 = vmatprep.subr.mxu0 0.0
    %398 = vmatpush1.msra.mxu0 0.0
    %399 = vmatprep.subr.mxu0 0.0
    %400 = vmatpush1.msra.mxu0 0.0
    %401 = vmatprep.subr.mxu0 0.0
    %402 = vmatpush1.msra.mxu0 0.0
    %403 = vmatprep.subr.mxu0 0.0
    %404 = vmatpush1.msra.mxu0 0.0
    %405 = vmatprep.subr.mxu0 0.0
    %406 = vmatpush1.msra.mxu0 0.0
    %407 = vmatprep.subr.mxu0 0.0
    %408 = vmatpush1.msra.mxu0 0.0
    %409 = vmatprep.subr.mxu0 0.0
    %410 = vmatpush1.msra.mxu0 0.0
    %411 = vmatprep.subr.mxu0 0.0
    %412 = vmatpush1.msra.mxu0 0.0
    %413 = vmatprep.subr.mxu0 0.0
    %414 = vmatpush1.msra.mxu0 0.0
    %415 = vmatprep.subr.mxu0 0.0
    %416 = vmatpush1.msra.mxu0 0.0
    %417 = vmatprep.subr.mxu0 0.0
    %418 = vmatpush1.msra.mxu0 0.0
    %419 = vmatprep.subr.mxu0 0.0
    %420 = vmatpush1.msra.mxu0 0.0
    %421 = vmatprep.subr.mxu0 0.0
    %422 = vmatpush1.msra.mxu0 0.0
    %423 = vmatprep.subr.mxu0 0.0
    %424 = vmatpush1.msra.mxu0 0.0
    %425 = vmatprep.subr.mxu0 0.0
    %426 = vmatpush1.msra.mxu0 0.0
    %427 = vmatprep.subr.mxu0 0.0
    %428 = vmatpush1.msra.mxu0 0.0
    %429 = vmatprep.subr.mxu0 0.0
    %430 = vmatpush1.msra.mxu0 0.0
    %431 = vmatprep.subr.mxu0 0.0
    %432 = vmatpush1.msra.mxu0 0.0
    %433 = vmatprep.subr.mxu0 0.0
    %434 = vmatpush1.msra.mxu0 0.0
    %435 = vmatprep.mubr.f32.mxu0 0.0
    %436 = vmatmul.mubr.f32.gmra.mrb[0].mxu0 %v369
    %v437 = vpop.f32.mrb[0].mxu0
    %v438 = vadd.f32 0.0, %v437
    %v439 = vpop.f32.mrb[0].mxu0
    %440 = vdwg.mxu0
    %v441 = vadd.f32 %v367, %v438
    %v442 = vtanh.pop %v441
    %v444 = vsel %vm34, %v442, 0
    %446 = vmatprep.subr.mxu0 0.0
    %447 = vmatpush1.msra.mxu0 %v28
    %448 = vmatprep.subr.mxu0 0.0
    %449 = vmatpush1.msra.mxu0 %v29
    %450 = vmatprep.subr.mxu0 0.0
    %451 = vmatpush1.msra.mxu0 %v30
    %452 = vmatprep.subr.mxu0 0.0
    %453 = vmatpush1.msra.mxu0 %v31
    %454 = vmatprep.subr.mxu0 0.0
    %455 = vmatpush1.msra.mxu0 0.0
    %456 = vmatprep.subr.mxu0 0.0
    %457 = vmatpush1.msra.mxu0 0.0
    %458 = vmatprep.subr.mxu0 0.0
    %459 = vmatpush1.msra.mxu0 0.0
    %460 = vmatprep.subr.mxu0 0.0
    %461 = vmatpush1.msra.mxu0 0.0
    %462 = vmatprep.subr.mxu0 0.0
    %463 = vmatpush1.msra.mxu0 0.0
    %464 = vmatprep.subr.mxu0 0.0
    %465 = vmatpush1.msra.mxu0 0.0
    %466 = vmatprep.subr.mxu0 0.0
    %467 = vmatpush1.msra.mxu0 0.0
    %468 = vmatprep.subr.mxu0 0.0
    %469 = vmatpush1.msra.mxu0 0.0
    %470 = vmatprep.subr.mxu0 0.0
    %471 = vmatpush1.msra.mxu0 0.0
    %472 = vmatprep.subr.mxu0 0.0
    %473 = vmatpush1.msra.mxu0 0.0
    %474 = vmatprep.subr.mxu0 0.0
    %475 = vmatpush1.msra.mxu0 0.0
    %476 = vmatprep.subr.mxu0 0.0
    %477 = vmatpush1.msra.mxu0 0.0
    %478 = vmatprep.subr.mxu0 0.0
    %479 = vmatpush1.msra.mxu0 0.0
    %480 = vmatprep.subr.mxu0 0.0
    %481 = vmatpush1.msra.mxu0 0.0
    %482 = vmatprep.subr.mxu0 0.0
    %483 = vmatpush1.msra.mxu0 0.0
    %484 = vmatprep.subr.mxu0 0.0
    %485 = vmatpush1.msra.mxu0 0.0
    %486 = vmatprep.subr.mxu0 0.0
    %487 = vmatpush1.msra.mxu0 0.0
    %488 = vmatprep.subr.mxu0 0.0
    %489 = vmatpush1.msra.mxu0 0.0
    %490 = vmatprep.subr.mxu0 0.0
    %491 = vmatpush1.msra.mxu0 0.0
    %492 = vmatprep.subr.mxu0 0.0
    %493 = vmatpush1.msra.mxu0 0.0
    %494 = vmatprep.subr.mxu0 0.0
    %495 = vmatpush1.msra.mxu0 0.0
    %496 = vmatprep.subr.mxu0 0.0
    %497 = vmatpush1.msra.mxu0 0.0
    %498 = vmatprep.subr.mxu0 0.0
    %499 = vmatpush1.msra.mxu0 0.0
    %500 = vmatprep.subr.mxu0 0.0
    %501 = vmatpush1.msra.mxu0 0.0
    %502 = vmatprep.subr.mxu0 0.0
    %503 = vmatpush1.msra.mxu0 0.0
    %504 = vmatprep.subr.mxu0 0.0
    %505 = vmatpush1.msra.mxu0 0.0
    %506 = vmatprep.subr.mxu0 0.0
    %507 = vmatpush1.msra.mxu0 0.0
    %508 = vmatprep.subr.mxu0 0.0
    %509 = vmatpush1.msra.mxu0 0.0
    %510 = vmatprep.mubr.f32.mxu0 0.0
    %511 = vmatmul.mubr.f32.gmra.mrb[0].mxu0 %v444
    %v512 = vpop.f32.mrb[0].mxu0
    %v513 = vadd.f32 %v32, %v512
    %v514 = vpop.f32.mrb[0].mxu0
    %515 = vdwg.mxu0
    %v516 = vmul.f32 %v513, 1.442695
    %v517 = vpow.pop %v516
    %v518 = vsel %vm185, %v517, 0.0
    %519 = vadd.xlane.f32.xlu0 %v518
    %v520 = vpop.xlane.xlu0 %519
    %v521 = vrcp.pop %v520
    %v522 = vmul.f32 %v520, %v521
    %v523 = vsub.f32 2.0, %v522
    %v524 = vmul.f32 %v521, %v523
    %v525 = vmul.f32 %v517, %v524
    %v526 = vld [vmem:[%s4 + $0x2] sm:$0x1]
    %v527 = vmul.f32 %v525, %v526
    %529 = vrot.lane.b32.xlu0 %v513, 96
    %v530 = vpop.permute.xlu0 %529
    %v532 = vadd.f32 %v527, %v530
    %v533 = vld [vmem:[%s0 + $0x3] sm:$0x1]
    %v535 = vsel %vm34, %v532, 0
    %537 = vmatprep.subr.mxu0 0.0
    %538 = vmatpush1.msra.mxu0 %v24
    %539 = vmatprep.subr.mxu0 0.0
    %540 = vmatpush1.msra.mxu0 %v25
    %541 = vmatprep.subr.mxu0 0.0
    %542 = vmatpush1.msra.mxu0 %v26
    %543 = vmatprep.subr.mxu0 0.0
    %544 = vmatpush1.msra.mxu0 %v27
    %545 = vmatprep.subr.mxu0 0.0
    %546 = vmatpush1.msra.mxu0 0.0
    %547 = vmatprep.subr.mxu0 0.0
    %548 = vmatpush1.msra.mxu0 0.0
    %549 = vmatprep.subr.mxu0 0.0
    %550 = vmatpush1.msra.mxu0 0.0
    %551 = vmatprep.subr.mxu0 0.0
    %552 = vmatpush1.msra.mxu0 0.0
    %553 = vmatprep.subr.mxu0 0.0
    %554 = vmatpush1.msra.mxu0 0.0
    %555 = vmatprep.subr.mxu0 0.0
    %556 = vmatpush1.msra.mxu0 0.0
    %557 = vmatprep.subr.mxu0 0.0
    %558 = vmatpush1.msra.mxu0 0.0
    %559 = vmatprep.subr.mxu0 0.0
    %560 = vmatpush1.msra.mxu0 0.0
    %561 = vmatprep.subr.mxu0 0.0
    %562 = vmatpush1.msra.mxu0 0.0
    %563 = vmatprep.subr.mxu0 0.0
    %564 = vmatpush1.msra.mxu0 0.0
    %565 = vmatprep.subr.mxu0 0.0
    %566 = vmatpush1.msra.mxu0 0.0
    %567 = vmatprep.subr.mxu0 0.0
    %568 = vmatpush1.msra.mxu0 0.0
    %569 = vmatprep.subr.mxu0 0.0
    %570 = vmatpush1.msra.mxu0 0.0
    %571 = vmatprep.subr.mxu0 0.0
    %572 = vmatpush1.msra.mxu0 0.0
    %573 = vmatprep.subr.mxu0 0.0
    %574 = vmatpush1.msra.mxu0 0.0
    %575 = vmatprep.subr.mxu0 0.0
    %576 = vmatpush1.msra.mxu0 0.0
    %577 = vmatprep.subr.mxu0 0.0
    %578 = vmatpush1.msra.mxu0 0.0
    %579 = vmatprep.subr.mxu0 0.0
    %580 = vmatpush1.msra.mxu0 0.0
    %581 = vmatprep.subr.mxu0 0.0
    %582 = vmatpush1.msra.mxu0 0.0
    %583 = vmatprep.subr.mxu0 0.0
    %584 = vmatpush1.msra.mxu0 0.0
    %585 = vmatprep.subr.mxu0 0.0
    %586 = vmatpush1.msra.mxu0 0.0
    %587 = vmatprep.subr.mxu0 0.0
    %588 = vmatpush1.msra.mxu0 0.0
    %589 = vmatprep.subr.mxu0 0.0
    %590 = vmatpush1.msra.mxu0 0.0
    %591 = vmatprep.subr.mxu0 0.0
    %592 = vmatpush1.msra.mxu0 0.0
    %593 = vmatprep.subr.mxu0 0.0
    %594 = vmatpush1.msra.mxu0 0.0
    %595 = vmatprep.subr.mxu0 0.0
    %596 = vmatpush1.msra.mxu0 0.0
    %597 = vmatprep.subr.mxu0 0.0
    %598 = vmatpush1.msra.mxu0 0.0
    %599 = vmatprep.subr.mxu0 0.0
    %600 = vmatpush1.msra.mxu0 0.0
    %601 = vmatprep.mubr.f32.mxu0 0.0
    %602 = vmatmul.mubr.f32.gmra.mrb[0].mxu0 %v535
    %v603 = vpop.f32.mrb[0].mxu0
    %v604 = vadd.f32 0.0, %v603
    %v605 = vpop.f32.mrb[0].mxu0
    %606 = vdwg.mxu0
    %v607 = vadd.f32 %v533, %v604
    %v608 = vtanh.pop %v607
    %v610 = vsel %vm34, %v608, 0
    %612 = vmatprep.subr.mxu0 0.0
    %613 = vmatpush1.msra.mxu0 %v28
    %614 = vmatprep.subr.mxu0 0.0
    %615 = vmatpush1.msra.mxu0 %v29
    %616 = vmatprep.subr.mxu0 0.0
    %617 = vmatpush1.msra.mxu0 %v30
    %618 = vmatprep.subr.mxu0 0.0
    %619 = vmatpush1.msra.mxu0 %v31
    %620 = vmatprep.subr.mxu0 0.0
    %621 = vmatpush1.msra.mxu0 0.0
    %622 = vmatprep.subr.mxu0 0.0
    %623 = vmatpush1.msra.mxu0 0.0
    %624 = vmatprep.subr.mxu0 0.0
    %625 = vmatpush1.msra.mxu0 0.0
    %626 = vmatprep.subr.mxu0 0.0
    %627 = vmatpush1.msra.mxu0 0.0
    %628 = vmatprep.subr.mxu0 0.0
    %629 = vmatpush1.msra.mxu0 0.0
    %630 = vmatprep.subr.mxu0 0.0
    %631 = vmatpush1.msra.mxu0 0.0
    %632 = vmatprep.subr.mxu0 0.0
    %633 = vmatpush1.msra.mxu0 0.0
    %634 = vmatprep.subr.mxu0 0.0
    %635 = vmatpush1.msra.mxu0 0.0
    %636 = vmatprep.subr.mxu0 0.0
    %637 = vmatpush1.msra.mxu0 0.0
    %638 = vmatprep.subr.mxu0 0.0
    %639 = vmatpush1.msra.mxu0 0.0
    %640 = vmatprep.subr.mxu0 0.0
    %641 = vmatpush1.msra.mxu0 0.0
    %642 = vmatprep.subr.mxu0 0.0
    %643 = vmatpush1.msra.mxu0 0.0
    %644 = vmatprep.subr.mxu0 0.0
    %645 = vmatpush1.msra.mxu0 0.0
    %646 = vmatprep.subr.mxu0 0.0
    %647 = vmatpush1.msra.mxu0 0.0
    %648 = vmatprep.subr.mxu0 0.0
    %649 = vmatpush1.msra.mxu0 0.0
    %650 = vmatprep.subr.mxu0 0.0
    %651 = vmatpush1.msra.mxu0 0.0
    %652 = vmatprep.subr.mxu0 0.0
    %653 = vmatpush1.msra.mxu0 0.0
    %654 = vmatprep.subr.mxu0 0.0
    %655 = vmatpush1.msra.mxu0 0.0
    %656 = vmatprep.subr.mxu0 0.0
    %657 = vmatpush1.msra.mxu0 0.0
    %658 = vmatprep.subr.mxu0 0.0
    %659 = vmatpush1.msra.mxu0 0.0
    %660 = vmatprep.subr.mxu0 0.0
    %661 = vmatpush1.msra.mxu0 0.0
    %662 = vmatprep.subr.mxu0 0.0
    %663 = vmatpush1.msra.mxu0 0.0
    %664 = vmatprep.subr.mxu0 0.0
    %665 = vmatpush1.msra.mxu0 0.0
    %666 = vmatprep.subr.mxu0 0.0
    %667 = vmatpush1.msra.mxu0 0.0
    %668 = vmatprep.subr.mxu0 0.0
    %669 = vmatpush1.msra.mxu0 0.0
    %670 = vmatprep.subr.mxu0 0.0
    %671 = vmatpush1.msra.mxu0 0.0
    %672 = vmatprep.subr.mxu0 0.0
    %673 = vmatpush1.msra.mxu0 0.0
    %674 = vmatprep.subr.mxu0 0.0
    %675 = vmatpush1.msra.mxu0 0.0
    %676 = vmatprep.mubr.f32.mxu0 0.0
    %677 = vmatmul.mubr.f32.gmra.mrb[0].mxu0 %v610
    %v678 = vpop.f32.mrb[0].mxu0
    %v679 = vadd.f32 %v32, %v678
    %v680 = vpop.f32.mrb[0].mxu0
    %681 = vdwg.mxu0
    %v682 = vmul.f32 %v679, 1.442695
    %v683 = vpow.pop %v682
    %v684 = vsel %vm185, %v683, 0.0
    %685 = vadd.xlane.f32.xlu0 %v684
    %v686 = vpop.xlane.xlu0 %685
    %v687 = vrcp.pop %v686
    %v688 = vmul.f32 %v686, %v687
    %v689 = vsub.f32 2.0, %v688
    %v690 = vmul.f32 %v687, %v689
    %v691 = vmul.f32 %v683, %v690
    %v692 = vld [vmem:[%s4 + $0x3] sm:$0x1]
    %v693 = vmul.f32 %v691, %v692
    %695 = vrot.lane.b32.xlu0 %v679, 96
    %v696 = vpop.permute.xlu0 %695
    %v698 = vadd.f32 %v693, %v696
    %v699 = vld [vmem:[%s0 + $0x4] sm:$0x1]
    %v701 = vsel %vm34, %v698, 0
    %703 = vmatprep.subr.mxu0 0.0
    %704 = vmatpush1.msra.mxu0 %v24
    %705 = vmatprep.subr.mxu0 0.0
    %706 = vmatpush1.msra.mxu0 %v25
    %707 = vmatprep.subr.mxu0 0.0
    %708 = vmatpush1.msra.mxu0 %v26
    %709 = vmatprep.subr.mxu0 0.0
    %710 = vmatpush1.msra.mxu0 %v27
    %711 = vmatprep.subr.mxu0 0.0
    %712 = vmatpush1.msra.mxu0 0.0
    %713 = vmatprep.subr.mxu0 0.0
    %714 = vmatpush1.msra.mxu0 0.0
    %715 = vmatprep.subr.mxu0 0.0
    %716 = vmatpush1.msra.mxu0 0.0
    %717 = vmatprep.subr.mxu0 0.0
    %718 = vmatpush1.msra.mxu0 0.0
    %719 = vmatprep.subr.mxu0 0.0
    %720 = vmatpush1.msra.mxu0 0.0
    %721 = vmatprep.subr.mxu0 0.0
    %722 = vmatpush1.msra.mxu0 0.0
    %723 = vmatprep.subr.mxu0 0.0
    %724 = vmatpush1.msra.mxu0 0.0
    %725 = vmatprep.subr.mxu0 0.0
    %726 = vmatpush1.msra.mxu0 0.0
    %727 = vmatprep.subr.mxu0 0.0
    %728 = vmatpush1.msra.mxu0 0.0
    %729 = vmatprep.subr.mxu0 0.0
    %730 = vmatpush1.msra.mxu0 0.0
    %731 = vmatprep.subr.mxu0 0.0
    %732 = vmatpush1.msra.mxu0 0.0
    %733 = vmatprep.subr.mxu0 0.0
    %734 = vmatpush1.msra.mxu0 0.0
    %735 = vmatprep.subr.mxu0 0.0
    %736 = vmatpush1.msra.mxu0 0.0
    %737 = vmatprep.subr.mxu0 0.0
    %738 = vmatpush1.msra.mxu0 0.0
    %739 = vmatprep.subr.mxu0 0.0
    %740 = vmatpush1.msra.mxu0 0.0
    %741 = vmatprep.subr.mxu0 0.0
    %742 = vmatpush1.msra.mxu0 0.0
    %743 = vmatprep.subr.mxu0 0.0
    %744 = vmatpush1.msra.mxu0 0.0
    %745 = vmatprep.subr.mxu0 0.0
    %746 = vmatpush1.msra.mxu0 0.0
    %747 = vmatprep.subr.mxu0 0.0
    %748 = vmatpush1.msra.mxu0 0.0
    %749 = vmatprep.subr.mxu0 0.0
    %750 = vmatpush1.msra.mxu0 0.0
    %751 = vmatprep.subr.mxu0 0.0
    %752 = vmatpush1.msra.mxu0 0.0
    %753 = vmatprep.subr.mxu0 0.0
    %754 = vmatpush1.msra.mxu0 0.0
    %755 = vmatprep.subr.mxu0 0.0
    %756 = vmatpush1.msra.mxu0 0.0
    %757 = vmatprep.subr.mxu0 0.0
    %758 = vmatpush1.msra.mxu0 0.0
    %759 = vmatprep.subr.mxu0 0.0
    %760 = vmatpush1.msra.mxu0 0.0
    %761 = vmatprep.subr.mxu0 0.0
    %762 = vmatpush1.msra.mxu0 0.0
    %763 = vmatprep.subr.mxu0 0.0
    %764 = vmatpush1.msra.mxu0 0.0
    %765 = vmatprep.subr.mxu0 0.0
    %766 = vmatpush1.msra.mxu0 0.0
    %767 = vmatprep.mubr.f32.mxu0 0.0
    %768 = vmatmul.mubr.f32.gmra.mrb[0].mxu0 %v701
    %v769 = vpop.f32.mrb[0].mxu0
    %v770 = vadd.f32 0.0, %v769
    %v771 = vpop.f32.mrb[0].mxu0
    %772 = vdwg.mxu0
    %v773 = vadd.f32 %v699, %v770
    %v774 = vtanh.pop %v773
    %v776 = vsel %vm34, %v774, 0
    %778 = vmatprep.subr.mxu0 0.0
    %779 = vmatpush1.msra.mxu0 %v28
    %780 = vmatprep.subr.mxu0 0.0
    %781 = vmatpush1.msra.mxu0 %v29
    %782 = vmatprep.subr.mxu0 0.0
    %783 = vmatpush1.msra.mxu0 %v30
    %784 = vmatprep.subr.mxu0 0.0
    %785 = vmatpush1.msra.mxu0 %v31
    %786 = vmatprep.subr.mxu0 0.0
    %787 = vmatpush1.msra.mxu0 0.0
    %788 = vmatprep.subr.mxu0 0.0
    %789 = vmatpush1.msra.mxu0 0.0
    %790 = vmatprep.subr.mxu0 0.0
    %791 = vmatpush1.msra.mxu0 0.0
    %792 = vmatprep.subr.mxu0 0.0
    %793 = vmatpush1.msra.mxu0 0.0
    %794 = vmatprep.subr.mxu0 0.0
    %795 = vmatpush1.msra.mxu0 0.0
    %796 = vmatprep.subr.mxu0 0.0
    %797 = vmatpush1.msra.mxu0 0.0
    %798 = vmatprep.subr.mxu0 0.0
    %799 = vmatpush1.msra.mxu0 0.0
    %800 = vmatprep.subr.mxu0 0.0
    %801 = vmatpush1.msra.mxu0 0.0
    %802 = vmatprep.subr.mxu0 0.0
    %803 = vmatpush1.msra.mxu0 0.0
    %804 = vmatprep.subr.mxu0 0.0
    %805 = vmatpush1.msra.mxu0 0.0
    %806 = vmatprep.subr.mxu0 0.0
    %807 = vmatpush1.msra.mxu0 0.0
    %808 = vmatprep.subr.mxu0 0.0
    %809 = vmatpush1.msra.mxu0 0.0
    %810 = vmatprep.subr.mxu0 0.0
    %811 = vmatpush1.msra.mxu0 0.0
    %812 = vmatprep.subr.mxu0 0.0
    %813 = vmatpush1.msra.mxu0 0.0
    %814 = vmatprep.subr.mxu0 0.0
    %815 = vmatpush1.msra.mxu0 0.0
    %816 = vmatprep.subr.mxu0 0.0
    %817 = vmatpush1.msra.mxu0 0.0
    %818 = vmatprep.subr.mxu0 0.0
    %819 = vmatpush1.msra.mxu0 0.0
    %820 = vmatprep.subr.mxu0 0.0
    %821 = vmatpush1.msra.mxu0 0.0
    %822 = vmatprep.subr.mxu0 0.0
    %823 = vmatpush1.msra.mxu0 0.0
    %824 = vmatprep.subr.mxu0 0.0
    %825 = vmatpush1.msra.mxu0 0.0
    %826 = vmatprep.subr.mxu0 0.0
    %827 = vmatpush1.msra.mxu0 0.0
    %828 = vmatprep.subr.mxu0 0.0
    %829 = vmatpush1.msra.mxu0 0.0
    %830 = vmatprep.subr.mxu0 0.0
    %831 = vmatpush1.msra.mxu0 0.0
    %832 = vmatprep.subr.mxu0 0.0
    %833 = vmatpush1.msra.mxu0 0.0
    %834 = vmatprep.subr.mxu0 0.0
    %835 = vmatpush1.msra.mxu0 0.0
    %836 = vmatprep.subr.mxu0 0.0
    %837 = vmatpush1.msra.mxu0 0.0
    %838 = vmatprep.subr.mxu0 0.0
    %839 = vmatpush1.msra.mxu0 0.0
    %840 = vmatprep.subr.mxu0 0.0
    %841 = vmatpush1.msra.mxu0 0.0
    %842 = vmatprep.mubr.f32.mxu0 0.0
    %843 = vmatmul.mubr.f32.gmra.mrb[0].mxu0 %v776
    %v844 = vpop.f32.mrb[0].mxu0
    %v845 = vadd.f32 %v32, %v844
    %v846 = vpop.f32.mrb[0].mxu0
    %847 = vdwg.mxu0
    %v848 = vmul.f32 %v845, 1.442695
    %v849 = vpow.pop %v848
    %v850 = vsel %vm185, %v849, 0.0
    %851 = vadd.xlane.f32.xlu0 %v850
    %v852 = vpop.xlane.xlu0 %851
    %v853 = vrcp.pop %v852
    %v854 = vmul.f32 %v852, %v853
    %v855 = vsub.f32 2.0, %v854
    %v856 = vmul.f32 %v853, %v855
    %v857 = vmul.f32 %v849, %v856
    %v858 = vld [vmem:[%s4 + $0x4] sm:$0x1]
    %v859 = vmul.f32 %v857, %v858
    %861 = vrot.lane.b32.xlu0 %v845, 96
    %v862 = vpop.permute.xlu0 %861
    %v864 = vadd.f32 %v859, %v862
    %v865 = vld [vmem:[%s0 + $0x5] sm:$0x1]
    %v867 = vsel %vm34, %v864, 0
    %869 = vmatprep.subr.mxu0 0.0
    %870 = vmatpush1.msra.mxu0 %v24
    %871 = vmatprep.subr.mxu0 0.0
    %872 = vmatpush1.msra.mxu0 %v25
    %873 = vmatprep.subr.mxu0 0.0
    %874 = vmatpush1.msra.mxu0 %v26
    %875 = vmatprep.subr.mxu0 0.0
    %876 = vmatpush1.msra.mxu0 %v27
    %877 = vmatprep.subr.mxu0 0.0
    %878 = vmatpush1.msra.mxu0 0.0
    %879 = vmatprep.subr.mxu0 0.0
    %880 = vmatpush1.msra.mxu0 0.0
    %881 = vmatprep.subr.mxu0 0.0
    %882 = vmatpush1.msra.mxu0 0.0
    %883 = vmatprep.subr.mxu0 0.0
    %884 = vmatpush1.msra.mxu0 0.0
    %885 = vmatprep.subr.mxu0 0.0
    %886 = vmatpush1.msra.mxu0 0.0
    %887 = vmatprep.subr.mxu0 0.0
    %888 = vmatpush1.msra.mxu0 0.0
    %889 = vmatprep.subr.mxu0 0.0
    %890 = vmatpush1.msra.mxu0 0.0
    %891 = vmatprep.subr.mxu0 0.0
    %892 = vmatpush1.msra.mxu0 0.0
    %893 = vmatprep.subr.mxu0 0.0
    %894 = vmatpush1.msra.mxu0 0.0
    %895 = vmatprep.subr.mxu0 0.0
    %896 = vmatpush1.msra.mxu0 0.0
    %897 = vmatprep.subr.mxu0 0.0
    %898 = vmatpush1.msra.mxu0 0.0
    %899 = vmatprep.subr.mxu0 0.0
    %900 = vmatpush1.msra.mxu0 0.0
    %901 = vmatprep.subr.mxu0 0.0
    %902 = vmatpush1.msra.mxu0 0.0
    %903 = vmatprep.subr.mxu0 0.0
    %904 = vmatpush1.msra.mxu0 0.0
    %905 = vmatprep.subr.mxu0 0.0
    %906 = vmatpush1.msra.mxu0 0.0
    %907 = vmatprep.subr.mxu0 0.0
    %908 = vmatpush1.msra.mxu0 0.0
    %909 = vmatprep.subr.mxu0 0.0
    %910 = vmatpush1.msra.mxu0 0.0
    %911 = vmatprep.subr.mxu0 0.0
    %912 = vmatpush1.msra.mxu0 0.0
    %913 = vmatprep.subr.mxu0 0.0
    %914 = vmatpush1.msra.mxu0 0.0
    %915 = vmatprep.subr.mxu0 0.0
    %916 = vmatpush1.msra.mxu0 0.0
    %917 = vmatprep.subr.mxu0 0.0
    %918 = vmatpush1.msra.mxu0 0.0
    %919 = vmatprep.subr.mxu0 0.0
    %920 = vmatpush1.msra.mxu0 0.0
    %921 = vmatprep.subr.mxu0 0.0
    %922 = vmatpush1.msra.mxu0 0.0
    %923 = vmatprep.subr.mxu0 0.0
    %924 = vmatpush1.msra.mxu0 0.0
    %925 = vmatprep.subr.mxu0 0.0
    %926 = vmatpush1.msra.mxu0 0.0
    %927 = vmatprep.subr.mxu0 0.0
    %928 = vmatpush1.msra.mxu0 0.0
    %929 = vmatprep.subr.mxu0 0.0
    %930 = vmatpush1.msra.mxu0 0.0
    %931 = vmatprep.subr.mxu0 0.0
    %932 = vmatpush1.msra.mxu0 0.0
    %933 = vmatprep.mubr.f32.mxu0 0.0
    %934 = vmatmul.mubr.f32.gmra.mrb[0].mxu0 %v867
    %v935 = vpop.f32.mrb[0].mxu0
    %v936 = vadd.f32 0.0, %v935
    %v937 = vpop.f32.mrb[0].mxu0
    %938 = vdwg.mxu0
    %v939 = vadd.f32 %v865, %v936
    %v940 = vtanh.pop %v939
    %v942 = vsel %vm34, %v940, 0
    %944 = vmatprep.subr.mxu0 0.0
    %945 = vmatpush1.msra.mxu0 %v28
    %946 = vmatprep.subr.mxu0 0.0
    %947 = vmatpush1.msra.mxu0 %v29
    %948 = vmatprep.subr.mxu0 0.0
    %949 = vmatpush1.msra.mxu0 %v30
    %950 = vmatprep.subr.mxu0 0.0
    %951 = vmatpush1.msra.mxu0 %v31
    %952 = vmatprep.subr.mxu0 0.0
    %953 = vmatpush1.msra.mxu0 0.0
    %954 = vmatprep.subr.mxu0 0.0
    %955 = vmatpush1.msra.mxu0 0.0
    %956 = vmatprep.subr.mxu0 0.0
    %957 = vmatpush1.msra.mxu0 0.0
    %958 = vmatprep.subr.mxu0 0.0
    %959 = vmatpush1.msra.mxu0 0.0
    %960 = vmatprep.subr.mxu0 0.0
    %961 = vmatpush1.msra.mxu0 0.0
    %962 = vmatprep.subr.mxu0 0.0
    %963 = vmatpush1.msra.mxu0 0.0
    %964 = vmatprep.subr.mxu0 0.0
    %965 = vmatpush1.msra.mxu0 0.0
    %966 = vmatprep.subr.mxu0 0.0
    %967 = vmatpush1.msra.mxu0 0.0
    %968 = vmatprep.subr.mxu0 0.0
    %969 = vmatpush1.msra.mxu0 0.0
    %970 = vmatprep.subr.mxu0 0.0
    %971 = vmatpush1.msra.mxu0 0.0
    %972 = vmatprep.subr.mxu0 0.0
    %973 = vmatpush1.msra.mxu0 0.0
    %974 = vmatprep.subr.mxu0 0.0
    %975 = vmatpush1.msra.mxu0 0.0
    %976 = vmatprep.subr.mxu0 0.0
    %977 = vmatpush1.msra.mxu0 0.0
    %978 = vmatprep.subr.mxu0 0.0
    %979 = vmatpush1.msra.mxu0 0.0
    %980 = vmatprep.subr.mxu0 0.0
    %981 = vmatpush1.msra.mxu0 0.0
    %982 = vmatprep.subr.mxu0 0.0
    %983 = vmatpush1.msra.mxu0 0.0
    %984 = vmatprep.subr.mxu0 0.0
    %985 = vmatpush1.msra.mxu0 0.0
    %986 = vmatprep.subr.mxu0 0.0
    %987 = vmatpush1.msra.mxu0 0.0
    %988 = vmatprep.subr.mxu0 0.0
    %989 = vmatpush1.msra.mxu0 0.0
    %990 = vmatprep.subr.mxu0 0.0
    %991 = vmatpush1.msra.mxu0 0.0
    %992 = vmatprep.subr.mxu0 0.0
    %993 = vmatpush1.msra.mxu0 0.0
    %994 = vmatprep.subr.mxu0 0.0
    %995 = vmatpush1.msra.mxu0 0.0
    %996 = vmatprep.subr.mxu0 0.0
    %997 = vmatpush1.msra.mxu0 0.0
    %998 = vmatprep.subr.mxu0 0.0
    %999 = vmatpush1.msra.mxu0 0.0
    %1000 = vmatprep.subr.mxu0 0.0
    %1001 = vmatpush1.msra.mxu0 0.0
    %1002 = vmatprep.subr.mxu0 0.0
    %1003 = vmatpush1.msra.mxu0 0.0
    %1004 = vmatprep.subr.mxu0 0.0
    %1005 = vmatpush1.msra.mxu0 0.0
    %1006 = vmatprep.subr.mxu0 0.0
    %1007 = vmatpush1.msra.mxu0 0.0
    %1008 = vmatprep.mubr.f32.mxu0 0.0
    %1009 = vmatmul.mubr.f32.gmra.mrb[0].mxu0 %v942
    %v1010 = vpop.f32.mrb[0].mxu0
    %v1011 = vadd.f32 %v32, %v1010
    %v1012 = vpop.f32.mrb[0].mxu0
    %1013 = vdwg.mxu0
    %v1014 = vmul.f32 %v1011, 1.442695
    %v1015 = vpow.pop %v1014
    %v1016 = vsel %vm185, %v1015, 0.0
    %1017 = vadd.xlane.f32.xlu0 %v1016
    %v1018 = vpop.xlane.xlu0 %1017
    %v1019 = vrcp.pop %v1018
    %v1020 = vmul.f32 %v1018, %v1019
    %v1021 = vsub.f32 2.0, %v1020
    %v1022 = vmul.f32 %v1019, %v1021
    %v1023 = vmul.f32 %v1015, %v1022
    %v1024 = vld [vmem:[%s4 + $0x5] sm:$0x1]
    %v1025 = vmul.f32 %v1023, %v1024
    %1027 = vrot.lane.b32.xlu0 %v1011, 96
    %v1028 = vpop.permute.xlu0 %1027
    %v1030 = vadd.f32 %v1025, %v1028
    %v1031 = vld [vmem:[%s0 + $0x6] sm:$0x1]
    %v1033 = vsel %vm34, %v1030, 0
    %1035 = vmatprep.subr.mxu0 0.0
    %1036 = vmatpush1.msra.mxu0 %v24
    %1037 = vmatprep.subr.mxu0 0.0
    %1038 = vmatpush1.msra.mxu0 %v25
    %1039 = vmatprep.subr.mxu0 0.0
    %1040 = vmatpush1.msra.mxu0 %v26
    %1041 = vmatprep.subr.mxu0 0.0
    %1042 = vmatpush1.msra.mxu0 %v27
    %1043 = vmatprep.subr.mxu0 0.0
    %1044 = vmatpush1.msra.mxu0 0.0
    %1045 = vmatprep.subr.mxu0 0.0
    %1046 = vmatpush1.msra.mxu0 0.0
    %1047 = vmatprep.subr.mxu0 0.0
    %1048 = vmatpush1.msra.mxu0 0.0
    %1049 = vmatprep.subr.mxu0 0.0
    %1050 = vmatpush1.msra.mxu0 0.0
    %1051 = vmatprep.subr.mxu0 0.0
    %1052 = vmatpush1.msra.mxu0 0.0
    %1053 = vmatprep.subr.mxu0 0.0
    %1054 = vmatpush1.msra.mxu0 0.0
    %1055 = vmatprep.subr.mxu0 0.0
    %1056 = vmatpush1.msra.mxu0 0.0
    %1057 = vmatprep.subr.mxu0 0.0
    %1058 = vmatpush1.msra.mxu0 0.0
    %1059 = vmatprep.subr.mxu0 0.0
    %1060 = vmatpush1.msra.mxu0 0.0
    %1061 = vmatprep.subr.mxu0 0.0
    %1062 = vmatpush1.msra.mxu0 0.0
    %1063 = vmatprep.subr.mxu0 0.0
    %1064 = vmatpush1.msra.mxu0 0.0
    %1065 = vmatprep.subr.mxu0 0.0
    %1066 = vmatpush1.msra.mxu0 0.0
    %1067 = vmatprep.subr.mxu0 0.0
    %1068 = vmatpush1.msra.mxu0 0.0
    %1069 = vmatprep.subr.mxu0 0.0
    %1070 = vmatpush1.msra.mxu0 0.0
    %1071 = vmatprep.subr.mxu0 0.0
    %1072 = vmatpush1.msra.mxu0 0.0
    %1073 = vmatprep.subr.mxu0 0.0
    %1074 = vmatpush1.msra.mxu0 0.0
    %1075 = vmatprep.subr.mxu0 0.0
    %1076 = vmatpush1.msra.mxu0 0.0
    %1077 = vmatprep.subr.mxu0 0.0
    %1078 = vmatpush1.msra.mxu0 0.0
    %1079 = vmatprep.subr.mxu0 0.0
    %1080 = vmatpush1.msra.mxu0 0.0
    %1081 = vmatprep.subr.mxu0 0.0
    %1082 = vmatpush1.msra.mxu0 0.0
    %1083 = vmatprep.subr.mxu0 0.0
    %1084 = vmatpush1.msra.mxu0 0.0
    %1085 = vmatprep.subr.mxu0 0.0
    %1086 = vmatpush1.msra.mxu0 0.0
    %1087 = vmatprep.subr.mxu0 0.0
    %1088 = vmatpush1.msra.mxu0 0.0
    %1089 = vmatprep.subr.mxu0 0.0
    %1090 = vmatpush1.msra.mxu0 0.0
    %1091 = vmatprep.subr.mxu0 0.0
    %1092 = vmatpush1.msra.mxu0 0.0
    %1093 = vmatprep.subr.mxu0 0.0
    %1094 = vmatpush1.msra.mxu0 0.0
    %1095 = vmatprep.subr.mxu0 0.0
    %1096 = vmatpush1.msra.mxu0 0.0
    %1097 = vmatprep.subr.mxu0 0.0
    %1098 = vmatpush1.msra.mxu0 0.0
    %1099 = vmatprep.mubr.f32.mxu0 0.0
    %1100 = vmatmul.mubr.f32.gmra.mrb[0].mxu0 %v1033
    %v1101 = vpop.f32.mrb[0].mxu0
    %v1102 = vadd.f32 0.0, %v1101
    %v1103 = vpop.f32.mrb[0].mxu0
    %1104 = vdwg.mxu0
    %v1105 = vadd.f32 %v1031, %v1102
    %v1106 = vtanh.pop %v1105
    %v1108 = vsel %vm34, %v1106, 0
    %1110 = vmatprep.subr.mxu0 0.0
    %1111 = vmatpush1.msra.mxu0 %v28
    %1112 = vmatprep.subr.mxu0 0.0
    %1113 = vmatpush1.msra.mxu0 %v29
    %1114 = vmatprep.subr.mxu0 0.0
    %1115 = vmatpush1.msra.mxu0 %v30
    %1116 = vmatprep.subr.mxu0 0.0
    %1117 = vmatpush1.msra.mxu0 %v31
    %1118 = vmatprep.subr.mxu0 0.0
    %1119 = vmatpush1.msra.mxu0 0.0
    %1120 = vmatprep.subr.mxu0 0.0
    %1121 = vmatpush1.msra.mxu0 0.0
    %1122 = vmatprep.subr.mxu0 0.0
    %1123 = vmatpush1.msra.mxu0 0.0
    %1124 = vmatprep.subr.mxu0 0.0
    %1125 = vmatpush1.msra.mxu0 0.0
    %1126 = vmatprep.subr.mxu0 0.0
    %1127 = vmatpush1.msra.mxu0 0.0
    %1128 = vmatprep.subr.mxu0 0.0
    %1129 = vmatpush1.msra.mxu0 0.0
    %1130 = vmatprep.subr.mxu0 0.0
    %1131 = vmatpush1.msra.mxu0 0.0
    %1132 = vmatprep.subr.mxu0 0.0
    %1133 = vmatpush1.msra.mxu0 0.0
    %1134 = vmatprep.subr.mxu0 0.0
    %1135 = vmatpush1.msra.mxu0 0.0
    %1136 = vmatprep.subr.mxu0 0.0
    %1137 = vmatpush1.msra.mxu0 0.0
    %1138 = vmatprep.subr.mxu0 0.0
    %1139 = vmatpush1.msra.mxu0 0.0
    %1140 = vmatprep.subr.mxu0 0.0
    %1141 = vmatpush1.msra.mxu0 0.0
    %1142 = vmatprep.subr.mxu0 0.0
    %1143 = vmatpush1.msra.mxu0 0.0
    %1144 = vmatprep.subr.mxu0 0.0
    %1145 = vmatpush1.msra.mxu0 0.0
    %1146 = vmatprep.subr.mxu0 0.0
    %1147 = vmatpush1.msra.mxu0 0.0
    %1148 = vmatprep.subr.mxu0 0.0
    %1149 = vmatpush1.msra.mxu0 0.0
    %1150 = vmatprep.subr.mxu0 0.0
    %1151 = vmatpush1.msra.mxu0 0.0
    %1152 = vmatprep.subr.mxu0 0.0
    %1153 = vmatpush1.msra.mxu0 0.0
    %1154 = vmatprep.subr.mxu0 0.0
    %1155 = vmatpush1.msra.mxu0 0.0
    %1156 = vmatprep.subr.mxu0 0.0
    %1157 = vmatpush1.msra.mxu0 0.0
    %1158 = vmatprep.subr.mxu0 0.0
    %1159 = vmatpush1.msra.mxu0 0.0
    %1160 = vmatprep.subr.mxu0 0.0
    %1161 = vmatpush1.msra.mxu0 0.0
    %1162 = vmatprep.subr.mxu0 0.0
    %1163 = vmatpush1.msra.mxu0 0.0
    %1164 = vmatprep.subr.mxu0 0.0
    %1165 = vmatpush1.msra.mxu0 0.0
    %1166 = vmatprep.subr.mxu0 0.0
    %1167 = vmatpush1.msra.mxu0 0.0
    %1168 = vmatprep.subr.mxu0 0.0
    %1169 = vmatpush1.msra.mxu0 0.0
    %1170 = vmatprep.subr.mxu0 0.0
    %1171 = vmatpush1.msra.mxu0 0.0
    %1172 = vmatprep.subr.mxu0 0.0
    %1173 = vmatpush1.msra.mxu0 0.0
    %1174 = vmatprep.mubr.f32.mxu0 0.0
    %1175 = vmatmul.mubr.f32.gmra.mrb[0].mxu0 %v1108
    %v1176 = vpop.f32.mrb[0].mxu0
    %v1177 = vadd.f32 %v32, %v1176
    %v1178 = vpop.f32.mrb[0].mxu0
    %1179 = vdwg.mxu0
    %v1180 = vmul.f32 %v1177, 1.442695
    %v1181 = vpow.pop %v1180
    %v1182 = vsel %vm185, %v1181, 0.0
    %1183 = vadd.xlane.f32.xlu0 %v1182
    %v1184 = vpop.xlane.xlu0 %1183
    %v1185 = vrcp.pop %v1184
    %v1186 = vmul.f32 %v1184, %v1185
    %v1187 = vsub.f32 2.0, %v1186
    %v1188 = vmul.f32 %v1185, %v1187
    %v1189 = vmul.f32 %v1181, %v1188
    %v1190 = vld [vmem:[%s4 + $0x6] sm:$0x1]
    %v1191 = vmul.f32 %v1189, %v1190
    %1193 = vrot.lane.b32.xlu0 %v1177, 96
    %v1194 = vpop.permute.xlu0 %1193
    %v1196 = vadd.f32 %v1191, %v1194
    %v1197 = vld [vmem:[%s0 + $0x7] sm:$0x1]
    %v1199 = vsel %vm34, %v1196, 0
    %1201 = vmatprep.subr.mxu0 0.0
    %1202 = vmatpush1.msra.mxu0 %v24
    %1203 = vmatprep.subr.mxu0 0.0
    %1204 = vmatpush1.msra.mxu0 %v25
    %1205 = vmatprep.subr.mxu0 0.0
    %1206 = vmatpush1.msra.mxu0 %v26
    %1207 = vmatprep.subr.mxu0 0.0
    %1208 = vmatpush1.msra.mxu0 %v27
    %1209 = vmatprep.subr.mxu0 0.0
    %1210 = vmatpush1.msra.mxu0 0.0
    %1211 = vmatprep.subr.mxu0 0.0
    %1212 = vmatpush1.msra.mxu0 0.0
    %1213 = vmatprep.subr.mxu0 0.0
    %1214 = vmatpush1.msra.mxu0 0.0
    %1215 = vmatprep.subr.mxu0 0.0
    %1216 = vmatpush1.msra.mxu0 0.0
    %1217 = vmatprep.subr.mxu0 0.0
    %1218 = vmatpush1.msra.mxu0 0.0
    %1219 = vmatprep.subr.mxu0 0.0
    %1220 = vmatpush1.msra.mxu0 0.0
    %1221 = vmatprep.subr.mxu0 0.0
    %1222 = vmatpush1.msra.mxu0 0.0
    %1223 = vmatprep.subr.mxu0 0.0
    %1224 = vmatpush1.msra.mxu0 0.0
    %1225 = vmatprep.subr.mxu0 0.0
    %1226 = vmatpush1.msra.mxu0 0.0
    %1227 = vmatprep.subr.mxu0 0.0
    %1228 = vmatpush1.msra.mxu0 0.0
    %1229 = vmatprep.subr.mxu0 0.0
    %1230 = vmatpush1.msra.mxu0 0.0
    %1231 = vmatprep.subr.mxu0 0.0
    %1232 = vmatpush1.msra.mxu0 0.0
    %1233 = vmatprep.subr.mxu0 0.0
    %1234 = vmatpush1.msra.mxu0 0.0
    %1235 = vmatprep.subr.mxu0 0.0
    %1236 = vmatpush1.msra.mxu0 0.0
    %1237 = vmatprep.subr.mxu0 0.0
    %1238 = vmatpush1.msra.mxu0 0.0
    %1239 = vmatprep.subr.mxu0 0.0
    %1240 = vmatpush1.msra.mxu0 0.0
    %1241 = vmatprep.subr.mxu0 0.0
    %1242 = vmatpush1.msra.mxu0 0.0
    %1243 = vmatprep.subr.mxu0 0.0
    %1244 = vmatpush1.msra.mxu0 0.0
    %1245 = vmatprep.subr.mxu0 0.0
    %1246 = vmatpush1.msra.mxu0 0.0
    %1247 = vmatprep.subr.mxu0 0.0
    %1248 = vmatpush1.msra.mxu0 0.0
    %1249 = vmatprep.subr.mxu0 0.0
    %1250 = vmatpush1.msra.mxu0 0.0
    %1251 = vmatprep.subr.mxu0 0.0
    %1252 = vmatpush1.msra.mxu0 0.0
    %1253 = vmatprep.subr.mxu0 0.0
    %1254 = vmatpush1.msra.mxu0 0.0
    %1255 = vmatprep.subr.mxu0 0.0
    %1256 = vmatpush1.msra.mxu0 0.0
    %1257 = vmatprep.subr.mxu0 0.0
    %1258 = vmatpush1.msra.mxu0 0.0
    %1259 = vmatprep.subr.mxu0 0.0
    %1260 = vmatpush1.msra.mxu0 0.0
    %1261 = vmatprep.subr.mxu0 0.0
    %1262 = vmatpush1.msra.mxu0 0.0
    %1263 = vmatprep.subr.mxu0 0.0
    %1264 = vmatpush1.msra.mxu0 0.0
    %1265 = vmatprep.mubr.f32.mxu0 0.0
    %1266 = vmatmul.mubr.f32.gmra.mrb[0].mxu0 %v1199
    %v1267 = vpop.f32.mrb[0].mxu0
    %v1268 = vadd.f32 0.0, %v1267
    %v1269 = vpop.f32.mrb[0].mxu0
    %1270 = vdwg.mxu0
    %v1271 = vadd.f32 %v1197, %v1268
    %v1272 = vtanh.pop %v1271
    %v1274 = vsel %vm34, %v1272, 0
    %1276 = vmatprep.subr.mxu0 0.0
    %1277 = vmatpush1.msra.mxu0 %v28
    %1278 = vmatprep.subr.mxu0 0.0
    %1279 = vmatpush1.msra.mxu0 %v29
    %1280 = vmatprep.subr.mxu0 0.0
    %1281 = vmatpush1.msra.mxu0 %v30
    %1282 = vmatprep.subr.mxu0 0.0
    %1283 = vmatpush1.msra.mxu0 %v31
    %1284 = vmatprep.subr.mxu0 0.0
    %1285 = vmatpush1.msra.mxu0 0.0
    %1286 = vmatprep.subr.mxu0 0.0
    %1287 = vmatpush1.msra.mxu0 0.0
    %1288 = vmatprep.subr.mxu0 0.0
    %1289 = vmatpush1.msra.mxu0 0.0
    %1290 = vmatprep.subr.mxu0 0.0
    %1291 = vmatpush1.msra.mxu0 0.0
    %1292 = vmatprep.subr.mxu0 0.0
    %1293 = vmatpush1.msra.mxu0 0.0
    %1294 = vmatprep.subr.mxu0 0.0
    %1295 = vmatpush1.msra.mxu0 0.0
    %1296 = vmatprep.subr.mxu0 0.0
    %1297 = vmatpush1.msra.mxu0 0.0
    %1298 = vmatprep.subr.mxu0 0.0
    %1299 = vmatpush1.msra.mxu0 0.0
    %1300 = vmatprep.subr.mxu0 0.0
    %1301 = vmatpush1.msra.mxu0 0.0
    %1302 = vmatprep.subr.mxu0 0.0
    %1303 = vmatpush1.msra.mxu0 0.0
    %1304 = vmatprep.subr.mxu0 0.0
    %1305 = vmatpush1.msra.mxu0 0.0
    %1306 = vmatprep.subr.mxu0 0.0
    %1307 = vmatpush1.msra.mxu0 0.0
    %1308 = vmatprep.subr.mxu0 0.0
    %1309 = vmatpush1.msra.mxu0 0.0
    %1310 = vmatprep.subr.mxu0 0.0
    %1311 = vmatpush1.msra.mxu0 0.0
    %1312 = vmatprep.subr.mxu0 0.0
    %1313 = vmatpush1.msra.mxu0 0.0
    %1314 = vmatprep.subr.mxu0 0.0
    %1315 = vmatpush1.msra.mxu0 0.0
    %1316 = vmatprep.subr.mxu0 0.0
    %1317 = vmatpush1.msra.mxu0 0.0
    %1318 = vmatprep.subr.mxu0 0.0
    %1319 = vmatpush1.msra.mxu0 0.0
    %1320 = vmatprep.subr.mxu0 0.0
    %1321 = vmatpush1.msra.mxu0 0.0
    %1322 = vmatprep.subr.mxu0 0.0
    %1323 = vmatpush1.msra.mxu0 0.0
    %1324 = vmatprep.subr.mxu0 0.0
    %1325 = vmatpush1.msra.mxu0 0.0
    %1326 = vmatprep.subr.mxu0 0.0
    %1327 = vmatpush1.msra.mxu0 0.0
    %1328 = vmatprep.subr.mxu0 0.0
    %1329 = vmatpush1.msra.mxu0 0.0
    %1330 = vmatprep.subr.mxu0 0.0
    %1331 = vmatpush1.msra.mxu0 0.0
    %1332 = vmatprep.subr.mxu0 0.0
    %1333 = vmatpush1.msra.mxu0 0.0
    %1334 = vmatprep.subr.mxu0 0.0
    %1335 = vmatpush1.msra.mxu0 0.0
    %1336 = vmatprep.subr.mxu0 0.0
    %1337 = vmatpush1.msra.mxu0 0.0
    %1338 = vmatprep.subr.mxu0 0.0
    %1339 = vmatpush1.msra.mxu0 0.0
    %1340 = vmatprep.mubr.f32.mxu0 0.0
    %1341 = vmatmul.mubr.f32.gmra.mrb[0].mxu0 %v1274
    %v1342 = vpop.f32.mrb[0].mxu0
    %v1343 = vadd.f32 %v32, %v1342
    %v1344 = vpop.f32.mrb[0].mxu0
    %1345 = vdwg.mxu0
    %v1346 = vmul.f32 %v1343, 1.442695
    %v1347 = vpow.pop %v1346
    %v1348 = vsel %vm185, %v1347, 0.0
    %1349 = vadd.xlane.f32.xlu0 %v1348
    %v1350 = vpop.xlane.xlu0 %1349
    %v1351 = vrcp.pop %v1350
    %v1352 = vmul.f32 %v1350, %v1351
    %v1353 = vsub.f32 2.0, %v1352
    %v1354 = vmul.f32 %v1351, %v1353
    %v1355 = vmul.f32 %v1347, %v1354
    %v1356 = vld [vmem:[%s4 + $0x7] sm:$0x1]
    %v1357 = vmul.f32 %v1355, %v1356
    %1359 = vrot.lane.b32.xlu0 %v1343, 96
    %v1360 = vpop.permute.xlu0 %1359
    %v1362 = vadd.f32 %v1357, %v1360
    %v1363 = vld [vmem:[%s0 + $0x8] sm:$0x1]
    %v1365 = vsel %vm34, %v1362, 0
    %1367 = vmatprep.subr.mxu0 0.0
    %1368 = vmatpush1.msra.mxu0 %v24
    %1369 = vmatprep.subr.mxu0 0.0
    %1370 = vmatpush1.msra.mxu0 %v25
    %1371 = vmatprep.subr.mxu0 0.0
    %1372 = vmatpush1.msra.mxu0 %v26
    %1373 = vmatprep.subr.mxu0 0.0
    %1374 = vmatpush1.msra.mxu0 %v27
    %1375 = vmatprep.subr.mxu0 0.0
    %1376 = vmatpush1.msra.mxu0 0.0
    %1377 = vmatprep.subr.mxu0 0.0
    %1378 = vmatpush1.msra.mxu0 0.0
    %1379 = vmatprep.subr.mxu0 0.0
    %1380 = vmatpush1.msra.mxu0 0.0
    %1381 = vmatprep.subr.mxu0 0.0
    %1382 = vmatpush1.msra.mxu0 0.0
    %1383 = vmatprep.subr.mxu0 0.0
    %1384 = vmatpush1.msra.mxu0 0.0
    %1385 = vmatprep.subr.mxu0 0.0
    %1386 = vmatpush1.msra.mxu0 0.0
    %1387 = vmatprep.subr.mxu0 0.0
    %1388 = vmatpush1.msra.mxu0 0.0
    %1389 = vmatprep.subr.mxu0 0.0
    %1390 = vmatpush1.msra.mxu0 0.0
    %1391 = vmatprep.subr.mxu0 0.0
    %1392 = vmatpush1.msra.mxu0 0.0
    %1393 = vmatprep.subr.mxu0 0.0
    %1394 = vmatpush1.msra.mxu0 0.0
    %1395 = vmatprep.subr.mxu0 0.0
    %1396 = vmatpush1.msra.mxu0 0.0
    %1397 = vmatprep.subr.mxu0 0.0
    %1398 = vmatpush1.msra.mxu0 0.0
    %1399 = vmatprep.subr.mxu0 0.0
    %1400 = vmatpush1.msra.mxu0 0.0
    %1401 = vmatprep.subr.mxu0 0.0
    %1402 = vmatpush1.msra.mxu0 0.0
    %1403 = vmatprep.subr.mxu0 0.0
    %1404 = vmatpush1.msra.mxu0 0.0
    %1405 = vmatprep.subr.mxu0 0.0
    %1406 = vmatpush1.msra.mxu0 0.0
    %1407 = vmatprep.subr.mxu0 0.0
    %1408 = vmatpush1.msra.mxu0 0.0
    %1409 = vmatprep.subr.mxu0 0.0
    %1410 = vmatpush1.msra.mxu0 0.0
    %1411 = vmatprep.subr.mxu0 0.0
    %1412 = vmatpush1.msra.mxu0 0.0
    %1413 = vmatprep.subr.mxu0 0.0
    %1414 = vmatpush1.msra.mxu0 0.0
    %1415 = vmatprep.subr.mxu0 0.0
    %1416 = vmatpush1.msra.mxu0 0.0
    %1417 = vmatprep.subr.mxu0 0.0
    %1418 = vmatpush1.msra.mxu0 0.0
    %1419 = vmatprep.subr.mxu0 0.0
    %1420 = vmatpush1.msra.mxu0 0.0
    %1421 = vmatprep.subr.mxu0 0.0
    %1422 = vmatpush1.msra.mxu0 0.0
    %1423 = vmatprep.subr.mxu0 0.0
    %1424 = vmatpush1.msra.mxu0 0.0
    %1425 = vmatprep.subr.mxu0 0.0
    %1426 = vmatpush1.msra.mxu0 0.0
    %1427 = vmatprep.subr.mxu0 0.0
    %1428 = vmatpush1.msra.mxu0 0.0
    %1429 = vmatprep.subr.mxu0 0.0
    %1430 = vmatpush1.msra.mxu0 0.0
    %1431 = vmatprep.mubr.f32.mxu0 0.0
    %1432 = vmatmul.mubr.f32.gmra.mrb[0].mxu0 %v1365
    %v1433 = vpop.f32.mrb[0].mxu0
    %v1434 = vadd.f32 0.0, %v1433
    %v1435 = vpop.f32.mrb[0].mxu0
    %1436 = vdwg.mxu0
    %v1437 = vadd.f32 %v1363, %v1434
    %v1438 = vtanh.pop %v1437
    %v1440 = vsel %vm34, %v1438, 0
    %1442 = vmatprep.subr.mxu0 0.0
    %1443 = vmatpush1.msra.mxu0 %v28
    %1444 = vmatprep.subr.mxu0 0.0
    %1445 = vmatpush1.msra.mxu0 %v29
    %1446 = vmatprep.subr.mxu0 0.0
    %1447 = vmatpush1.msra.mxu0 %v30
    %1448 = vmatprep.subr.mxu0 0.0
    %1449 = vmatpush1.msra.mxu0 %v31
    %1450 = vmatprep.subr.mxu0 0.0
    %1451 = vmatpush1.msra.mxu0 0.0
    %1452 = vmatprep.subr.mxu0 0.0
    %1453 = vmatpush1.msra.mxu0 0.0
    %1454 = vmatprep.subr.mxu0 0.0
    %1455 = vmatpush1.msra.mxu0 0.0
    %1456 = vmatprep.subr.mxu0 0.0
    %1457 = vmatpush1.msra.mxu0 0.0
    %1458 = vmatprep.subr.mxu0 0.0
    %1459 = vmatpush1.msra.mxu0 0.0
    %1460 = vmatprep.subr.mxu0 0.0
    %1461 = vmatpush1.msra.mxu0 0.0
    %1462 = vmatprep.subr.mxu0 0.0
    %1463 = vmatpush1.msra.mxu0 0.0
    %1464 = vmatprep.subr.mxu0 0.0
    %1465 = vmatpush1.msra.mxu0 0.0
    %1466 = vmatprep.subr.mxu0 0.0
    %1467 = vmatpush1.msra.mxu0 0.0
    %1468 = vmatprep.subr.mxu0 0.0
    %1469 = vmatpush1.msra.mxu0 0.0
    %1470 = vmatprep.subr.mxu0 0.0
    %1471 = vmatpush1.msra.mxu0 0.0
    %1472 = vmatprep.subr.mxu0 0.0
    %1473 = vmatpush1.msra.mxu0 0.0
    %1474 = vmatprep.subr.mxu0 0.0
    %1475 = vmatpush1.msra.mxu0 0.0
    %1476 = vmatprep.subr.mxu0 0.0
    %1477 = vmatpush1.msra.mxu0 0.0
    %1478 = vmatprep.subr.mxu0 0.0
    %1479 = vmatpush1.msra.mxu0 0.0
    %1480 = vmatprep.subr.mxu0 0.0
    %1481 = vmatpush1.msra.mxu0 0.0
    %1482 = vmatprep.subr.mxu0 0.0
    %1483 = vmatpush1.msra.mxu0 0.0
    %1484 = vmatprep.subr.mxu0 0.0
    %1485 = vmatpush1.msra.mxu0 0.0
    %1486 = vmatprep.subr.mxu0 0.0
    %1487 = vmatpush1.msra.mxu0 0.0
    %1488 = vmatprep.subr.mxu0 0.0
    %1489 = vmatpush1.msra.mxu0 0.0
    %1490 = vmatprep.subr.mxu0 0.0
    %1491 = vmatpush1.msra.mxu0 0.0
    %1492 = vmatprep.subr.mxu0 0.0
    %1493 = vmatpush1.msra.mxu0 0.0
    %1494 = vmatprep.subr.mxu0 0.0
    %1495 = vmatpush1.msra.mxu0 0.0
    %1496 = vmatprep.subr.mxu0 0.0
    %1497 = vmatpush1.msra.mxu0 0.0
    %1498 = vmatprep.subr.mxu0 0.0
    %1499 = vmatpush1.msra.mxu0 0.0
    %1500 = vmatprep.subr.mxu0 0.0
    %1501 = vmatpush1.msra.mxu0 0.0
    %1502 = vmatprep.subr.mxu0 0.0
    %1503 = vmatpush1.msra.mxu0 0.0
    %1504 = vmatprep.subr.mxu0 0.0
    %1505 = vmatpush1.msra.mxu0 0.0
    %1506 = vmatprep.mubr.f32.mxu0 0.0
    %1507 = vmatmul.mubr.f32.gmra.mrb[0].mxu0 %v1440
    %v1508 = vpop.f32.mrb[0].mxu0
    %v1509 = vadd.f32 %v32, %v1508
    %v1510 = vpop.f32.mrb[0].mxu0
    %1511 = vdwg.mxu0
    %v1512 = vmul.f32 %v1509, 1.442695
    %v1513 = vpow.pop %v1512
    %v1514 = vsel %vm185, %v1513, 0.0
    %1515 = vadd.xlane.f32.xlu0 %v1514
    %v1516 = vpop.xlane.xlu0 %1515
    %v1517 = vrcp.pop %v1516
    %v1518 = vmul.f32 %v1516, %v1517
    %v1519 = vsub.f32 2.0, %v1518
    %v1520 = vmul.f32 %v1517, %v1519
    %v1521 = vmul.f32 %v1513, %v1520
    %v1522 = vld [vmem:[%s4 + $0x8] sm:$0x1]
    %v1523 = vmul.f32 %v1521, %v1522
    %1524 = vst.msk [vmem:[#allocation2] sm:$0x1] %vm185, %v1523
    %1526 = vrot.lane.b32.xlu0 %v1509, 96
    %v1527 = vpop.permute.xlu0 %1526
    %v1529 = vadd.f32 %v1523, %v1527
    %v1530 = vld [vmem:[%s0 + $0x9] sm:$0x1]
    %v1532 = vsel %vm34, %v1529, 0
    %1534 = vmatprep.subr.mxu0 0.0
    %1535 = vmatpush1.msra.mxu0 %v24
    %1536 = vmatprep.subr.mxu0 0.0
    %1537 = vmatpush1.msra.mxu0 %v25
    %1538 = vmatprep.subr.mxu0 0.0
    %1539 = vmatpush1.msra.mxu0 %v26
    %1540 = vmatprep.subr.mxu0 0.0
    %1541 = vmatpush1.msra.mxu0 %v27
    %1542 = vmatprep.subr.mxu0 0.0
    %1543 = vmatpush1.msra.mxu0 0.0
    %1544 = vmatprep.subr.mxu0 0.0
    %1545 = vmatpush1.msra.mxu0 0.0
    %1546 = vmatprep.subr.mxu0 0.0
    %1547 = vmatpush1.msra.mxu0 0.0
    %1548 = vmatprep.subr.mxu0 0.0
    %1549 = vmatpush1.msra.mxu0 0.0
    %1550 = vmatprep.subr.mxu0 0.0
    %1551 = vmatpush1.msra.mxu0 0.0
    %1552 = vmatprep.subr.mxu0 0.0
    %1553 = vmatpush1.msra.mxu0 0.0
    %1554 = vmatprep.subr.mxu0 0.0
    %1555 = vmatpush1.msra.mxu0 0.0
    %1556 = vmatprep.subr.mxu0 0.0
    %1557 = vmatpush1.msra.mxu0 0.0
    %1558 = vmatprep.subr.mxu0 0.0
    %1559 = vmatpush1.msra.mxu0 0.0
    %1560 = vmatprep.subr.mxu0 0.0
    %1561 = vmatpush1.msra.mxu0 0.0
    %1562 = vmatprep.subr.mxu0 0.0
    %1563 = vmatpush1.msra.mxu0 0.0
    %1564 = vmatprep.subr.mxu0 0.0
    %1565 = vmatpush1.msra.mxu0 0.0
    %1566 = vmatprep.subr.mxu0 0.0
    %1567 = vmatpush1.msra.mxu0 0.0
    %1568 = vmatprep.subr.mxu0 0.0
    %1569 = vmatpush1.msra.mxu0 0.0
    %1570 = vmatprep.subr.mxu0 0.0
    %1571 = vmatpush1.msra.mxu0 0.0
    %1572 = vmatprep.subr.mxu0 0.0
    %1573 = vmatpush1.msra.mxu0 0.0
    %1574 = vmatprep.subr.mxu0 0.0
    %1575 = vmatpush1.msra.mxu0 0.0
    %1576 = vmatprep.subr.mxu0 0.0
    %1577 = vmatpush1.msra.mxu0 0.0
    %1578 = vmatprep.subr.mxu0 0.0
    %1579 = vmatpush1.msra.mxu0 0.0
    %1580 = vmatprep.subr.mxu0 0.0
    %1581 = vmatpush1.msra.mxu0 0.0
    %1582 = vmatprep.subr.mxu0 0.0
    %1583 = vmatpush1.msra.mxu0 0.0
    %1584 = vmatprep.subr.mxu0 0.0
    %1585 = vmatpush1.msra.mxu0 0.0
    %1586 = vmatprep.subr.mxu0 0.0
    %1587 = vmatpush1.msra.mxu0 0.0
    %1588 = vmatprep.subr.mxu0 0.0
    %1589 = vmatpush1.msra.mxu0 0.0
    %1590 = vmatprep.subr.mxu0 0.0
    %1591 = vmatpush1.msra.mxu0 0.0
    %1592 = vmatprep.subr.mxu0 0.0
    %1593 = vmatpush1.msra.mxu0 0.0
    %1594 = vmatprep.subr.mxu0 0.0
    %1595 = vmatpush1.msra.mxu0 0.0
    %1596 = vmatprep.subr.mxu0 0.0
    %1597 = vmatpush1.msra.mxu0 0.0
    %1598 = vmatprep.mubr.f32.mxu0 0.0
    %1599 = vmatmul.mubr.f32.gmra.mrb[0].mxu0 %v1532
    %v1600 = vpop.f32.mrb[0].mxu0
    %v1601 = vadd.f32 0.0, %v1600
    %v1602 = vpop.f32.mrb[0].mxu0
    %1603 = vdwg.mxu0
    %v1604 = vadd.f32 %v1530, %v1601
    %v1605 = vtanh.pop %v1604
    %v1607 = vsel %vm34, %v1605, 0
    %1609 = vmatprep.subr.mxu0 0.0
    %1610 = vmatpush1.msra.mxu0 %v28
    %1611 = vmatprep.subr.mxu0 0.0
    %1612 = vmatpush1.msra.mxu0 %v29
    %1613 = vmatprep.subr.mxu0 0.0
    %1614 = vmatpush1.msra.mxu0 %v30
    %1615 = vmatprep.subr.mxu0 0.0
    %1616 = vmatpush1.msra.mxu0 %v31
    %1617 = vmatprep.subr.mxu0 0.0
    %1618 = vmatpush1.msra.mxu0 0.0
    %1619 = vmatprep.subr.mxu0 0.0
    %1620 = vmatpush1.msra.mxu0 0.0
    %1621 = vmatprep.subr.mxu0 0.0
    %1622 = vmatpush1.msra.mxu0 0.0
    %1623 = vmatprep.subr.mxu0 0.0
    %1624 = vmatpush1.msra.mxu0 0.0
    %1625 = vmatprep.subr.mxu0 0.0
    %1626 = vmatpush1.msra.mxu0 0.0
    %1627 = vmatprep.subr.mxu0 0.0
    %1628 = vmatpush1.msra.mxu0 0.0
    %1629 = vmatprep.subr.mxu0 0.0
    %1630 = vmatpush1.msra.mxu0 0.0
    %1631 = vmatprep.subr.mxu0 0.0
    %1632 = vmatpush1.msra.mxu0 0.0
    %1633 = vmatprep.subr.mxu0 0.0
    %1634 = vmatpush1.msra.mxu0 0.0
    %1635 = vmatprep.subr.mxu0 0.0
    %1636 = vmatpush1.msra.mxu0 0.0
    %1637 = vmatprep.subr.mxu0 0.0
    %1638 = vmatpush1.msra.mxu0 0.0
    %1639 = vmatprep.subr.mxu0 0.0
    %1640 = vmatpush1.msra.mxu0 0.0
    %1641 = vmatprep.subr.mxu0 0.0
    %1642 = vmatpush1.msra.mxu0 0.0
    %1643 = vmatprep.subr.mxu0 0.0
    %1644 = vmatpush1.msra.mxu0 0.0
    %1645 = vmatprep.subr.mxu0 0.0
    %1646 = vmatpush1.msra.mxu0 0.0
    %1647 = vmatprep.subr.mxu0 0.0
    %1648 = vmatpush1.msra.mxu0 0.0
    %1649 = vmatprep.subr.mxu0 0.0
    %1650 = vmatpush1.msra.mxu0 0.0
    %1651 = vmatprep.subr.mxu0 0.0
    %1652 = vmatpush1.msra.mxu0 0.0
    %1653 = vmatprep.subr.mxu0 0.0
    %1654 = vmatpush1.msra.mxu0 0.0
    %1655 = vmatprep.subr.mxu0 0.0
    %1656 = vmatpush1.msra.mxu0 0.0
    %1657 = vmatprep.subr.mxu0 0.0
    %1658 = vmatpush1.msra.mxu0 0.0
    %1659 = vmatprep.subr.mxu0 0.0
    %1660 = vmatpush1.msra.mxu0 0.0
    %1661 = vmatprep.subr.mxu0 0.0
    %1662 = vmatpush1.msra.mxu0 0.0
    %1663 = vmatprep.subr.mxu0 0.0
    %1664 = vmatpush1.msra.mxu0 0.0
    %1665 = vmatprep.subr.mxu0 0.0
    %1666 = vmatpush1.msra.mxu0 0.0
    %1667 = vmatprep.subr.mxu0 0.0
    %1668 = vmatpush1.msra.mxu0 0.0
    %1669 = vmatprep.subr.mxu0 0.0
    %1670 = vmatpush1.msra.mxu0 0.0
    %1671 = vmatprep.subr.mxu0 0.0
    %1672 = vmatpush1.msra.mxu0 0.0
    %1673 = vmatprep.mubr.f32.mxu0 0.0
    %1674 = vmatmul.mubr.f32.gmra.mrb[0].mxu0 %v1607
    %v1675 = vpop.f32.mrb[0].mxu0
    %v1676 = vadd.f32 %v32, %v1675
    %v1677 = vpop.f32.mrb[0].mxu0
    %1678 = vdwg.mxu0
    %v1679 = vmul.f32 %v1676, 1.442695
    %v1680 = vpow.pop %v1679
    %v1681 = vsel %vm185, %v1680, 0.0
    %1682 = vadd.xlane.f32.xlu0 %v1681
    %v1683 = vpop.xlane.xlu0 %1682
    %v1684 = vrcp.pop %v1683
    %v1685 = vmul.f32 %v1683, %v1684
    %v1686 = vsub.f32 2.0, %v1685
    %v1687 = vmul.f32 %v1684, %v1686
    %v1688 = vmul.f32 %v1680, %v1687
    %v1689 = vld [vmem:[%s4 + $0x9] sm:$0x1]
    %v1690 = vmul.f32 %v1688, %v1689
    %1691 = vst.msk [vmem:[#allocation2 + $0x1] sm:$0x1] %vm185, %v1690
    %1693 = vrot.lane.b32.xlu0 %v1676, 96
    %v1694 = vpop.permute.xlu0 %1693
    %v1696 = vadd.f32 %v1690, %v1694
    %v1697 = vld [vmem:[%s0 + $0xa] sm:$0x1]
    %v1699 = vsel %vm34, %v1696, 0
    %1701 = vmatprep.subr.mxu0 0.0
    %1702 = vmatpush1.msra.mxu0 %v24
    %1703 = vmatprep.subr.mxu0 0.0
    %1704 = vmatpush1.msra.mxu0 %v25
    %1705 = vmatprep.subr.mxu0 0.0
    %1706 = vmatpush1.msra.mxu0 %v26
    %1707 = vmatprep.subr.mxu0 0.0
    %1708 = vmatpush1.msra.mxu0 %v27
    %1709 = vmatprep.subr.mxu0 0.0
    %1710 = vmatpush1.msra.mxu0 0.0
    %1711 = vmatprep.subr.mxu0 0.0
    %1712 = vmatpush1.msra.mxu0 0.0
    %1713 = vmatprep.subr.mxu0 0.0
    %1714 = vmatpush1.msra.mxu0 0.0
    %1715 = vmatprep.subr.mxu0 0.0
    %1716 = vmatpush1.msra.mxu0 0.0
    %1717 = vmatprep.subr.mxu0 0.0
    %1718 = vmatpush1.msra.mxu0 0.0
    %1719 = vmatprep.subr.mxu0 0.0
    %1720 = vmatpush1.msra.mxu0 0.0
    %1721 = vmatprep.subr.mxu0 0.0
    %1722 = vmatpush1.msra.mxu0 0.0
    %1723 = vmatprep.subr.mxu0 0.0
    %1724 = vmatpush1.msra.mxu0 0.0
    %1725 = vmatprep.subr.mxu0 0.0
    %1726 = vmatpush1.msra.mxu0 0.0
    %1727 = vmatprep.subr.mxu0 0.0
    %1728 = vmatpush1.msra.mxu0 0.0
    %1729 = vmatprep.subr.mxu0 0.0
    %1730 = vmatpush1.msra.mxu0 0.0
    %1731 = vmatprep.subr.mxu0 0.0
    %1732 = vmatpush1.msra.mxu0 0.0
    %1733 = vmatprep.subr.mxu0 0.0
    %1734 = vmatpush1.msra.mxu0 0.0
    %1735 = vmatprep.subr.mxu0 0.0
    %1736 = vmatpush1.msra.mxu0 0.0
    %1737 = vmatprep.subr.mxu0 0.0
    %1738 = vmatpush1.msra.mxu0 0.0
    %1739 = vmatprep.subr.mxu0 0.0
    %1740 = vmatpush1.msra.mxu0 0.0
    %1741 = vmatprep.subr.mxu0 0.0
    %1742 = vmatpush1.msra.mxu0 0.0
    %1743 = vmatprep.subr.mxu0 0.0
    %1744 = vmatpush1.msra.mxu0 0.0
    %1745 = vmatprep.subr.mxu0 0.0
    %1746 = vmatpush1.msra.mxu0 0.0
    %1747 = vmatprep.subr.mxu0 0.0
    %1748 = vmatpush1.msra.mxu0 0.0
    %1749 = vmatprep.subr.mxu0 0.0
    %1750 = vmatpush1.msra.mxu0 0.0
    %1751 = vmatprep.subr.mxu0 0.0
    %1752 = vmatpush1.msra.mxu0 0.0
    %1753 = vmatprep.subr.mxu0 0.0
    %1754 = vmatpush1.msra.mxu0 0.0
    %1755 = vmatprep.subr.mxu0 0.0
    %1756 = vmatpush1.msra.mxu0 0.0
    %1757 = vmatprep.subr.mxu0 0.0
    %1758 = vmatpush1.msra.mxu0 0.0
    %1759 = vmatprep.subr.mxu0 0.0
    %1760 = vmatpush1.msra.mxu0 0.0
    %1761 = vmatprep.subr.mxu0 0.0
    %1762 = vmatpush1.msra.mxu0 0.0
    %1763 = vmatprep.subr.mxu0 0.0
    %1764 = vmatpush1.msra.mxu0 0.0
    %1765 = vmatprep.mubr.f32.mxu0 0.0
    %1766 = vmatmul.mubr.f32.gmra.mrb[0].mxu0 %v1699
    %v1767 = vpop.f32.mrb[0].mxu0
    %v1768 = vadd.f32 0.0, %v1767
    %v1769 = vpop.f32.mrb[0].mxu0
    %1770 = vdwg.mxu0
    %v1771 = vadd.f32 %v1697, %v1768
    %v1772 = vtanh.pop %v1771
    %v1774 = vsel %vm34, %v1772, 0
    %1776 = vmatprep.subr.mxu0 0.0
    %1777 = vmatpush1.msra.mxu0 %v28
    %1778 = vmatprep.subr.mxu0 0.0
    %1779 = vmatpush1.msra.mxu0 %v29
    %1780 = vmatprep.subr.mxu0 0.0
    %1781 = vmatpush1.msra.mxu0 %v30
    %1782 = vmatprep.subr.mxu0 0.0
    %1783 = vmatpush1.msra.mxu0 %v31
    %1784 = vmatprep.subr.mxu0 0.0
    %1785 = vmatpush1.msra.mxu0 0.0
    %1786 = vmatprep.subr.mxu0 0.0
    %1787 = vmatpush1.msra.mxu0 0.0
    %1788 = vmatprep.subr.mxu0 0.0
    %1789 = vmatpush1.msra.mxu0 0.0
    %1790 = vmatprep.subr.mxu0 0.0
    %1791 = vmatpush1.msra.mxu0 0.0
    %1792 = vmatprep.subr.mxu0 0.0
    %1793 = vmatpush1.msra.mxu0 0.0
    %1794 = vmatprep.subr.mxu0 0.0
    %1795 = vmatpush1.msra.mxu0 0.0
    %1796 = vmatprep.subr.mxu0 0.0
    %1797 = vmatpush1.msra.mxu0 0.0
    %1798 = vmatprep.subr.mxu0 0.0
    %1799 = vmatpush1.msra.mxu0 0.0
    %1800 = vmatprep.subr.mxu0 0.0
    %1801 = vmatpush1.msra.mxu0 0.0
    %1802 = vmatprep.subr.mxu0 0.0
    %1803 = vmatpush1.msra.mxu0 0.0
    %1804 = vmatprep.subr.mxu0 0.0
    %1805 = vmatpush1.msra.mxu0 0.0
    %1806 = vmatprep.subr.mxu0 0.0
    %1807 = vmatpush1.msra.mxu0 0.0
    %1808 = vmatprep.subr.mxu0 0.0
    %1809 = vmatpush1.msra.mxu0 0.0
    %1810 = vmatprep.subr.mxu0 0.0
    %1811 = vmatpush1.msra.mxu0 0.0
    %1812 = vmatprep.subr.mxu0 0.0
    %1813 = vmatpush1.msra.mxu0 0.0
    %1814 = vmatprep.subr.mxu0 0.0
    %1815 = vmatpush1.msra.mxu0 0.0
    %1816 = vmatprep.subr.mxu0 0.0
    %1817 = vmatpush1.msra.mxu0 0.0
    %1818 = vmatprep.subr.mxu0 0.0
    %1819 = vmatpush1.msra.mxu0 0.0
    %1820 = vmatprep.subr.mxu0 0.0
    %1821 = vmatpush1.msra.mxu0 0.0
    %1822 = vmatprep.subr.mxu0 0.0
    %1823 = vmatpush1.msra.mxu0 0.0
    %1824 = vmatprep.subr.mxu0 0.0
    %1825 = vmatpush1.msra.mxu0 0.0
    %1826 = vmatprep.subr.mxu0 0.0
    %1827 = vmatpush1.msra.mxu0 0.0
    %1828 = vmatprep.subr.mxu0 0.0
    %1829 = vmatpush1.msra.mxu0 0.0
    %1830 = vmatprep.subr.mxu0 0.0
    %1831 = vmatpush1.msra.mxu0 0.0
    %1832 = vmatprep.subr.mxu0 0.0
    %1833 = vmatpush1.msra.mxu0 0.0
    %1834 = vmatprep.subr.mxu0 0.0
    %1835 = vmatpush1.msra.mxu0 0.0
    %1836 = vmatprep.subr.mxu0 0.0
    %1837 = vmatpush1.msra.mxu0 0.0
    %1838 = vmatprep.subr.mxu0 0.0
    %1839 = vmatpush1.msra.mxu0 0.0
    %1840 = vmatprep.mubr.f32.mxu0 0.0
    %1841 = vmatmul.mubr.f32.gmra.mrb[0].mxu0 %v1774
    %v1842 = vpop.f32.mrb[0].mxu0
    %v1843 = vadd.f32 %v32, %v1842
    %v1844 = vpop.f32.mrb[0].mxu0
    %1845 = vdwg.mxu0
    %v1846 = vmul.f32 %v1843, 1.442695
    %v1847 = vpow.pop %v1846
    %v1848 = vsel %vm185, %v1847, 0.0
    %1849 = vadd.xlane.f32.xlu0 %v1848
    %v1850 = vpop.xlane.xlu0 %1849
    %v1851 = vrcp.pop %v1850
    %v1852 = vmul.f32 %v1850, %v1851
    %v1853 = vsub.f32 2.0, %v1852
    %v1854 = vmul.f32 %v1851, %v1853
    %v1855 = vmul.f32 %v1847, %v1854
    %v1856 = vld [vmem:[%s4 + $0xa] sm:$0x1]
    %v1857 = vmul.f32 %v1855, %v1856
    %1858 = vst.msk [vmem:[#allocation2 + $0x2] sm:$0x1] %vm185, %v1857
    %1860 = vrot.lane.b32.xlu0 %v1843, 96
    %v1861 = vpop.permute.xlu0 %1860
    %v1863 = vadd.f32 %v1857, %v1861
    %v1864 = vld [vmem:[%s0 + $0xb] sm:$0x1]
    %v1866 = vsel %vm34, %v1863, 0
    %1868 = vmatprep.subr.mxu0 0.0
    %1869 = vmatpush1.msra.mxu0 %v24
    %1870 = vmatprep.subr.mxu0 0.0
    %1871 = vmatpush1.msra.mxu0 %v25
    %1872 = vmatprep.subr.mxu0 0.0
    %1873 = vmatpush1.msra.mxu0 %v26
    %1874 = vmatprep.subr.mxu0 0.0
    %1875 = vmatpush1.msra.mxu0 %v27
    %1876 = vmatprep.subr.mxu0 0.0
    %1877 = vmatpush1.msra.mxu0 0.0
    %1878 = vmatprep.subr.mxu0 0.0
    %1879 = vmatpush1.msra.mxu0 0.0
    %1880 = vmatprep.subr.mxu0 0.0
    %1881 = vmatpush1.msra.mxu0 0.0
    %1882 = vmatprep.subr.mxu0 0.0
    %1883 = vmatpush1.msra.mxu0 0.0
    %1884 = vmatprep.subr.mxu0 0.0
    %1885 = vmatpush1.msra.mxu0 0.0
    %1886 = vmatprep.subr.mxu0 0.0
    %1887 = vmatpush1.msra.mxu0 0.0
    %1888 = vmatprep.subr.mxu0 0.0
    %1889 = vmatpush1.msra.mxu0 0.0
    %1890 = vmatprep.subr.mxu0 0.0
    %1891 = vmatpush1.msra.mxu0 0.0
    %1892 = vmatprep.subr.mxu0 0.0
    %1893 = vmatpush1.msra.mxu0 0.0
    %1894 = vmatprep.subr.mxu0 0.0
    %1895 = vmatpush1.msra.mxu0 0.0
    %1896 = vmatprep.subr.mxu0 0.0
    %1897 = vmatpush1.msra.mxu0 0.0
    %1898 = vmatprep.subr.mxu0 0.0
    %1899 = vmatpush1.msra.mxu0 0.0
    %1900 = vmatprep.subr.mxu0 0.0
    %1901 = vmatpush1.msra.mxu0 0.0
    %1902 = vmatprep.subr.mxu0 0.0
    %1903 = vmatpush1.msra.mxu0 0.0
    %1904 = vmatprep.subr.mxu0 0.0
    %1905 = vmatpush1.msra.mxu0 0.0
    %1906 = vmatprep.subr.mxu0 0.0
    %1907 = vmatpush1.msra.mxu0 0.0
    %1908 = vmatprep.subr.mxu0 0.0
    %1909 = vmatpush1.msra.mxu0 0.0
    %1910 = vmatprep.subr.mxu0 0.0
    %1911 = vmatpush1.msra.mxu0 0.0
    %1912 = vmatprep.subr.mxu0 0.0
    %1913 = vmatpush1.msra.mxu0 0.0
    %1914 = vmatprep.subr.mxu0 0.0
    %1915 = vmatpush1.msra.mxu0 0.0
    %1916 = vmatprep.subr.mxu0 0.0
    %1917 = vmatpush1.msra.mxu0 0.0
    %1918 = vmatprep.subr.mxu0 0.0
    %1919 = vmatpush1.msra.mxu0 0.0
    %1920 = vmatprep.subr.mxu0 0.0
    %1921 = vmatpush1.msra.mxu0 0.0
    %1922 = vmatprep.subr.mxu0 0.0
    %1923 = vmatpush1.msra.mxu0 0.0
    %1924 = vmatprep.subr.mxu0 0.0
    %1925 = vmatpush1.msra.mxu0 0.0
    %1926 = vmatprep.subr.mxu0 0.0
    %1927 = vmatpush1.msra.mxu0 0.0
    %1928 = vmatprep.subr.mxu0 0.0
    %1929 = vmatpush1.msra.mxu0 0.0
    %1930 = vmatprep.subr.mxu0 0.0
    %1931 = vmatpush1.msra.mxu0 0.0
    %1932 = vmatprep.mubr.f32.mxu0 0.0
    %1933 = vmatmul.mubr.f32.gmra.mrb[0].mxu0 %v1866
    %v1934 = vpop.f32.mrb[0].mxu0
    %v1935 = vadd.f32 0.0, %v1934
    %v1936 = vpop.f32.mrb[0].mxu0
    %1937 = vdwg.mxu0
    %v1938 = vadd.f32 %v1864, %v1935
    %v1939 = vtanh.pop %v1938
    %v1941 = vsel %vm34, %v1939, 0
    %1943 = vmatprep.subr.mxu0 0.0
    %1944 = vmatpush1.msra.mxu0 %v28
    %1945 = vmatprep.subr.mxu0 0.0
    %1946 = vmatpush1.msra.mxu0 %v29
    %1947 = vmatprep.subr.mxu0 0.0
    %1948 = vmatpush1.msra.mxu0 %v30
    %1949 = vmatprep.subr.mxu0 0.0
    %1950 = vmatpush1.msra.mxu0 %v31
    %1951 = vmatprep.subr.mxu0 0.0
    %1952 = vmatpush1.msra.mxu0 0.0
    %1953 = vmatprep.subr.mxu0 0.0
    %1954 = vmatpush1.msra.mxu0 0.0
    %1955 = vmatprep.subr.mxu0 0.0
    %1956 = vmatpush1.msra.mxu0 0.0
    %1957 = vmatprep.subr.mxu0 0.0
    %1958 = vmatpush1.msra.mxu0 0.0
    %1959 = vmatprep.subr.mxu0 0.0
    %1960 = vmatpush1.msra.mxu0 0.0
    %1961 = vmatprep.subr.mxu0 0.0
    %1962 = vmatpush1.msra.mxu0 0.0
    %1963 = vmatprep.subr.mxu0 0.0
    %1964 = vmatpush1.msra.mxu0 0.0
    %1965 = vmatprep.subr.mxu0 0.0
    %1966 = vmatpush1.msra.mxu0 0.0
    %1967 = vmatprep.subr.mxu0 0.0
    %1968 = vmatpush1.msra.mxu0 0.0
    %1969 = vmatprep.subr.mxu0 0.0
    %1970 = vmatpush1.msra.mxu0 0.0
    %1971 = vmatprep.subr.mxu0 0.0
    %1972 = vmatpush1.msra.mxu0 0.0
    %1973 = vmatprep.subr.mxu0 0.0
    %1974 = vmatpush1.msra.mxu0 0.0
    %1975 = vmatprep.subr.mxu0 0.0
    %1976 = vmatpush1.msra.mxu0 0.0
    %1977 = vmatprep.subr.mxu0 0.0
    %1978 = vmatpush1.msra.mxu0 0.0
    %1979 = vmatprep.subr.mxu0 0.0
    %1980 = vmatpush1.msra.mxu0 0.0
    %1981 = vmatprep.subr.mxu0 0.0
    %1982 = vmatpush1.msra.mxu0 0.0
    %1983 = vmatprep.subr.mxu0 0.0
    %1984 = vmatpush1.msra.mxu0 0.0
    %1985 = vmatprep.subr.mxu0 0.0
    %1986 = vmatpush1.msra.mxu0 0.0
    %1987 = vmatprep.subr.mxu0 0.0
    %1988 = vmatpush1.msra.mxu0 0.0
    %1989 = vmatprep.subr.mxu0 0.0
    %1990 = vmatpush1.msra.mxu0 0.0
    %1991 = vmatprep.subr.mxu0 0.0
    %1992 = vmatpush1.msra.mxu0 0.0
    %1993 = vmatprep.subr.mxu0 0.0
    %1994 = vmatpush1.msra.mxu0 0.0
    %1995 = vmatprep.subr.mxu0 0.0
    %1996 = vmatpush1.msra.mxu0 0.0
    %1997 = vmatprep.subr.mxu0 0.0
    %1998 = vmatpush1.msra.mxu0 0.0
    %1999 = vmatprep.subr.mxu0 0.0
    %2000 = vmatpush1.msra.mxu0 0.0
    %2001 = vmatprep.subr.mxu0 0.0
    %2002 = vmatpush1.msra.mxu0 0.0
    %2003 = vmatprep.subr.mxu0 0.0
    %2004 = vmatpush1.msra.mxu0 0.0
    %2005 = vmatprep.subr.mxu0 0.0
    %2006 = vmatpush1.msra.mxu0 0.0
    %2007 = vmatprep.mubr.f32.mxu0 0.0
    %2008 = vmatmul.mubr.f32.gmra.mrb[0].mxu0 %v1941
    %v2009 = vpop.f32.mrb[0].mxu0
    %v2010 = vadd.f32 %v32, %v2009
    %v2011 = vpop.f32.mrb[0].mxu0
    %2012 = vdwg.mxu0
    %v2013 = vmul.f32 %v2010, 1.442695
    %v2014 = vpow.pop %v2013
    %v2015 = vsel %vm185, %v2014, 0.0
    %2016 = vadd.xlane.f32.xlu0 %v2015
    %v2017 = vpop.xlane.xlu0 %2016
    %v2018 = vrcp.pop %v2017
    %v2019 = vmul.f32 %v2017, %v2018
    %v2020 = vsub.f32 2.0, %v2019
    %v2021 = vmul.f32 %v2018, %v2020
    %v2022 = vmul.f32 %v2014, %v2021
    %v2023 = vld [vmem:[%s4 + $0xb] sm:$0x1]
    %v2024 = vmul.f32 %v2022, %v2023
    %2025 = vst.msk [vmem:[#allocation2 + $0x3] sm:$0x1] %vm185, %v2024
    %2027 = vrot.lane.b32.xlu0 %v2010, 96
    %v2028 = vpop.permute.xlu0 %2027
    %v2030 = vadd.f32 %v2024, %v2028
    %v2031 = vld [vmem:[%s0 + $0xc] sm:$0x1]
    %v2033 = vsel %vm34, %v2030, 0
    %2035 = vmatprep.subr.mxu0 0.0
    %2036 = vmatpush1.msra.mxu0 %v24
    %2037 = vmatprep.subr.mxu0 0.0
    %2038 = vmatpush1.msra.mxu0 %v25
    %2039 = vmatprep.subr.mxu0 0.0
    %2040 = vmatpush1.msra.mxu0 %v26
    %2041 = vmatprep.subr.mxu0 0.0
    %2042 = vmatpush1.msra.mxu0 %v27
    %2043 = vmatprep.subr.mxu0 0.0
    %2044 = vmatpush1.msra.mxu0 0.0
    %2045 = vmatprep.subr.mxu0 0.0
    %2046 = vmatpush1.msra.mxu0 0.0
    %2047 = vmatprep.subr.mxu0 0.0
    %2048 = vmatpush1.msra.mxu0 0.0
    %2049 = vmatprep.subr.mxu0 0.0
    %2050 = vmatpush1.msra.mxu0 0.0
    %2051 = vmatprep.subr.mxu0 0.0
    %2052 = vmatpush1.msra.mxu0 0.0
    %2053 = vmatprep.subr.mxu0 0.0
    %2054 = vmatpush1.msra.mxu0 0.0
    %2055 = vmatprep.subr.mxu0 0.0
    %2056 = vmatpush1.msra.mxu0 0.0
    %2057 = vmatprep.subr.mxu0 0.0
    %2058 = vmatpush1.msra.mxu0 0.0
    %2059 = vmatprep.subr.mxu0 0.0
    %2060 = vmatpush1.msra.mxu0 0.0
    %2061 = vmatprep.subr.mxu0 0.0
    %2062 = vmatpush1.msra.mxu0 0.0
    %2063 = vmatprep.subr.mxu0 0.0
    %2064 = vmatpush1.msra.mxu0 0.0
    %2065 = vmatprep.subr.mxu0 0.0
    %2066 = vmatpush1.msra.mxu0 0.0
    %2067 = vmatprep.subr.mxu0 0.0
    %2068 = vmatpush1.msra.mxu0 0.0
    %2069 = vmatprep.subr.mxu0 0.0
    %2070 = vmatpush1.msra.mxu0 0.0
    %2071 = vmatprep.subr.mxu0 0.0
    %2072 = vmatpush1.msra.mxu0 0.0
    %2073 = vmatprep.subr.mxu0 0.0
    %2074 = vmatpush1.msra.mxu0 0.0
    %2075 = vmatprep.subr.mxu0 0.0
    %2076 = vmatpush1.msra.mxu0 0.0
    %2077 = vmatprep.subr.mxu0 0.0
    %2078 = vmatpush1.msra.mxu0 0.0
    %2079 = vmatprep.subr.mxu0 0.0
    %2080 = vmatpush1.msra.mxu0 0.0
    %2081 = vmatprep.subr.mxu0 0.0
    %2082 = vmatpush1.msra.mxu0 0.0
    %2083 = vmatprep.subr.mxu0 0.0
    %2084 = vmatpush1.msra.mxu0 0.0
    %2085 = vmatprep.subr.mxu0 0.0
    %2086 = vmatpush1.msra.mxu0 0.0
    %2087 = vmatprep.subr.mxu0 0.0
    %2088 = vmatpush1.msra.mxu0 0.0
    %2089 = vmatprep.subr.mxu0 0.0
    %2090 = vmatpush1.msra.mxu0 0.0
    %2091 = vmatprep.subr.mxu0 0.0
    %2092 = vmatpush1.msra.mxu0 0.0
    %2093 = vmatprep.subr.mxu0 0.0
    %2094 = vmatpush1.msra.mxu0 0.0
    %2095 = vmatprep.subr.mxu0 0.0
    %2096 = vmatpush1.msra.mxu0 0.0
    %2097 = vmatprep.subr.mxu0 0.0
    %2098 = vmatpush1.msra.mxu0 0.0
    %2099 = vmatprep.mubr.f32.mxu0 0.0
    %2100 = vmatmul.mubr.f32.gmra.mrb[0].mxu0 %v2033
    %v2101 = vpop.f32.mrb[0].mxu0
    %v2102 = vadd.f32 0.0, %v2101
    %v2103 = vpop.f32.mrb[0].mxu0
    %2104 = vdwg.mxu0
    %v2105 = vadd.f32 %v2031, %v2102
    %v2106 = vtanh.pop %v2105
    %v2108 = vsel %vm34, %v2106, 0
    %2110 = vmatprep.subr.mxu0 0.0
    %2111 = vmatpush1.msra.mxu0 %v28
    %2112 = vmatprep.subr.mxu0 0.0
    %2113 = vmatpush1.msra.mxu0 %v29
    %2114 = vmatprep.subr.mxu0 0.0
    %2115 = vmatpush1.msra.mxu0 %v30
    %2116 = vmatprep.subr.mxu0 0.0
    %2117 = vmatpush1.msra.mxu0 %v31
    %2118 = vmatprep.subr.mxu0 0.0
    %2119 = vmatpush1.msra.mxu0 0.0
    %2120 = vmatprep.subr.mxu0 0.0
    %2121 = vmatpush1.msra.mxu0 0.0
    %2122 = vmatprep.subr.mxu0 0.0
    %2123 = vmatpush1.msra.mxu0 0.0
    %2124 = vmatprep.subr.mxu0 0.0
    %2125 = vmatpush1.msra.mxu0 0.0
    %2126 = vmatprep.subr.mxu0 0.0
    %2127 = vmatpush1.msra.mxu0 0.0
    %2128 = vmatprep.subr.mxu0 0.0
    %2129 = vmatpush1.msra.mxu0 0.0
    %2130 = vmatprep.subr.mxu0 0.0
    %2131 = vmatpush1.msra.mxu0 0.0
    %2132 = vmatprep.subr.mxu0 0.0
    %2133 = vmatpush1.msra.mxu0 0.0
    %2134 = vmatprep.subr.mxu0 0.0
    %2135 = vmatpush1.msra.mxu0 0.0
    %2136 = vmatprep.subr.mxu0 0.0
    %2137 = vmatpush1.msra.mxu0 0.0
    %2138 = vmatprep.subr.mxu0 0.0
    %2139 = vmatpush1.msra.mxu0 0.0
    %2140 = vmatprep.subr.mxu0 0.0
    %2141 = vmatpush1.msra.mxu0 0.0
    %2142 = vmatprep.subr.mxu0 0.0
    %2143 = vmatpush1.msra.mxu0 0.0
    %2144 = vmatprep.subr.mxu0 0.0
    %2145 = vmatpush1.msra.mxu0 0.0
    %2146 = vmatprep.subr.mxu0 0.0
    %2147 = vmatpush1.msra.mxu0 0.0
    %2148 = vmatprep.subr.mxu0 0.0
    %2149 = vmatpush1.msra.mxu0 0.0
    %2150 = vmatprep.subr.mxu0 0.0
    %2151 = vmatpush1.msra.mxu0 0.0
    %2152 = vmatprep.subr.mxu0 0.0
    %2153 = vmatpush1.msra.mxu0 0.0
    %2154 = vmatprep.subr.mxu0 0.0
    %2155 = vmatpush1.msra.mxu0 0.0
    %2156 = vmatprep.subr.mxu0 0.0
    %2157 = vmatpush1.msra.mxu0 0.0
    %2158 = vmatprep.subr.mxu0 0.0
    %2159 = vmatpush1.msra.mxu0 0.0
    %2160 = vmatprep.subr.mxu0 0.0
    %2161 = vmatpush1.msra.mxu0 0.0
    %2162 = vmatprep.subr.mxu0 0.0
    %2163 = vmatpush1.msra.mxu0 0.0
    %2164 = vmatprep.subr.mxu0 0.0
    %2165 = vmatpush1.msra.mxu0 0.0
    %2166 = vmatprep.subr.mxu0 0.0
    %2167 = vmatpush1.msra.mxu0 0.0
    %2168 = vmatprep.subr.mxu0 0.0
    %2169 = vmatpush1.msra.mxu0 0.0
    %2170 = vmatprep.subr.mxu0 0.0
    %2171 = vmatpush1.msra.mxu0 0.0
    %2172 = vmatprep.subr.mxu0 0.0
    %2173 = vmatpush1.msra.mxu0 0.0
    %2174 = vmatprep.mubr.f32.mxu0 0.0
    %2175 = vmatmul.mubr.f32.gmra.mrb[0].mxu0 %v2108
    %v2176 = vpop.f32.mrb[0].mxu0
    %v2177 = vadd.f32 %v32, %v2176
    %v2178 = vpop.f32.mrb[0].mxu0
    %2179 = vdwg.mxu0
    %v2180 = vmul.f32 %v2177, 1.442695
    %v2181 = vpow.pop %v2180
    %v2182 = vsel %vm185, %v2181, 0.0
    %2183 = vadd.xlane.f32.xlu0 %v2182
    %v2184 = vpop.xlane.xlu0 %2183
    %v2185 = vrcp.pop %v2184
    %v2186 = vmul.f32 %v2184, %v2185
    %v2187 = vsub.f32 2.0, %v2186
    %v2188 = vmul.f32 %v2185, %v2187
    %v2189 = vmul.f32 %v2181, %v2188
    %v2190 = vld [vmem:[%s4 + $0xc] sm:$0x1]
    %v2191 = vmul.f32 %v2189, %v2190
    %2192 = vst.msk [vmem:[#allocation2 + $0x4] sm:$0x1] %vm185, %v2191
    %2194 = vrot.lane.b32.xlu0 %v2177, 96
    %v2195 = vpop.permute.xlu0 %2194
    %v2197 = vadd.f32 %v2191, %v2195
    %v2198 = vld [vmem:[%s0 + $0xd] sm:$0x1]
    %v2200 = vsel %vm34, %v2197, 0
    %2202 = vmatprep.subr.mxu0 0.0
    %2203 = vmatpush1.msra.mxu0 %v24
    %2204 = vmatprep.subr.mxu0 0.0
    %2205 = vmatpush1.msra.mxu0 %v25
    %2206 = vmatprep.subr.mxu0 0.0
    %2207 = vmatpush1.msra.mxu0 %v26
    %2208 = vmatprep.subr.mxu0 0.0
    %2209 = vmatpush1.msra.mxu0 %v27
    %2210 = vmatprep.subr.mxu0 0.0
    %2211 = vmatpush1.msra.mxu0 0.0
    %2212 = vmatprep.subr.mxu0 0.0
    %2213 = vmatpush1.msra.mxu0 0.0
    %2214 = vmatprep.subr.mxu0 0.0
    %2215 = vmatpush1.msra.mxu0 0.0
    %2216 = vmatprep.subr.mxu0 0.0
    %2217 = vmatpush1.msra.mxu0 0.0
    %2218 = vmatprep.subr.mxu0 0.0
    %2219 = vmatpush1.msra.mxu0 0.0
    %2220 = vmatprep.subr.mxu0 0.0
    %2221 = vmatpush1.msra.mxu0 0.0
    %2222 = vmatprep.subr.mxu0 0.0
    %2223 = vmatpush1.msra.mxu0 0.0
    %2224 = vmatprep.subr.mxu0 0.0
    %2225 = vmatpush1.msra.mxu0 0.0
    %2226 = vmatprep.subr.mxu0 0.0
    %2227 = vmatpush1.msra.mxu0 0.0
    %2228 = vmatprep.subr.mxu0 0.0
    %2229 = vmatpush1.msra.mxu0 0.0
    %2230 = vmatprep.subr.mxu0 0.0
    %2231 = vmatpush1.msra.mxu0 0.0
    %2232 = vmatprep.subr.mxu0 0.0
    %2233 = vmatpush1.msra.mxu0 0.0
    %2234 = vmatprep.subr.mxu0 0.0
    %2235 = vmatpush1.msra.mxu0 0.0
    %2236 = vmatprep.subr.mxu0 0.0
    %2237 = vmatpush1.msra.mxu0 0.0
    %2238 = vmatprep.subr.mxu0 0.0
    %2239 = vmatpush1.msra.mxu0 0.0
    %2240 = vmatprep.subr.mxu0 0.0
    %2241 = vmatpush1.msra.mxu0 0.0
    %2242 = vmatprep.subr.mxu0 0.0
    %2243 = vmatpush1.msra.mxu0 0.0
    %2244 = vmatprep.subr.mxu0 0.0
    %2245 = vmatpush1.msra.mxu0 0.0
    %2246 = vmatprep.subr.mxu0 0.0
    %2247 = vmatpush1.msra.mxu0 0.0
    %2248 = vmatprep.subr.mxu0 0.0
    %2249 = vmatpush1.msra.mxu0 0.0
    %2250 = vmatprep.subr.mxu0 0.0
    %2251 = vmatpush1.msra.mxu0 0.0
    %2252 = vmatprep.subr.mxu0 0.0
    %2253 = vmatpush1.msra.mxu0 0.0
    %2254 = vmatprep.subr.mxu0 0.0
    %2255 = vmatpush1.msra.mxu0 0.0
    %2256 = vmatprep.subr.mxu0 0.0
    %2257 = vmatpush1.msra.mxu0 0.0
    %2258 = vmatprep.subr.mxu0 0.0
    %2259 = vmatpush1.msra.mxu0 0.0
    %2260 = vmatprep.subr.mxu0 0.0
    %2261 = vmatpush1.msra.mxu0 0.0
    %2262 = vmatprep.subr.mxu0 0.0
    %2263 = vmatpush1.msra.mxu0 0.0
    %2264 = vmatprep.subr.mxu0 0.0
    %2265 = vmatpush1.msra.mxu0 0.0
    %2266 = vmatprep.mubr.f32.mxu0 0.0
    %2267 = vmatmul.mubr.f32.gmra.mrb[0].mxu0 %v2200
    %v2268 = vpop.f32.mrb[0].mxu0
    %v2269 = vadd.f32 0.0, %v2268
    %v2270 = vpop.f32.mrb[0].mxu0
    %2271 = vdwg.mxu0
    %v2272 = vadd.f32 %v2198, %v2269
    %v2273 = vtanh.pop %v2272
    %v2275 = vsel %vm34, %v2273, 0
    %2277 = vmatprep.subr.mxu0 0.0
    %2278 = vmatpush1.msra.mxu0 %v28
    %2279 = vmatprep.subr.mxu0 0.0
    %2280 = vmatpush1.msra.mxu0 %v29
    %2281 = vmatprep.subr.mxu0 0.0
    %2282 = vmatpush1.msra.mxu0 %v30
    %2283 = vmatprep.subr.mxu0 0.0
    %2284 = vmatpush1.msra.mxu0 %v31
    %2285 = vmatprep.subr.mxu0 0.0
    %2286 = vmatpush1.msra.mxu0 0.0
    %2287 = vmatprep.subr.mxu0 0.0
    %2288 = vmatpush1.msra.mxu0 0.0
    %2289 = vmatprep.subr.mxu0 0.0
    %2290 = vmatpush1.msra.mxu0 0.0
    %2291 = vmatprep.subr.mxu0 0.0
    %2292 = vmatpush1.msra.mxu0 0.0
    %2293 = vmatprep.subr.mxu0 0.0
    %2294 = vmatpush1.msra.mxu0 0.0
    %2295 = vmatprep.subr.mxu0 0.0
    %2296 = vmatpush1.msra.mxu0 0.0
    %2297 = vmatprep.subr.mxu0 0.0
    %2298 = vmatpush1.msra.mxu0 0.0
    %2299 = vmatprep.subr.mxu0 0.0
    %2300 = vmatpush1.msra.mxu0 0.0
    %2301 = vmatprep.subr.mxu0 0.0
    %2302 = vmatpush1.msra.mxu0 0.0
    %2303 = vmatprep.subr.mxu0 0.0
    %2304 = vmatpush1.msra.mxu0 0.0
    %2305 = vmatprep.subr.mxu0 0.0
    %2306 = vmatpush1.msra.mxu0 0.0
    %2307 = vmatprep.subr.mxu0 0.0
    %2308 = vmatpush1.msra.mxu0 0.0
    %2309 = vmatprep.subr.mxu0 0.0
    %2310 = vmatpush1.msra.mxu0 0.0
    %2311 = vmatprep.subr.mxu0 0.0
    %2312 = vmatpush1.msra.mxu0 0.0
    %2313 = vmatprep.subr.mxu0 0.0
    %2314 = vmatpush1.msra.mxu0 0.0
    %2315 = vmatprep.subr.mxu0 0.0
    %2316 = vmatpush1.msra.mxu0 0.0
    %2317 = vmatprep.subr.mxu0 0.0
    %2318 = vmatpush1.msra.mxu0 0.0
    %2319 = vmatprep.subr.mxu0 0.0
    %2320 = vmatpush1.msra.mxu0 0.0
    %2321 = vmatprep.subr.mxu0 0.0
    %2322 = vmatpush1.msra.mxu0 0.0
    %2323 = vmatprep.subr.mxu0 0.0
    %2324 = vmatpush1.msra.mxu0 0.0
    %2325 = vmatprep.subr.mxu0 0.0
    %2326 = vmatpush1.msra.mxu0 0.0
    %2327 = vmatprep.subr.mxu0 0.0
    %2328 = vmatpush1.msra.mxu0 0.0
    %2329 = vmatprep.subr.mxu0 0.0
    %2330 = vmatpush1.msra.mxu0 0.0
    %2331 = vmatprep.subr.mxu0 0.0
    %2332 = vmatpush1.msra.mxu0 0.0
    %2333 = vmatprep.subr.mxu0 0.0
    %2334 = vmatpush1.msra.mxu0 0.0
    %2335 = vmatprep.subr.mxu0 0.0
    %2336 = vmatpush1.msra.mxu0 0.0
    %2337 = vmatprep.subr.mxu0 0.0
    %2338 = vmatpush1.msra.mxu0 0.0
    %2339 = vmatprep.subr.mxu0 0.0
    %2340 = vmatpush1.msra.mxu0 0.0
    %2341 = vmatprep.mubr.f32.mxu0 0.0
    %2342 = vmatmul.mubr.f32.gmra.mrb[0].mxu0 %v2275
    %v2343 = vpop.f32.mrb[0].mxu0
    %v2344 = vadd.f32 %v32, %v2343
    %v2345 = vpop.f32.mrb[0].mxu0
    %2346 = vdwg.mxu0
    %v2347 = vmul.f32 %v2344, 1.442695
    %v2348 = vpow.pop %v2347
    %v2349 = vsel %vm185, %v2348, 0.0
    %2350 = vadd.xlane.f32.xlu0 %v2349
    %v2351 = vpop.xlane.xlu0 %2350
    %v2352 = vrcp.pop %v2351
    %v2353 = vmul.f32 %v2351, %v2352
    %v2354 = vsub.f32 2.0, %v2353
    %v2355 = vmul.f32 %v2352, %v2354
    %v2356 = vmul.f32 %v2348, %v2355
    %v2357 = vld [vmem:[%s4 + $0xd] sm:$0x1]
    %v2358 = vmul.f32 %v2356, %v2357
    %2359 = vst.msk [vmem:[#allocation2 + $0x5] sm:$0x1] %vm185, %v2358
    %2361 = vrot.lane.b32.xlu0 %v2344, 96
    %v2362 = vpop.permute.xlu0 %2361
    %v2364 = vadd.f32 %v2358, %v2362
    %v2365 = vld [vmem:[%s0 + $0xe] sm:$0x1]
    %v2367 = vsel %vm34, %v2364, 0
    %2369 = vmatprep.subr.mxu0 0.0
    %2370 = vmatpush1.msra.mxu0 %v24
    %2371 = vmatprep.subr.mxu0 0.0
    %2372 = vmatpush1.msra.mxu0 %v25
    %2373 = vmatprep.subr.mxu0 0.0
    %2374 = vmatpush1.msra.mxu0 %v26
    %2375 = vmatprep.subr.mxu0 0.0
    %2376 = vmatpush1.msra.mxu0 %v27
    %2377 = vmatprep.subr.mxu0 0.0
    %2378 = vmatpush1.msra.mxu0 0.0
    %2379 = vmatprep.subr.mxu0 0.0
    %2380 = vmatpush1.msra.mxu0 0.0
    %2381 = vmatprep.subr.mxu0 0.0
    %2382 = vmatpush1.msra.mxu0 0.0
    %2383 = vmatprep.subr.mxu0 0.0
    %2384 = vmatpush1.msra.mxu0 0.0
    %2385 = vmatprep.subr.mxu0 0.0
    %2386 = vmatpush1.msra.mxu0 0.0
    %2387 = vmatprep.subr.mxu0 0.0
    %2388 = vmatpush1.msra.mxu0 0.0
    %2389 = vmatprep.subr.mxu0 0.0
    %2390 = vmatpush1.msra.mxu0 0.0
    %2391 = vmatprep.subr.mxu0 0.0
    %2392 = vmatpush1.msra.mxu0 0.0
    %2393 = vmatprep.subr.mxu0 0.0
    %2394 = vmatpush1.msra.mxu0 0.0
    %2395 = vmatprep.subr.mxu0 0.0
    %2396 = vmatpush1.msra.mxu0 0.0
    %2397 = vmatprep.subr.mxu0 0.0
    %2398 = vmatpush1.msra.mxu0 0.0
    %2399 = vmatprep.subr.mxu0 0.0
    %2400 = vmatpush1.msra.mxu0 0.0
    %2401 = vmatprep.subr.mxu0 0.0
    %2402 = vmatpush1.msra.mxu0 0.0
    %2403 = vmatprep.subr.mxu0 0.0
    %2404 = vmatpush1.msra.mxu0 0.0
    %2405 = vmatprep.subr.mxu0 0.0
    %2406 = vmatpush1.msra.mxu0 0.0
    %2407 = vmatprep.subr.mxu0 0.0
    %2408 = vmatpush1.msra.mxu0 0.0
    %2409 = vmatprep.subr.mxu0 0.0
    %2410 = vmatpush1.msra.mxu0 0.0
    %2411 = vmatprep.subr.mxu0 0.0
    %2412 = vmatpush1.msra.mxu0 0.0
    %2413 = vmatprep.subr.mxu0 0.0
    %2414 = vmatpush1.msra.mxu0 0.0
    %2415 = vmatprep.subr.mxu0 0.0
    %2416 = vmatpush1.msra.mxu0 0.0
    %2417 = vmatprep.subr.mxu0 0.0
    %2418 = vmatpush1.msra.mxu0 0.0
    %2419 = vmatprep.subr.mxu0 0.0
    %2420 = vmatpush1.msra.mxu0 0.0
    %2421 = vmatprep.subr.mxu0 0.0
    %2422 = vmatpush1.msra.mxu0 0.0
    %2423 = vmatprep.subr.mxu0 0.0
    %2424 = vmatpush1.msra.mxu0 0.0
    %2425 = vmatprep.subr.mxu0 0.0
    %2426 = vmatpush1.msra.mxu0 0.0
    %2427 = vmatprep.subr.mxu0 0.0
    %2428 = vmatpush1.msra.mxu0 0.0
    %2429 = vmatprep.subr.mxu0 0.0
    %2430 = vmatpush1.msra.mxu0 0.0
    %2431 = vmatprep.subr.mxu0 0.0
    %2432 = vmatpush1.msra.mxu0 0.0
    %2433 = vmatprep.mubr.f32.mxu0 0.0
    %2434 = vmatmul.mubr.f32.gmra.mrb[0].mxu0 %v2367
    %v2435 = vpop.f32.mrb[0].mxu0
    %v2436 = vadd.f32 0.0, %v2435
    %v2437 = vpop.f32.mrb[0].mxu0
    %2438 = vdwg.mxu0
    %v2439 = vadd.f32 %v2365, %v2436
    %v2440 = vtanh.pop %v2439
    %v2442 = vsel %vm34, %v2440, 0
    %2444 = vmatprep.subr.mxu0 0.0
    %2445 = vmatpush1.msra.mxu0 %v28
    %2446 = vmatprep.subr.mxu0 0.0
    %2447 = vmatpush1.msra.mxu0 %v29
    %2448 = vmatprep.subr.mxu0 0.0
    %2449 = vmatpush1.msra.mxu0 %v30
    %2450 = vmatprep.subr.mxu0 0.0
    %2451 = vmatpush1.msra.mxu0 %v31
    %2452 = vmatprep.subr.mxu0 0.0
    %2453 = vmatpush1.msra.mxu0 0.0
    %2454 = vmatprep.subr.mxu0 0.0
    %2455 = vmatpush1.msra.mxu0 0.0
    %2456 = vmatprep.subr.mxu0 0.0
    %2457 = vmatpush1.msra.mxu0 0.0
    %2458 = vmatprep.subr.mxu0 0.0
    %2459 = vmatpush1.msra.mxu0 0.0
    %2460 = vmatprep.subr.mxu0 0.0
    %2461 = vmatpush1.msra.mxu0 0.0
    %2462 = vmatprep.subr.mxu0 0.0
    %2463 = vmatpush1.msra.mxu0 0.0
    %2464 = vmatprep.subr.mxu0 0.0
    %2465 = vmatpush1.msra.mxu0 0.0
    %2466 = vmatprep.subr.mxu0 0.0
    %2467 = vmatpush1.msra.mxu0 0.0
    %2468 = vmatprep.subr.mxu0 0.0
    %2469 = vmatpush1.msra.mxu0 0.0
    %2470 = vmatprep.subr.mxu0 0.0
    %2471 = vmatpush1.msra.mxu0 0.0
    %2472 = vmatprep.subr.mxu0 0.0
    %2473 = vmatpush1.msra.mxu0 0.0
    %2474 = vmatprep.subr.mxu0 0.0
    %2475 = vmatpush1.msra.mxu0 0.0
    %2476 = vmatprep.subr.mxu0 0.0
    %2477 = vmatpush1.msra.mxu0 0.0
    %2478 = vmatprep.subr.mxu0 0.0
    %2479 = vmatpush1.msra.mxu0 0.0
    %2480 = vmatprep.subr.mxu0 0.0
    %2481 = vmatpush1.msra.mxu0 0.0
    %2482 = vmatprep.subr.mxu0 0.0
    %2483 = vmatpush1.msra.mxu0 0.0
    %2484 = vmatprep.subr.mxu0 0.0
    %2485 = vmatpush1.msra.mxu0 0.0
    %2486 = vmatprep.subr.mxu0 0.0
    %2487 = vmatpush1.msra.mxu0 0.0
    %2488 = vmatprep.subr.mxu0 0.0
    %2489 = vmatpush1.msra.mxu0 0.0
    %2490 = vmatprep.subr.mxu0 0.0
    %2491 = vmatpush1.msra.mxu0 0.0
    %2492 = vmatprep.subr.mxu0 0.0
    %2493 = vmatpush1.msra.mxu0 0.0
    %2494 = vmatprep.subr.mxu0 0.0
    %2495 = vmatpush1.msra.mxu0 0.0
    %2496 = vmatprep.subr.mxu0 0.0
    %2497 = vmatpush1.msra.mxu0 0.0
    %2498 = vmatprep.subr.mxu0 0.0
    %2499 = vmatpush1.msra.mxu0 0.0
    %2500 = vmatprep.subr.mxu0 0.0
    %2501 = vmatpush1.msra.mxu0 0.0
    %2502 = vmatprep.subr.mxu0 0.0
    %2503 = vmatpush1.msra.mxu0 0.0
    %2504 = vmatprep.subr.mxu0 0.0
    %2505 = vmatpush1.msra.mxu0 0.0
    %2506 = vmatprep.subr.mxu0 0.0
    %2507 = vmatpush1.msra.mxu0 0.0
    %2508 = vmatprep.mubr.f32.mxu0 0.0
    %2509 = vmatmul.mubr.f32.gmra.mrb[0].mxu0 %v2442
    %v2510 = vpop.f32.mrb[0].mxu0
    %v2511 = vadd.f32 %v32, %v2510
    %v2512 = vpop.f32.mrb[0].mxu0
    %2513 = vdwg.mxu0
    %v2514 = vmul.f32 %v2511, 1.442695
    %v2515 = vpow.pop %v2514
    %v2516 = vsel %vm185, %v2515, 0.0
    %2517 = vadd.xlane.f32.xlu0 %v2516
    %v2518 = vpop.xlane.xlu0 %2517
    %v2519 = vrcp.pop %v2518
    %v2520 = vmul.f32 %v2518, %v2519
    %v2521 = vsub.f32 2.0, %v2520
    %v2522 = vmul.f32 %v2519, %v2521
    %v2523 = vmul.f32 %v2515, %v2522
    %v2524 = vld [vmem:[%s4 + $0xe] sm:$0x1]
    %v2525 = vmul.f32 %v2523, %v2524
    %2526 = vst.msk [vmem:[#allocation2 + $0x6] sm:$0x1] %vm185, %v2525
    %2528 = vrot.lane.b32.xlu0 %v2511, 96
    %v2529 = vpop.permute.xlu0 %2528
    %v2531 = vadd.f32 %v2525, %v2529
    %v2532 = vld [vmem:[%s0 + $0xf] sm:$0x1]
    %v2534 = vsel %vm34, %v2531, 0
    %2536 = vmatprep.subr.mxu0 0.0
    %2537 = vmatpush1.msra.mxu0 %v24
    %2538 = vmatprep.subr.mxu0 0.0
    %2539 = vmatpush1.msra.mxu0 %v25
    %2540 = vmatprep.subr.mxu0 0.0
    %2541 = vmatpush1.msra.mxu0 %v26
    %2542 = vmatprep.subr.mxu0 0.0
    %2543 = vmatpush1.msra.mxu0 %v27
    %2544 = vmatprep.subr.mxu0 0.0
    %2545 = vmatpush1.msra.mxu0 0.0
    %2546 = vmatprep.subr.mxu0 0.0
    %2547 = vmatpush1.msra.mxu0 0.0
    %2548 = vmatprep.subr.mxu0 0.0
    %2549 = vmatpush1.msra.mxu0 0.0
    %2550 = vmatprep.subr.mxu0 0.0
    %2551 = vmatpush1.msra.mxu0 0.0
    %2552 = vmatprep.subr.mxu0 0.0
    %2553 = vmatpush1.msra.mxu0 0.0
    %2554 = vmatprep.subr.mxu0 0.0
    %2555 = vmatpush1.msra.mxu0 0.0
    %2556 = vmatprep.subr.mxu0 0.0
    %2557 = vmatpush1.msra.mxu0 0.0
    %2558 = vmatprep.subr.mxu0 0.0
    %2559 = vmatpush1.msra.mxu0 0.0
    %2560 = vmatprep.subr.mxu0 0.0
    %2561 = vmatpush1.msra.mxu0 0.0
    %2562 = vmatprep.subr.mxu0 0.0
    %2563 = vmatpush1.msra.mxu0 0.0
    %2564 = vmatprep.subr.mxu0 0.0
    %2565 = vmatpush1.msra.mxu0 0.0
    %2566 = vmatprep.subr.mxu0 0.0
    %2567 = vmatpush1.msra.mxu0 0.0
    %2568 = vmatprep.subr.mxu0 0.0
    %2569 = vmatpush1.msra.mxu0 0.0
    %2570 = vmatprep.subr.mxu0 0.0
    %2571 = vmatpush1.msra.mxu0 0.0
    %2572 = vmatprep.subr.mxu0 0.0
    %2573 = vmatpush1.msra.mxu0 0.0
    %2574 = vmatprep.subr.mxu0 0.0
    %2575 = vmatpush1.msra.mxu0 0.0
    %2576 = vmatprep.subr.mxu0 0.0
    %2577 = vmatpush1.msra.mxu0 0.0
    %2578 = vmatprep.subr.mxu0 0.0
    %2579 = vmatpush1.msra.mxu0 0.0
    %2580 = vmatprep.subr.mxu0 0.0
    %2581 = vmatpush1.msra.mxu0 0.0
    %2582 = vmatprep.subr.mxu0 0.0
    %2583 = vmatpush1.msra.mxu0 0.0
    %2584 = vmatprep.subr.mxu0 0.0
    %2585 = vmatpush1.msra.mxu0 0.0
    %2586 = vmatprep.subr.mxu0 0.0
    %2587 = vmatpush1.msra.mxu0 0.0
    %2588 = vmatprep.subr.mxu0 0.0
    %2589 = vmatpush1.msra.mxu0 0.0
    %2590 = vmatprep.subr.mxu0 0.0
    %2591 = vmatpush1.msra.mxu0 0.0
    %2592 = vmatprep.subr.mxu0 0.0
    %2593 = vmatpush1.msra.mxu0 0.0
    %2594 = vmatprep.subr.mxu0 0.0
    %2595 = vmatpush1.msra.mxu0 0.0
    %2596 = vmatprep.subr.mxu0 0.0
    %2597 = vmatpush1.msra.mxu0 0.0
    %2598 = vmatprep.subr.mxu0 0.0
    %2599 = vmatpush1.msra.mxu0 0.0
    %2600 = vmatprep.mubr.f32.mxu0 0.0
    %2601 = vmatmul.mubr.f32.gmra.mrb[0].mxu0 %v2534
    %v2602 = vpop.f32.mrb[0].mxu0
    %v2603 = vadd.f32 0.0, %v2602
    %v2604 = vpop.f32.mrb[0].mxu0
    %2605 = vdwg.mxu0
    %v2606 = vadd.f32 %v2532, %v2603
    %v2607 = vtanh.pop %v2606
    %v2609 = vsel %vm34, %v2607, 0
    %2611 = vmatprep.subr.mxu0 0.0
    %2612 = vmatpush1.msra.mxu0 %v28
    %2613 = vmatprep.subr.mxu0 0.0
    %2614 = vmatpush1.msra.mxu0 %v29
    %2615 = vmatprep.subr.mxu0 0.0
    %2616 = vmatpush1.msra.mxu0 %v30
    %2617 = vmatprep.subr.mxu0 0.0
    %2618 = vmatpush1.msra.mxu0 %v31
    %2619 = vmatprep.subr.mxu0 0.0
    %2620 = vmatpush1.msra.mxu0 0.0
    %2621 = vmatprep.subr.mxu0 0.0
    %2622 = vmatpush1.msra.mxu0 0.0
    %2623 = vmatprep.subr.mxu0 0.0
    %2624 = vmatpush1.msra.mxu0 0.0
    %2625 = vmatprep.subr.mxu0 0.0
    %2626 = vmatpush1.msra.mxu0 0.0
    %2627 = vmatprep.subr.mxu0 0.0
    %2628 = vmatpush1.msra.mxu0 0.0
    %2629 = vmatprep.subr.mxu0 0.0
    %2630 = vmatpush1.msra.mxu0 0.0
    %2631 = vmatprep.subr.mxu0 0.0
    %2632 = vmatpush1.msra.mxu0 0.0
    %2633 = vmatprep.subr.mxu0 0.0
    %2634 = vmatpush1.msra.mxu0 0.0
    %2635 = vmatprep.subr.mxu0 0.0
    %2636 = vmatpush1.msra.mxu0 0.0
    %2637 = vmatprep.subr.mxu0 0.0
    %2638 = vmatpush1.msra.mxu0 0.0
    %2639 = vmatprep.subr.mxu0 0.0
    %2640 = vmatpush1.msra.mxu0 0.0
    %2641 = vmatprep.subr.mxu0 0.0
    %2642 = vmatpush1.msra.mxu0 0.0
    %2643 = vmatprep.subr.mxu0 0.0
    %2644 = vmatpush1.msra.mxu0 0.0
    %2645 = vmatprep.subr.mxu0 0.0
    %2646 = vmatpush1.msra.mxu0 0.0
    %2647 = vmatprep.subr.mxu0 0.0
    %2648 = vmatpush1.msra.mxu0 0.0
    %2649 = vmatprep.subr.mxu0 0.0
    %2650 = vmatpush1.msra.mxu0 0.0
    %2651 = vmatprep.subr.mxu0 0.0
    %2652 = vmatpush1.msra.mxu0 0.0
    %2653 = vmatprep.subr.mxu0 0.0
    %2654 = vmatpush1.msra.mxu0 0.0
    %2655 = vmatprep.subr.mxu0 0.0
    %2656 = vmatpush1.msra.mxu0 0.0
    %2657 = vmatprep.subr.mxu0 0.0
    %2658 = vmatpush1.msra.mxu0 0.0
    %2659 = vmatprep.subr.mxu0 0.0
    %2660 = vmatpush1.msra.mxu0 0.0
    %2661 = vmatprep.subr.mxu0 0.0
    %2662 = vmatpush1.msra.mxu0 0.0
    %2663 = vmatprep.subr.mxu0 0.0
    %2664 = vmatpush1.msra.mxu0 0.0
    %2665 = vmatprep.subr.mxu0 0.0
    %2666 = vmatpush1.msra.mxu0 0.0
    %2667 = vmatprep.subr.mxu0 0.0
    %2668 = vmatpush1.msra.mxu0 0.0
    %2669 = vmatprep.subr.mxu0 0.0
    %2670 = vmatpush1.msra.mxu0 0.0
    %2671 = vmatprep.subr.mxu0 0.0
    %2672 = vmatpush1.msra.mxu0 0.0
    %2673 = vmatprep.subr.mxu0 0.0
    %2674 = vmatpush1.msra.mxu0 0.0
    %2675 = vmatprep.mubr.f32.mxu0 0.0
    %2676 = vmatmul.mubr.f32.gmra.mrb[0].mxu0 %v2609
    %v2677 = vpop.f32.mrb[0].mxu0
    %v2678 = vadd.f32 %v32, %v2677
    %v2679 = vpop.f32.mrb[0].mxu0
    %2680 = vdwg.mxu0
    %v2681 = vmul.f32 %v2678, 1.442695
    %v2682 = vpow.pop %v2681
    %v2683 = vsel %vm185, %v2682, 0.0
    %2684 = vadd.xlane.f32.xlu0 %v2683
    %v2685 = vpop.xlane.xlu0 %2684
    %v2686 = vrcp.pop %v2685
    %v2687 = vmul.f32 %v2685, %v2686
    %v2688 = vsub.f32 2.0, %v2687
    %v2689 = vmul.f32 %v2686, %v2688
    %v2690 = vmul.f32 %v2682, %v2689
    %v2691 = vld [vmem:[%s4 + $0xf] sm:$0x1]
    %v2692 = vmul.f32 %v2690, %v2691
    %2693 = vst.msk [vmem:[#allocation2 + $0x7] sm:$0x1] %vm185, %v2692
    %2695 = vrot.lane.b32.xlu0 %v2678, 96
    %v2696 = vpop.permute.xlu0 %2695
    %2698 = vst.msk [vmem:[#allocation4] sm:$0x1] %vm185, %v2696
    // Predicated region
    $region22: #{feature_rnn_forward.1} parent=1 // pred_check
      _
    $region23: #{feature_rnn_forward.1} parent=1 // pred_check_branch
      %2700 = sbr.rel (0) target = $region25
    $region24: #{feature_rnn_forward.1} parent=1 // pred_region
      %s2702 = ssub.s32 128, 128
      %2703 = vsyncadd [#allocation3], %s2702
      %s2705 = sshll.u32 [#allocation2], 4
      %s2706 = int_to_ptr.vmem [resolvable:$true] %s2705
      %2708 = dma.vmem_to_hbm [thread:$0]  %s2706, 128, %s5, [#allocation3]
    $region25: #{feature_rnn_forward.1} parent=1 // pred_fallthru
      _
    // Predicated region
    $region26: #{feature_rnn_forward.1} parent=1 // pred_check
      _
    $region27: #{feature_rnn_forward.1} parent=1 // pred_check_branch
      %2710 = sbr.rel (0) target = $region29
    $region28: #{feature_rnn_forward.1} parent=1 // pred_region
      %s2712 = ssub.s32 16, 16
      %2713 = vsyncadd [#allocation5], %s2712
      %s2715 = sshll.u32 [#allocation4], 4
      %s2716 = int_to_ptr.vmem [resolvable:$true] %s2715
      %2718 = dma.vmem_to_hbm [thread:$0]  %s2716, 16, %s6, [#allocation5]
    $region29: #{feature_rnn_forward.1} parent=1 // pred_fallthru
      _
    // Predicated region
    $region30: #{feature_rnn_forward.1} parent=1 // pred_check
      _
    $region31: #{feature_rnn_forward.1} parent=1 // pred_check_branch
      %2720 = sbr.rel (0) target = $region33
    $region32: #{feature_rnn_forward.1} parent=1 // pred_region
      %2721 = dma.done [#allocation3], 128
    $region33: #{feature_rnn_forward.1} parent=1 // pred_fallthru
      _
    // Predicated region
    $region34: #{feature_rnn_forward.1} parent=1 // pred_check
      _
    $region35: #{feature_rnn_forward.1} parent=1 // pred_check_branch
      %2723 = sbr.rel (0) target = $region37
    $region36: #{feature_rnn_forward.1} parent=1 // pred_region
      %2724 = dma.done [#allocation5], 16
    $region37: #{feature_rnn_forward.1} parent=1 // pred_fallthru
      _
    %2725 = vsyncpa [#allocation3], 1
    %2726 = vsyncpa [#allocation5], 1

</llo_original>
